<compile_context>
chip_gen: v7x
topology: tpu7x:2x2x1
jax: 0.10.0
libtpu: 0.0.40
codegen_flags: <defaults>
</compile_context>

<pallas_src>
import math

import jax
import jax.numpy as jnp
import numpy as np
from jax.experimental import pallas as pl
from jax.experimental.pallas import tpu as pltpu


# ----------------------------------------------------------------------------
# Fused whole-model Pallas kernel
# ----------------------------------------------------------------------------
def make_fused_model_kernel(B, S, D, H, L, dh, scale):
    """Full forward pass: L x (attention + residual + LayerNorm) -> pool -> MLP."""

    def kernel(x_ref, wqkv_ref, bqkv_ref, wo_ref, bo_ref, gb_ref,
               w1_ref, b1_ref, w2_ref, b2_ref, out_ref):
        x = x_ref[...]                                    # (B*S, D) activations
        gb = gb_ref[...]                                  # (2, D)  [gamma; beta]
        gamma = gb[0:1, :]
        beta = gb[1:2, :]

        # Head-grouping one-hot matrices, built once from 2-D iota (lane-dense).
        #   head_sum   : (D, H)  head_sum[l, h]  = 1 iff lane l belongs to head h
        #   head_expand: (H, D)  head_expand[h,l] = 1 iff lane l belongs to head h
        r = jax.lax.broadcasted_iota(jnp.int32, (D, H), 0)    # lane index
        c = jax.lax.broadcasted_iota(jnp.int32, (D, H), 1)    # head index
        head_sum = ((r >= c * dh) & (r < c * dh + dh)).astype(jnp.float32)
        r2 = jax.lax.broadcasted_iota(jnp.int32, (H, D), 0)   # head index
        c2 = jax.lax.broadcasted_iota(jnp.int32, (H, D), 1)   # lane index
        head_expand = ((c2 >= r2 * dh) & (c2 < r2 * dh + dh)).astype(jnp.float32)

        for l in range(L):
            # --- packed QKV projection: one (B*S,D)@(D,3D) matmul ------------
            # wqkv columns are pre-permuted to [Q | K | V], head-major inside.
            qkv = jnp.dot(x, wqkv_ref[l],
                          preferred_element_type=jnp.float32) + bqkv_ref[l]   # (B*S, 3D)
            q = qkv[:, 0:D] * scale                       # fold score scale into q
            k = qkv[:, D:2 * D]
            v = qkv[:, 2 * D:3 * D]

            q3 = q.reshape(B, S, D)                       # lane dim stays D=32
            k3 = k.reshape(B, S, D)
            v3 = v.reshape(B, S, D)

            # --- lane-dense scores: q_i * k_j over all D lanes, then a
            #     per-head lane-group sum via the (D,H) one-hot matmul ---------
            e = q3[:, :, None, :] * k3[:, None, :, :]                         # (B,S,S,D)
            s = jnp.dot(e.reshape(B * S * S, D), head_sum,
                        preferred_element_type=jnp.float32).reshape(B, S, S, H)

            # --- softmax over the key axis (axis=2) ---------------------------
            s = s - jnp.max(s, axis=2, keepdims=True)
            p = jnp.exp(s)
            p = p * pl.reciprocal(jnp.sum(p, axis=2, keepdims=True), approx=True)

            # --- attn @ V: broadcast each head's prob to its dh lanes via the
            #     (H,D) one-hot matmul, then reduce over keys (sublane reduce) --
            p_exp = jnp.dot(p.reshape(B * S * S, H), head_expand,
                            preferred_element_type=jnp.float32).reshape(B, S, S, D)
            o = jnp.sum(p_exp * v3[:, None, :, :], axis=2)                    # (B,S,D)
            o = o.reshape(B * S, D)                       # head-major lanes == torch concat

            # --- output projection: single (B*S,D)@(D,D) matmul ---------------
            y = jnp.dot(o, wo_ref[l],
                        preferred_element_type=jnp.float32) + bo_ref[l]       # (B*S, D)

            # --- residual + shared LayerNorm (eps=1e-5); var = E[z^2]-mean^2 --
            z = y + x
            mean = jnp.mean(z, axis=-1, keepdims=True)
            msq = jnp.mean(z * z, axis=-1, keepdims=True)
            var = msq - mean * mean
            x = (z - mean) * jax.lax.rsqrt(var + 1e-5) * gamma + beta

        # --- head: mean-pool over seq -> fc1 -> ReLU -> (dropout=id) -> fc2 ---
        pooled = jnp.mean(x.reshape(B, S, D), axis=1)                         # (B, D)
        hdn = jnp.dot(pooled, w1_ref[...],
                      preferred_element_type=jnp.float32) + b1_ref[...]
        hdn = jnp.maximum(hdn, 0.0)
        # TODO(synk): dropout(0.5) is identity at inference.
        out = jnp.dot(hdn, w2_ref[...],
                      preferred_element_type=jnp.float32) + b2_ref[...]       # (B, C_pad)
        out_ref[...] = out.astype(out_ref.dtype)

    return kernel


# ----------------------------------------------------------------------------
# Wrapper
# ----------------------------------------------------------------------------
def attention_based_model_pallas(x, params, heads):
    B, S, D = x.shape
    H = heads
    dh = D // H
    scale = float(dh) ** -0.5
    L = params["wqkv"].shape[0]
    c_pad = params["w2p"].shape[1]

    x_flat = x.reshape(B * S, D)                          # flattened once, outside kernel

    vmem_spec = pl.BlockSpec(memory_space=pltpu.MemorySpace.VMEM)
    out_pad = pl.pallas_call(
        make_fused_model_kernel(B, S, D, H, L, dh, scale),
        out_shape=jax.ShapeDtypeStruct((B, c_pad), x.dtype),
        in_specs=[vmem_spec] * 10,
        out_specs=vmem_spec,
    )(x_flat,
      params["wqkv"], params["bqkv"], params["wo"], params["bo"],
      params["gamma_beta"],
      params["w1"], params["b1"], params["w2p"], params["b2p"])

    return out_pad[:, :params["num_classes"]]


# ----------------------------------------------------------------------------
# Deterministic parameter construction (PyTorch-Linear-style uniform init)
# ----------------------------------------------------------------------------
def init_linear(key, fan_in, fan_out):
    k1, k2 = jax.random.split(key)
    bound = 1.0 / math.sqrt(fan_in)
    w = jax.random.uniform(k1, (fan_in, fan_out), jnp.float32, -bound, bound)
    b = jax.random.uniform(k2, (fan_out,), jnp.float32, -bound, bound)
    return w, b


def build_params(key, input_dim, num_classes, heads, dim_feedforward, num_layers):
    D, H = input_dim, heads
    dh = D // H
    raw_layers = []
    wqkv_l, bqkv_l, wo_l, bo_l = [], [], [], []
    for _ in range(num_layers):
        key, k1, k2 = jax.random.split(key, 3)
        wqkv, bqkv = init_linear(k1, D, 3 * D)            # PyTorch-equivalent qkv Linear
        wo, bo = init_linear(k2, D, D)                    # fc Linear
        raw_layers.append((wqkv, bqkv, wo, bo))

        # Re-pack qkv columns to [Q | K | V], each head-major, matching
        # qkv.view(B, S, H, 3, dh)[..., t, :] of the PyTorch code.
        wr = wqkv.reshape(D, H, 3, dh)
        br = bqkv.reshape(H, 3, dh)
        wqkv_l.append(jnp.concatenate(
            [wr[:, :, t, :].reshape(D, D) for t in range(3)], axis=1))   # (D, 3D)
        bqkv_l.append(jnp.concatenate(
            [br[:, t, :].reshape(1, D) for t in range(3)], axis=1))      # (1, 3D)
        wo_l.append(wo)                                                  # (D, D), unmodified
        bo_l.append(bo.reshape(1, D))

    key, k1, k2 = jax.random.split(key, 3)
    w1, b1 = init_linear(k1, D, dim_feedforward)
    w2, b2 = init_linear(k2, dim_feedforward, num_classes)

    c_pad = 128                                           # lane-dense logits slab
    w2p = jnp.zeros((dim_feedforward, c_pad), jnp.float32).at[:, :num_classes].set(w2)
    b2p = jnp.zeros((1, c_pad), jnp.float32).at[0, :num_classes].set(b2)

    return {
        "raw_layers": raw_layers,
        "wqkv": jnp.stack(wqkv_l),                        # (L, D, 3D)
        "bqkv": jnp.stack(bqkv_l),                        # (L, 1, 3D)
        "wo": jnp.stack(wo_l),                            # (L, D, D)
        "bo": jnp.stack(bo_l),                            # (L, 1, D)
        "gamma_beta": jnp.concatenate(
            [jnp.ones((1, D), jnp.float32), jnp.zeros((1, D), jnp.float32)], axis=0),
        "w1": w1, "b1": b1.reshape(1, dim_feedforward),
        "w2": w2, "b2": b2,
        "w2p": w2p, "b2p": b2p,
        "num_classes": num_classes,
    }


# ----------------------------------------------------------------------------
# Pure-JAX reference (mirrors the PyTorch forward exactly)
# ----------------------------------------------------------------------------
def reference_forward(x, params, heads):
    H = heads
    gamma = params["gamma_beta"][0]
    beta = params["gamma_beta"][1]
    for (wqkv, bqkv, wo, bo) in params["raw_layers"]:
        B, S, D = x.shape
        dh = D // H
        scale = float(dh) ** -0.5
        qkv = (x @ wqkv + bqkv).reshape(B, S, H, 3, dh)
        q = qkv[..., 0, :].transpose(0, 2, 1, 3)
        k = qkv[..., 1, :].transpose(0, 2, 1, 3)
        v = qkv[..., 2, :].transpose(0, 2, 1, 3)
        attn = jax.nn.softmax(q @ k.transpose(0, 1, 3, 2) * scale, axis=-1)
        out = (attn @ v).transpose(0, 2, 1, 3).reshape(B, S, D)
        y = out @ wo + bo
        z = y + x
        mean = z.mean(-1, keepdims=True)
        var = ((z - mean) ** 2).mean(-1, keepdims=True)
        x = (z - mean) / jnp.sqrt(var + 1e-5) * gamma + beta
    pooled = x.mean(axis=1)
    h = jax.nn.relu(pooled @ params["w1"] + params["b1"][0])
    return h @ params["w2"] + params["b2"]


# ----------------------------------------------------------------------------
if __name__ == "__main__":
    B, S, D = 2, 8, 32           # batch, seq, embedding
    HEADS = 8
    DIM_FF = 64
    NUM_CLASSES = 5
    NUM_LAYERS = 3

    key = jax.random.PRNGKey(0)
    key, kx, kp = jax.random.split(key, 3)
    x = jax.random.normal(kx, (B, S, D), jnp.float32)
    params = build_params(kp, D, NUM_CLASSES, HEADS, DIM_FF, NUM_LAYERS)

    out = attention_based_model_pallas(x, params, HEADS)
    out = jax.block_until_ready(out)

    ref = jax.block_until_ready(reference_forward(x, params, HEADS))
    np.testing.assert_allclose(np.asarray(out), np.asarray(ref), rtol=2e-2, atol=2e-2)
    assert out.shape == (B, NUM_CLASSES)

    print("KERNEL_OK")
</pallas_src>

<mosaic_0001>
module attributes {stable_mosaic.version = 11 : i64} {
  func.func @kernel(%arg0: memref<16x32xf32, #tpu.memory_space<vmem>>, %arg1: memref<3x32x96xf32, #tpu.memory_space<vmem>>, %arg2: memref<3x1x96xf32, #tpu.memory_space<vmem>>, %arg3: memref<3x32x32xf32, #tpu.memory_space<vmem>>, %arg4: memref<3x1x32xf32, #tpu.memory_space<vmem>>, %arg5: memref<2x32xf32, #tpu.memory_space<vmem>>, %arg6: memref<32x64xf32, #tpu.memory_space<vmem>>, %arg7: memref<1x64xf32, #tpu.memory_space<vmem>>, %arg8: memref<64x128xf32, #tpu.memory_space<vmem>>, %arg9: memref<1x128xf32, #tpu.memory_space<vmem>>, %arg10: memref<2x128xf32, #tpu.memory_space<vmem>>) attributes {dimension_semantics = [], scalar_prefetch = 0 : i64, scratch_operands = 0 : i64, tpu.core_type = #tpu.core_type<tc>} {
    %c0 = arith.constant 0 : index
    %c0_0 = arith.constant 0 : index
    %0 = vector.load %arg0[%c0, %c0_0] : memref<16x32xf32, #tpu.memory_space<vmem>>, vector<16x32xf32>
    %c0_1 = arith.constant 0 : index
    %c0_2 = arith.constant 0 : index
    %1 = vector.load %arg5[%c0_1, %c0_2] : memref<2x32xf32, #tpu.memory_space<vmem>>, vector<2x32xf32>
    %2 = vector.extract_strided_slice %1 {offsets = [0, 0], sizes = [1, 32], strides = [1, 1]} : vector<2x32xf32> to vector<1x32xf32>
    %3 = vector.extract_strided_slice %1 {offsets = [1, 0], sizes = [1, 32], strides = [1, 1]} : vector<2x32xf32> to vector<1x32xf32>
    %4 = tpu.iota {dimensions = array<i32: 0>} : vector<32x8xi32>
    %5 = tpu.iota {dimensions = array<i32: 1>} : vector<32x8xi32>
    %c4_i32 = arith.constant 4 : i32
    %6 = vector.broadcast %c4_i32 : i32 to vector<32x8xi32>
    %7 = arith.muli %5, %6 : vector<32x8xi32>
    %8 = arith.cmpi sge, %4, %7 : vector<32x8xi32>
    %c4_i32_3 = arith.constant 4 : i32
    %9 = vector.broadcast %c4_i32_3 : i32 to vector<32x8xi32>
    %10 = arith.muli %5, %9 : vector<32x8xi32>
    %c4_i32_4 = arith.constant 4 : i32
    %11 = vector.broadcast %c4_i32_4 : i32 to vector<32x8xi32>
    %12 = arith.addi %10, %11 : vector<32x8xi32>
    %13 = arith.cmpi slt, %4, %12 : vector<32x8xi32>
    %14 = arith.andi %8, %13 : vector<32x8xi1>
    %15 = arith.extui %14 : vector<32x8xi1> to vector<32x8xi32>
    %16 = arith.sitofp %15 : vector<32x8xi32> to vector<32x8xf32>
    %17 = tpu.iota {dimensions = array<i32: 0>} : vector<8x32xi32>
    %18 = tpu.iota {dimensions = array<i32: 1>} : vector<8x32xi32>
    %c4_i32_5 = arith.constant 4 : i32
    %19 = vector.broadcast %c4_i32_5 : i32 to vector<8x32xi32>
    %20 = arith.muli %17, %19 : vector<8x32xi32>
    %21 = arith.cmpi sge, %18, %20 : vector<8x32xi32>
    %c4_i32_6 = arith.constant 4 : i32
    %22 = vector.broadcast %c4_i32_6 : i32 to vector<8x32xi32>
    %23 = arith.muli %17, %22 : vector<8x32xi32>
    %c4_i32_7 = arith.constant 4 : i32
    %24 = vector.broadcast %c4_i32_7 : i32 to vector<8x32xi32>
    %25 = arith.addi %23, %24 : vector<8x32xi32>
    %26 = arith.cmpi slt, %18, %25 : vector<8x32xi32>
    %27 = arith.andi %21, %26 : vector<8x32xi1>
    %28 = arith.extui %27 : vector<8x32xi1> to vector<8x32xi32>
    %29 = arith.sitofp %28 : vector<8x32xi32> to vector<8x32xf32>
    %c0_8 = arith.constant 0 : index
    %c0_9 = arith.constant 0 : index
    %c0_10 = arith.constant 0 : index
    %30 = vector.load %arg1[%c0_8, %c0_9, %c0_10] : memref<3x32x96xf32, #tpu.memory_space<vmem>>, vector<1x32x96xf32>
    %31 = vector.shape_cast %30 : vector<1x32x96xf32> to vector<32x96xf32>
    %cst = arith.constant dense<0.000000e+00> : vector<16x96xf32>
    %32 = tpu.matmul %0, %31, %cst {dimension_numbers = #tpu.dot_dimension_numbers<[1], [0], [0], [1], [0, 0, 1, 1], [], []>} : vector<16x32xf32>, vector<32x96xf32>, vector<16x96xf32> -> vector<16x96xf32>
    %c0_11 = arith.constant 0 : index
    %c0_12 = arith.constant 0 : index
    %c0_13 = arith.constant 0 : index
    %33 = vector.load %arg2[%c0_11, %c0_12, %c0_13] : memref<3x1x96xf32, #tpu.memory_space<vmem>>, vector<1x1x96xf32>
    %34 = vector.shape_cast %33 : vector<1x1x96xf32> to vector<1x96xf32>
    %35 = vector.broadcast %34 : vector<1x96xf32> to vector<16x96xf32>
    %36 = arith.addf %32, %35 : vector<16x96xf32>
    %37 = vector.extract_strided_slice %36 {offsets = [0, 0], sizes = [16, 32], strides = [1, 1]} : vector<16x96xf32> to vector<16x32xf32>
    %cst_14 = arith.constant 5.000000e-01 : f32
    %38 = vector.broadcast %cst_14 : f32 to vector<16x32xf32>
    %39 = arith.mulf %37, %38 : vector<16x32xf32>
    %40 = vector.extract_strided_slice %36 {offsets = [0, 32], sizes = [16, 32], strides = [1, 1]} : vector<16x96xf32> to vector<16x32xf32>
    %41 = vector.extract_strided_slice %36 {offsets = [0, 64], sizes = [16, 32], strides = [1, 1]} : vector<16x96xf32> to vector<16x32xf32>
    %42 = vector.shape_cast %39 : vector<16x32xf32> to vector<2x8x32xf32>
    %43 = vector.shape_cast %40 : vector<16x32xf32> to vector<2x8x32xf32>
    %44 = vector.shape_cast %41 : vector<16x32xf32> to vector<2x8x32xf32>
    %45 = vector.shape_cast %42 : vector<2x8x32xf32> to vector<2x8x1x32xf32>
    %46 = vector.shape_cast %43 : vector<2x8x32xf32> to vector<2x1x8x32xf32>
    %47 = vector.broadcast %45 : vector<2x8x1x32xf32> to vector<2x8x8x32xf32>
    %48 = vector.broadcast %46 : vector<2x1x8x32xf32> to vector<2x8x8x32xf32>
    %49 = arith.mulf %47, %48 : vector<2x8x8x32xf32>
    %50 = vector.shape_cast %49 : vector<2x8x8x32xf32> to vector<128x32xf32>
    %cst_15 = arith.constant dense<0.000000e+00> : vector<128x8xf32>
    %51 = tpu.matmul %50, %16, %cst_15 {dimension_numbers = #tpu.dot_dimension_numbers<[1], [0], [0], [1], [0, 0, 1, 1], [], []>} : vector<128x32xf32>, vector<32x8xf32>, vector<128x8xf32> -> vector<128x8xf32>
    %52 = vector.shape_cast %51 : vector<128x8xf32> to vector<2x8x8x8xf32>
    %cst_16 = arith.constant dense<0xFF800000> : vector<2x8x8xf32>
    %53 = vector.multi_reduction <maximumf>, %52, %cst_16 [2] : vector<2x8x8x8xf32> to vector<2x8x8xf32>
    %54 = vector.shape_cast %53 : vector<2x8x8xf32> to vector<2x8x1x8xf32>
    %55 = vector.broadcast %54 : vector<2x8x1x8xf32> to vector<2x8x8x8xf32>
    %56 = arith.subf %52, %55 : vector<2x8x8x8xf32>
    %57 = math.exp %56 : vector<2x8x8x8xf32>
    %cst_17 = arith.constant dense<0.000000e+00> : vector<2x8x8xf32>
    %58 = vector.multi_reduction <add>, %57, %cst_17 [2] : vector<2x8x8x8xf32> to vector<2x8x8xf32>
    %59 = vector.shape_cast %58 : vector<2x8x8xf32> to vector<2x8x1x8xf32>
    %60 = tpu.reciprocal %59 {approx = true} : vector<2x8x1x8xf32> -> vector<2x8x1x8xf32>
    %61 = vector.broadcast %60 : vector<2x8x1x8xf32> to vector<2x8x8x8xf32>
    %62 = arith.mulf %57, %61 : vector<2x8x8x8xf32>
    %63 = vector.shape_cast %62 : vector<2x8x8x8xf32> to vector<128x8xf32>
    %cst_18 = arith.constant dense<0.000000e+00> : vector<128x32xf32>
    %64 = tpu.matmul %63, %29, %cst_18 {dimension_numbers = #tpu.dot_dimension_numbers<[1], [0], [0], [1], [0, 0, 1, 1], [], []>} : vector<128x8xf32>, vector<8x32xf32>, vector<128x32xf32> -> vector<128x32xf32>
    %65 = vector.shape_cast %64 : vector<128x32xf32> to vector<2x8x8x32xf32>
    %66 = vector.shape_cast %44 : vector<2x8x32xf32> to vector<2x1x8x32xf32>
    %67 = vector.broadcast %66 : vector<2x1x8x32xf32> to vector<2x8x8x32xf32>
    %68 = arith.mulf %65, %67 : vector<2x8x8x32xf32>
    %cst_19 = arith.constant dense<0.000000e+00> : vector<2x8x32xf32>
    %69 = vector.multi_reduction <add>, %68, %cst_19 [2] : vector<2x8x8x32xf32> to vector<2x8x32xf32>
    %70 = vector.shape_cast %69 : vector<2x8x32xf32> to vector<16x32xf32>
    %c0_20 = arith.constant 0 : index
    %c0_21 = arith.constant 0 : index
    %c0_22 = arith.constant 0 : index
    %71 = vector.load %arg3[%c0_20, %c0_21, %c0_22] : memref<3x32x32xf32, #tpu.memory_space<vmem>>, vector<1x32x32xf32>
    %72 = vector.shape_cast %71 : vector<1x32x32xf32> to vector<32x32xf32>
    %cst_23 = arith.constant dense<0.000000e+00> : vector<16x32xf32>
    %73 = tpu.matmul %70, %72, %cst_23 {dimension_numbers = #tpu.dot_dimension_numbers<[1], [0], [0], [1], [0, 0, 1, 1], [], []>} : vector<16x32xf32>, vector<32x32xf32>, vector<16x32xf32> -> vector<16x32xf32>
    %c0_24 = arith.constant 0 : index
    %c0_25 = arith.constant 0 : index
    %c0_26 = arith.constant 0 : index
    %74 = vector.load %arg4[%c0_24, %c0_25, %c0_26] : memref<3x1x32xf32, #tpu.memory_space<vmem>>, vector<1x1x32xf32>
    %75 = vector.shape_cast %74 : vector<1x1x32xf32> to vector<1x32xf32>
    %76 = vector.broadcast %75 : vector<1x32xf32> to vector<16x32xf32>
    %77 = arith.addf %73, %76 : vector<16x32xf32>
    %78 = arith.addf %77, %0 : vector<16x32xf32>
    %cst_27 = arith.constant dense<0.000000e+00> : vector<16xf32>
    %79 = vector.multi_reduction <add>, %78, %cst_27 [1] : vector<16x32xf32> to vector<16xf32>
    %80 = vector.shape_cast %79 : vector<16xf32> to vector<16x1xf32>
    %cst_28 = arith.constant 3.200000e+01 : f32
    %81 = vector.broadcast %cst_28 : f32 to vector<16x1xf32>
    %82 = arith.divf %80, %81 : vector<16x1xf32>
    %83 = arith.mulf %78, %78 : vector<16x32xf32>
    %cst_29 = arith.constant dense<0.000000e+00> : vector<16xf32>
    %84 = vector.multi_reduction <add>, %83, %cst_29 [1] : vector<16x32xf32> to vector<16xf32>
    %85 = vector.shape_cast %84 : vector<16xf32> to vector<16x1xf32>
    %cst_30 = arith.constant 3.200000e+01 : f32
    %86 = vector.broadcast %cst_30 : f32 to vector<16x1xf32>
    %87 = arith.divf %85, %86 : vector<16x1xf32>
    %88 = arith.mulf %82, %82 : vector<16x1xf32>
    %89 = arith.subf %87, %88 : vector<16x1xf32>
    %90 = vector.broadcast %82 : vector<16x1xf32> to vector<16x32xf32>
    %91 = arith.subf %78, %90 : vector<16x32xf32>
    %cst_31 = arith.constant 9.99999974E-6 : f32
    %92 = vector.broadcast %cst_31 : f32 to vector<16x1xf32>
    %93 = arith.addf %89, %92 : vector<16x1xf32>
    %94 = math.rsqrt %93 : vector<16x1xf32>
    %95 = vector.broadcast %94 : vector<16x1xf32> to vector<16x32xf32>
    %96 = arith.mulf %91, %95 : vector<16x32xf32>
    %97 = vector.broadcast %2 : vector<1x32xf32> to vector<16x32xf32>
    %98 = arith.mulf %96, %97 : vector<16x32xf32>
    %99 = vector.broadcast %3 : vector<1x32xf32> to vector<16x32xf32>
    %100 = arith.addf %98, %99 : vector<16x32xf32>
    %c1 = arith.constant 1 : index
    %c0_32 = arith.constant 0 : index
    %c0_33 = arith.constant 0 : index
    %101 = vector.load %arg1[%c1, %c0_32, %c0_33] : memref<3x32x96xf32, #tpu.memory_space<vmem>>, vector<1x32x96xf32>
    %102 = vector.shape_cast %101 : vector<1x32x96xf32> to vector<32x96xf32>
    %cst_34 = arith.constant dense<0.000000e+00> : vector<16x96xf32>
    %103 = tpu.matmul %100, %102, %cst_34 {dimension_numbers = #tpu.dot_dimension_numbers<[1], [0], [0], [1], [0, 0, 1, 1], [], []>} : vector<16x32xf32>, vector<32x96xf32>, vector<16x96xf32> -> vector<16x96xf32>
    %c1_35 = arith.constant 1 : index
    %c0_36 = arith.constant 0 : index
    %c0_37 = arith.constant 0 : index
    %104 = vector.load %arg2[%c1_35, %c0_36, %c0_37] : memref<3x1x96xf32, #tpu.memory_space<vmem>>, vector<1x1x96xf32>
    %105 = vector.shape_cast %104 : vector<1x1x96xf32> to vector<1x96xf32>
    %106 = vector.broadcast %105 : vector<1x96xf32> to vector<16x96xf32>
    %107 = arith.addf %103, %106 : vector<16x96xf32>
    %108 = vector.extract_strided_slice %107 {offsets = [0, 0], sizes = [16, 32], strides = [1, 1]} : vector<16x96xf32> to vector<16x32xf32>
    %cst_38 = arith.constant 5.000000e-01 : f32
    %109 = vector.broadcast %cst_38 : f32 to vector<16x32xf32>
    %110 = arith.mulf %108, %109 : vector<16x32xf32>
    %111 = vector.extract_strided_slice %107 {offsets = [0, 32], sizes = [16, 32], strides = [1, 1]} : vector<16x96xf32> to vector<16x32xf32>
    %112 = vector.extract_strided_slice %107 {offsets = [0, 64], sizes = [16, 32], strides = [1, 1]} : vector<16x96xf32> to vector<16x32xf32>
    %113 = vector.shape_cast %110 : vector<16x32xf32> to vector<2x8x32xf32>
    %114 = vector.shape_cast %111 : vector<16x32xf32> to vector<2x8x32xf32>
    %115 = vector.shape_cast %112 : vector<16x32xf32> to vector<2x8x32xf32>
    %116 = vector.shape_cast %113 : vector<2x8x32xf32> to vector<2x8x1x32xf32>
    %117 = vector.shape_cast %114 : vector<2x8x32xf32> to vector<2x1x8x32xf32>
    %118 = vector.broadcast %116 : vector<2x8x1x32xf32> to vector<2x8x8x32xf32>
    %119 = vector.broadcast %117 : vector<2x1x8x32xf32> to vector<2x8x8x32xf32>
    %120 = arith.mulf %118, %119 : vector<2x8x8x32xf32>
    %121 = vector.shape_cast %120 : vector<2x8x8x32xf32> to vector<128x32xf32>
    %cst_39 = arith.constant dense<0.000000e+00> : vector<128x8xf32>
    %122 = tpu.matmul %121, %16, %cst_39 {dimension_numbers = #tpu.dot_dimension_numbers<[1], [0], [0], [1], [0, 0, 1, 1], [], []>} : vector<128x32xf32>, vector<32x8xf32>, vector<128x8xf32> -> vector<128x8xf32>
    %123 = vector.shape_cast %122 : vector<128x8xf32> to vector<2x8x8x8xf32>
    %cst_40 = arith.constant dense<0xFF800000> : vector<2x8x8xf32>
    %124 = vector.multi_reduction <maximumf>, %123, %cst_40 [2] : vector<2x8x8x8xf32> to vector<2x8x8xf32>
    %125 = vector.shape_cast %124 : vector<2x8x8xf32> to vector<2x8x1x8xf32>
    %126 = vector.broadcast %125 : vector<2x8x1x8xf32> to vector<2x8x8x8xf32>
    %127 = arith.subf %123, %126 : vector<2x8x8x8xf32>
    %128 = math.exp %127 : vector<2x8x8x8xf32>
    %cst_41 = arith.constant dense<0.000000e+00> : vector<2x8x8xf32>
    %129 = vector.multi_reduction <add>, %128, %cst_41 [2] : vector<2x8x8x8xf32> to vector<2x8x8xf32>
    %130 = vector.shape_cast %129 : vector<2x8x8xf32> to vector<2x8x1x8xf32>
    %131 = tpu.reciprocal %130 {approx = true} : vector<2x8x1x8xf32> -> vector<2x8x1x8xf32>
    %132 = vector.broadcast %131 : vector<2x8x1x8xf32> to vector<2x8x8x8xf32>
    %133 = arith.mulf %128, %132 : vector<2x8x8x8xf32>
    %134 = vector.shape_cast %133 : vector<2x8x8x8xf32> to vector<128x8xf32>
    %cst_42 = arith.constant dense<0.000000e+00> : vector<128x32xf32>
    %135 = tpu.matmul %134, %29, %cst_42 {dimension_numbers = #tpu.dot_dimension_numbers<[1], [0], [0], [1], [0, 0, 1, 1], [], []>} : vector<128x8xf32>, vector<8x32xf32>, vector<128x32xf32> -> vector<128x32xf32>
    %136 = vector.shape_cast %135 : vector<128x32xf32> to vector<2x8x8x32xf32>
    %137 = vector.shape_cast %115 : vector<2x8x32xf32> to vector<2x1x8x32xf32>
    %138 = vector.broadcast %137 : vector<2x1x8x32xf32> to vector<2x8x8x32xf32>
    %139 = arith.mulf %136, %138 : vector<2x8x8x32xf32>
    %cst_43 = arith.constant dense<0.000000e+00> : vector<2x8x32xf32>
    %140 = vector.multi_reduction <add>, %139, %cst_43 [2] : vector<2x8x8x32xf32> to vector<2x8x32xf32>
    %141 = vector.shape_cast %140 : vector<2x8x32xf32> to vector<16x32xf32>
    %c1_44 = arith.constant 1 : index
    %c0_45 = arith.constant 0 : index
    %c0_46 = arith.constant 0 : index
    %142 = vector.load %arg3[%c1_44, %c0_45, %c0_46] : memref<3x32x32xf32, #tpu.memory_space<vmem>>, vector<1x32x32xf32>
    %143 = vector.shape_cast %142 : vector<1x32x32xf32> to vector<32x32xf32>
    %cst_47 = arith.constant dense<0.000000e+00> : vector<16x32xf32>
    %144 = tpu.matmul %141, %143, %cst_47 {dimension_numbers = #tpu.dot_dimension_numbers<[1], [0], [0], [1], [0, 0, 1, 1], [], []>} : vector<16x32xf32>, vector<32x32xf32>, vector<16x32xf32> -> vector<16x32xf32>
    %c1_48 = arith.constant 1 : index
    %c0_49 = arith.constant 0 : index
    %c0_50 = arith.constant 0 : index
    %145 = vector.load %arg4[%c1_48, %c0_49, %c0_50] : memref<3x1x32xf32, #tpu.memory_space<vmem>>, vector<1x1x32xf32>
    %146 = vector.shape_cast %145 : vector<1x1x32xf32> to vector<1x32xf32>
    %147 = vector.broadcast %146 : vector<1x32xf32> to vector<16x32xf32>
    %148 = arith.addf %144, %147 : vector<16x32xf32>
    %149 = arith.addf %148, %100 : vector<16x32xf32>
    %cst_51 = arith.constant dense<0.000000e+00> : vector<16xf32>
    %150 = vector.multi_reduction <add>, %149, %cst_51 [1] : vector<16x32xf32> to vector<16xf32>
    %151 = vector.shape_cast %150 : vector<16xf32> to vector<16x1xf32>
    %cst_52 = arith.constant 3.200000e+01 : f32
    %152 = vector.broadcast %cst_52 : f32 to vector<16x1xf32>
    %153 = arith.divf %151, %152 : vector<16x1xf32>
    %154 = arith.mulf %149, %149 : vector<16x32xf32>
    %cst_53 = arith.constant dense<0.000000e+00> : vector<16xf32>
    %155 = vector.multi_reduction <add>, %154, %cst_53 [1] : vector<16x32xf32> to vector<16xf32>
    %156 = vector.shape_cast %155 : vector<16xf32> to vector<16x1xf32>
    %cst_54 = arith.constant 3.200000e+01 : f32
    %157 = vector.broadcast %cst_54 : f32 to vector<16x1xf32>
    %158 = arith.divf %156, %157 : vector<16x1xf32>
    %159 = arith.mulf %153, %153 : vector<16x1xf32>
    %160 = arith.subf %158, %159 : vector<16x1xf32>
    %161 = vector.broadcast %153 : vector<16x1xf32> to vector<16x32xf32>
    %162 = arith.subf %149, %161 : vector<16x32xf32>
    %cst_55 = arith.constant 9.99999974E-6 : f32
    %163 = vector.broadcast %cst_55 : f32 to vector<16x1xf32>
    %164 = arith.addf %160, %163 : vector<16x1xf32>
    %165 = math.rsqrt %164 : vector<16x1xf32>
    %166 = vector.broadcast %165 : vector<16x1xf32> to vector<16x32xf32>
    %167 = arith.mulf %162, %166 : vector<16x32xf32>
    %168 = vector.broadcast %2 : vector<1x32xf32> to vector<16x32xf32>
    %169 = arith.mulf %167, %168 : vector<16x32xf32>
    %170 = vector.broadcast %3 : vector<1x32xf32> to vector<16x32xf32>
    %171 = arith.addf %169, %170 : vector<16x32xf32>
    %c2 = arith.constant 2 : index
    %c0_56 = arith.constant 0 : index
    %c0_57 = arith.constant 0 : index
    %172 = vector.load %arg1[%c2, %c0_56, %c0_57] : memref<3x32x96xf32, #tpu.memory_space<vmem>>, vector<1x32x96xf32>
    %173 = vector.shape_cast %172 : vector<1x32x96xf32> to vector<32x96xf32>
    %cst_58 = arith.constant dense<0.000000e+00> : vector<16x96xf32>
    %174 = tpu.matmul %171, %173, %cst_58 {dimension_numbers = #tpu.dot_dimension_numbers<[1], [0], [0], [1], [0, 0, 1, 1], [], []>} : vector<16x32xf32>, vector<32x96xf32>, vector<16x96xf32> -> vector<16x96xf32>
    %c2_59 = arith.constant 2 : index
    %c0_60 = arith.constant 0 : index
    %c0_61 = arith.constant 0 : index
    %175 = vector.load %arg2[%c2_59, %c0_60, %c0_61] : memref<3x1x96xf32, #tpu.memory_space<vmem>>, vector<1x1x96xf32>
    %176 = vector.shape_cast %175 : vector<1x1x96xf32> to vector<1x96xf32>
    %177 = vector.broadcast %176 : vector<1x96xf32> to vector<16x96xf32>
    %178 = arith.addf %174, %177 : vector<16x96xf32>
    %179 = vector.extract_strided_slice %178 {offsets = [0, 0], sizes = [16, 32], strides = [1, 1]} : vector<16x96xf32> to vector<16x32xf32>
    %cst_62 = arith.constant 5.000000e-01 : f32
    %180 = vector.broadcast %cst_62 : f32 to vector<16x32xf32>
    %181 = arith.mulf %179, %180 : vector<16x32xf32>
    %182 = vector.extract_strided_slice %178 {offsets = [0, 32], sizes = [16, 32], strides = [1, 1]} : vector<16x96xf32> to vector<16x32xf32>
    %183 = vector.extract_strided_slice %178 {offsets = [0, 64], sizes = [16, 32], strides = [1, 1]} : vector<16x96xf32> to vector<16x32xf32>
    %184 = vector.shape_cast %181 : vector<16x32xf32> to vector<2x8x32xf32>
    %185 = vector.shape_cast %182 : vector<16x32xf32> to vector<2x8x32xf32>
    %186 = vector.shape_cast %183 : vector<16x32xf32> to vector<2x8x32xf32>
    %187 = vector.shape_cast %184 : vector<2x8x32xf32> to vector<2x8x1x32xf32>
    %188 = vector.shape_cast %185 : vector<2x8x32xf32> to vector<2x1x8x32xf32>
    %189 = vector.broadcast %187 : vector<2x8x1x32xf32> to vector<2x8x8x32xf32>
    %190 = vector.broadcast %188 : vector<2x1x8x32xf32> to vector<2x8x8x32xf32>
    %191 = arith.mulf %189, %190 : vector<2x8x8x32xf32>
    %192 = vector.shape_cast %191 : vector<2x8x8x32xf32> to vector<128x32xf32>
    %cst_63 = arith.constant dense<0.000000e+00> : vector<128x8xf32>
    %193 = tpu.matmul %192, %16, %cst_63 {dimension_numbers = #tpu.dot_dimension_numbers<[1], [0], [0], [1], [0, 0, 1, 1], [], []>} : vector<128x32xf32>, vector<32x8xf32>, vector<128x8xf32> -> vector<128x8xf32>
    %194 = vector.shape_cast %193 : vector<128x8xf32> to vector<2x8x8x8xf32>
    %cst_64 = arith.constant dense<0xFF800000> : vector<2x8x8xf32>
    %195 = vector.multi_reduction <maximumf>, %194, %cst_64 [2] : vector<2x8x8x8xf32> to vector<2x8x8xf32>
    %196 = vector.shape_cast %195 : vector<2x8x8xf32> to vector<2x8x1x8xf32>
    %197 = vector.broadcast %196 : vector<2x8x1x8xf32> to vector<2x8x8x8xf32>
    %198 = arith.subf %194, %197 : vector<2x8x8x8xf32>
    %199 = math.exp %198 : vector<2x8x8x8xf32>
    %cst_65 = arith.constant dense<0.000000e+00> : vector<2x8x8xf32>
    %200 = vector.multi_reduction <add>, %199, %cst_65 [2] : vector<2x8x8x8xf32> to vector<2x8x8xf32>
    %201 = vector.shape_cast %200 : vector<2x8x8xf32> to vector<2x8x1x8xf32>
    %202 = tpu.reciprocal %201 {approx = true} : vector<2x8x1x8xf32> -> vector<2x8x1x8xf32>
    %203 = vector.broadcast %202 : vector<2x8x1x8xf32> to vector<2x8x8x8xf32>
    %204 = arith.mulf %199, %203 : vector<2x8x8x8xf32>
    %205 = vector.shape_cast %204 : vector<2x8x8x8xf32> to vector<128x8xf32>
    %cst_66 = arith.constant dense<0.000000e+00> : vector<128x32xf32>
    %206 = tpu.matmul %205, %29, %cst_66 {dimension_numbers = #tpu.dot_dimension_numbers<[1], [0], [0], [1], [0, 0, 1, 1], [], []>} : vector<128x8xf32>, vector<8x32xf32>, vector<128x32xf32> -> vector<128x32xf32>
    %207 = vector.shape_cast %206 : vector<128x32xf32> to vector<2x8x8x32xf32>
    %208 = vector.shape_cast %186 : vector<2x8x32xf32> to vector<2x1x8x32xf32>
    %209 = vector.broadcast %208 : vector<2x1x8x32xf32> to vector<2x8x8x32xf32>
    %210 = arith.mulf %207, %209 : vector<2x8x8x32xf32>
    %cst_67 = arith.constant dense<0.000000e+00> : vector<2x8x32xf32>
    %211 = vector.multi_reduction <add>, %210, %cst_67 [2] : vector<2x8x8x32xf32> to vector<2x8x32xf32>
    %212 = vector.shape_cast %211 : vector<2x8x32xf32> to vector<16x32xf32>
    %c2_68 = arith.constant 2 : index
    %c0_69 = arith.constant 0 : index
    %c0_70 = arith.constant 0 : index
    %213 = vector.load %arg3[%c2_68, %c0_69, %c0_70] : memref<3x32x32xf32, #tpu.memory_space<vmem>>, vector<1x32x32xf32>
    %214 = vector.shape_cast %213 : vector<1x32x32xf32> to vector<32x32xf32>
    %cst_71 = arith.constant dense<0.000000e+00> : vector<16x32xf32>
    %215 = tpu.matmul %212, %214, %cst_71 {dimension_numbers = #tpu.dot_dimension_numbers<[1], [0], [0], [1], [0, 0, 1, 1], [], []>} : vector<16x32xf32>, vector<32x32xf32>, vector<16x32xf32> -> vector<16x32xf32>
    %c2_72 = arith.constant 2 : index
    %c0_73 = arith.constant 0 : index
    %c0_74 = arith.constant 0 : index
    %216 = vector.load %arg4[%c2_72, %c0_73, %c0_74] : memref<3x1x32xf32, #tpu.memory_space<vmem>>, vector<1x1x32xf32>
    %217 = vector.shape_cast %216 : vector<1x1x32xf32> to vector<1x32xf32>
    %218 = vector.broadcast %217 : vector<1x32xf32> to vector<16x32xf32>
    %219 = arith.addf %215, %218 : vector<16x32xf32>
    %220 = arith.addf %219, %171 : vector<16x32xf32>
    %cst_75 = arith.constant dense<0.000000e+00> : vector<16xf32>
    %221 = vector.multi_reduction <add>, %220, %cst_75 [1] : vector<16x32xf32> to vector<16xf32>
    %222 = vector.shape_cast %221 : vector<16xf32> to vector<16x1xf32>
    %cst_76 = arith.constant 3.200000e+01 : f32
    %223 = vector.broadcast %cst_76 : f32 to vector<16x1xf32>
    %224 = arith.divf %222, %223 : vector<16x1xf32>
    %225 = arith.mulf %220, %220 : vector<16x32xf32>
    %cst_77 = arith.constant dense<0.000000e+00> : vector<16xf32>
    %226 = vector.multi_reduction <add>, %225, %cst_77 [1] : vector<16x32xf32> to vector<16xf32>
    %227 = vector.shape_cast %226 : vector<16xf32> to vector<16x1xf32>
    %cst_78 = arith.constant 3.200000e+01 : f32
    %228 = vector.broadcast %cst_78 : f32 to vector<16x1xf32>
    %229 = arith.divf %227, %228 : vector<16x1xf32>
    %230 = arith.mulf %224, %224 : vector<16x1xf32>
    %231 = arith.subf %229, %230 : vector<16x1xf32>
    %232 = vector.broadcast %224 : vector<16x1xf32> to vector<16x32xf32>
    %233 = arith.subf %220, %232 : vector<16x32xf32>
    %cst_79 = arith.constant 9.99999974E-6 : f32
    %234 = vector.broadcast %cst_79 : f32 to vector<16x1xf32>
    %235 = arith.addf %231, %234 : vector<16x1xf32>
    %236 = math.rsqrt %235 : vector<16x1xf32>
    %237 = vector.broadcast %236 : vector<16x1xf32> to vector<16x32xf32>
    %238 = arith.mulf %233, %237 : vector<16x32xf32>
    %239 = vector.broadcast %2 : vector<1x32xf32> to vector<16x32xf32>
    %240 = arith.mulf %238, %239 : vector<16x32xf32>
    %241 = vector.broadcast %3 : vector<1x32xf32> to vector<16x32xf32>
    %242 = arith.addf %240, %241 : vector<16x32xf32>
    %243 = vector.shape_cast %242 : vector<16x32xf32> to vector<2x8x32xf32>
    %cst_80 = arith.constant dense<0.000000e+00> : vector<2x32xf32>
    %244 = vector.multi_reduction <add>, %243, %cst_80 [1] : vector<2x8x32xf32> to vector<2x32xf32>
    %cst_81 = arith.constant 8.000000e+00 : f32
    %245 = vector.broadcast %cst_81 : f32 to vector<2x32xf32>
    %246 = arith.divf %244, %245 : vector<2x32xf32>
    %c0_82 = arith.constant 0 : index
    %c0_83 = arith.constant 0 : index
    %247 = vector.load %arg6[%c0_82, %c0_83] : memref<32x64xf32, #tpu.memory_space<vmem>>, vector<32x64xf32>
    %cst_84 = arith.constant dense<0.000000e+00> : vector<2x64xf32>
    %248 = tpu.matmul %246, %247, %cst_84 {dimension_numbers = #tpu.dot_dimension_numbers<[1], [0], [0], [1], [0, 0, 1, 1], [], []>} : vector<2x32xf32>, vector<32x64xf32>, vector<2x64xf32> -> vector<2x64xf32>
    %c0_85 = arith.constant 0 : index
    %c0_86 = arith.constant 0 : index
    %249 = vector.load %arg7[%c0_85, %c0_86] : memref<1x64xf32, #tpu.memory_space<vmem>>, vector<1x64xf32>
    %250 = vector.broadcast %249 : vector<1x64xf32> to vector<2x64xf32>
    %251 = arith.addf %248, %250 : vector<2x64xf32>
    %cst_87 = arith.constant 0.000000e+00 : f32
    %252 = vector.broadcast %cst_87 : f32 to vector<2x64xf32>
    %253 = arith.maximumf %251, %252 : vector<2x64xf32>
    %c0_88 = arith.constant 0 : index
    %c0_89 = arith.constant 0 : index
    %254 = vector.load %arg8[%c0_88, %c0_89] : memref<64x128xf32, #tpu.memory_space<vmem>>, vector<64x128xf32>
    %cst_90 = arith.constant dense<0.000000e+00> : vector<2x128xf32>
    %255 = tpu.matmul %253, %254, %cst_90 {dimension_numbers = #tpu.dot_dimension_numbers<[1], [0], [0], [1], [0, 0, 1, 1], [], []>} : vector<2x64xf32>, vector<64x128xf32>, vector<2x128xf32> -> vector<2x128xf32>
    %c0_91 = arith.constant 0 : index
    %c0_92 = arith.constant 0 : index
    %256 = vector.load %arg9[%c0_91, %c0_92] : memref<1x128xf32, #tpu.memory_space<vmem>>, vector<1x128xf32>
    %257 = vector.broadcast %256 : vector<1x128xf32> to vector<2x128xf32>
    %258 = arith.addf %255, %257 : vector<2x128xf32>
    %c0_93 = arith.constant 0 : index
    %c0_94 = arith.constant 0 : index
    %259 = vector.load %arg10[%c0_93, %c0_94] : memref<2x128xf32, #tpu.memory_space<vmem>>, vector<2x128xf32>
    tpu.vector_store %arg10[%c0_93, %c0_94], %258 {strides = array<i32>} : memref<2x128xf32, #tpu.memory_space<vmem>>, vector<2x128xf32>,
    return
  }
}

</mosaic_0001>

<llo_original>
// kernel: tpu_custom_call.1
$region0: #{tpu_custom_call.1}
  #allocation0 [shape = 'u32[]', space=smem, size = 0x4, offset = 0x4, fixed_abs, tag = 'smem constant byte address 0x4 - core index']
  #allocation1 [shape = 'u32[144,128]{1,0:T(1,128)}', space=vmem, size = 0x12000, scoped, tag = 'internal scratch']
  %s0 = inlined_call_operand.hbm [shape: f32[16,32], index: 0, kind: input, shape index: {}]
  %s1 = inlined_call_operand.hbm [shape: f32[3,32,96], index: 1, kind: input, shape index: {}]
  %s2 = inlined_call_operand.vmem [shape: f32[3,1,96], index: 2, kind: input, shape index: {}]
  %s3 = inlined_call_operand.hbm [shape: f32[3,32,32], index: 3, kind: input, shape index: {}]
  %s4 = inlined_call_operand.vmem [shape: f32[3,1,32], index: 4, kind: input, shape index: {}]
  %s5 = inlined_call_operand.vmem [shape: f32[2,32], index: 5, kind: input, shape index: {}]
  %s6 = inlined_call_operand.hbm [shape: f32[32,64], index: 6, kind: input, shape index: {}]
  %s7 = inlined_call_operand.vmem [shape: f32[1,64], index: 7, kind: input, shape index: {}]
  %s8 = inlined_call_operand.hbm [shape: f32[64,128], index: 8, kind: input, shape index: {}]
  %s9 = inlined_call_operand.vmem [shape: f32[1,128], index: 9, kind: input, shape index: {}]
  %s10 = inlined_call_operand.hbm [shape: f32[2,128], index: 10, kind: output, shape index: {}]
  %s11 = sld [smem:[#allocation0]]
  $region70: #{tpu_custom_call.1} parent=0
    _
  %s13 = ssub.s32 1, %s11
  %s14 = scalar_select 0, %s13, %s11
  $region1: #{tpu_custom_call.1} parent=0
    #allocation2 [shape = 'u8[8192]{0}', space=vmem, size = 0x2000, scoped, tag = 'input window, operand 0, single buffered']
    #allocation3 [shape = 's32[1]{0}', space=sflag, size = 0x4, scoped, tag = 'scoped memory for tpu_custom_call.1']
    #allocation4 [shape = 's32[1]{0}', space=sflag, size = 0x4, scoped, tag = 'scoped memory for tpu_custom_call.1']
    #allocation5 [shape = 'u8[49152]{0}', space=vmem, size = 0xc000, scoped, tag = 'input window, operand 1, single buffered']
    #allocation6 [shape = 's32[1]{0}', space=sflag, size = 0x4, scoped, tag = 'scoped memory for tpu_custom_call.1']
    #allocation7 [shape = 'u8[49152]{0}', space=vmem, size = 0xc000, scoped, tag = 'input window, operand 3, single buffered']
    #allocation8 [shape = 'u8[16384]{0}', space=vmem, size = 0x4000, scoped, tag = 'input window, operand 6, single buffered']
    #allocation9 [shape = 's32[1]{0}', space=sflag, size = 0x4, scoped, tag = 'scoped memory for tpu_custom_call.1']
    #allocation10 [shape = 'u8[32768]{0}', space=vmem, size = 0x8000, scoped, tag = 'input window, operand 8, single buffered']
    #allocation11 [shape = 'u8[1024]{0}', space=vmem, size = 0x400, scoped, tag = 'output window, operand 0, single buffered']
    %15 = vsyncpa [#allocation3], 0
    %16 = vsyncpa [#allocation6], 0
    %17 = vsyncpa [#allocation9], 0
    %18 = vsyncpa [#allocation4], 0
    // Predicated region
    $region2: #{tpu_custom_call.1} parent=1 // pred_check
      _
    $region3: #{tpu_custom_call.1} parent=1 // pred_check_branch
      %20 = sbr.rel (0) target = $region5
    $region4: #{tpu_custom_call.1} parent=1 // pred_region
      %s22 = ssub.s32 256, 256
      %23 = vsyncadd [#allocation3], %s22
      %s24 = sshll.u32 [#allocation2], 4
      %s25 = int_to_ptr.vmem [resolvable:$true] %s24
      %30 = dma.hbm_to_vmem [thread:$0]  %s0, 256, %s25, [#allocation3], 128, 128, 8
    $region5: #{tpu_custom_call.1} parent=1 // pred_fallthru
      _
    // Predicated region
    $region6: #{tpu_custom_call.1} parent=1 // pred_check
      _
    $region7: #{tpu_custom_call.1} parent=1 // pred_check_branch
      %32 = sbr.rel (0) target = $region9
    $region8: #{tpu_custom_call.1} parent=1 // pred_region
      %s34 = ssub.s32 1536, 1536
      %35 = vsyncadd [#allocation6], %s34
      %s36 = sshll.u32 [#allocation5], 4
      %s37 = int_to_ptr.vmem [resolvable:$true] %s36
      %42 = dma.hbm_to_vmem [thread:$0]  %s1, 1536, %s37, [#allocation6], 128, 128, 8
    $region9: #{tpu_custom_call.1} parent=1 // pred_fallthru
      _
    // Predicated region
    $region10: #{tpu_custom_call.1} parent=1 // pred_check
      _
    $region11: #{tpu_custom_call.1} parent=1 // pred_check_branch
      %44 = sbr.rel (0) target = $region13
    $region12: #{tpu_custom_call.1} parent=1 // pred_region
      _
    $region13: #{tpu_custom_call.1} parent=1 // pred_fallthru
      _
    // Predicated region
    $region14: #{tpu_custom_call.1} parent=1 // pred_check
      _
    $region15: #{tpu_custom_call.1} parent=1 // pred_check_branch
      %46 = sbr.rel (0) target = $region17
    $region16: #{tpu_custom_call.1} parent=1 // pred_region
      %s48 = ssub.s32 1536, 1536
      %49 = vsyncadd [#allocation6], %s48
      %s50 = sshll.u32 [#allocation7], 4
      %s51 = int_to_ptr.vmem [resolvable:$true] %s50
      %56 = dma.hbm_to_vmem [thread:$0]  %s3, 1536, %s51, [#allocation6], 128, 128, 8
    $region17: #{tpu_custom_call.1} parent=1 // pred_fallthru
      _
    // Predicated region
    $region18: #{tpu_custom_call.1} parent=1 // pred_check
      _
    $region19: #{tpu_custom_call.1} parent=1 // pred_check_branch
      %58 = sbr.rel (0) target = $region21
    $region20: #{tpu_custom_call.1} parent=1 // pred_region
      _
    $region21: #{tpu_custom_call.1} parent=1 // pred_fallthru
      _
    // Predicated region
    $region22: #{tpu_custom_call.1} parent=1 // pred_check
      _
    $region23: #{tpu_custom_call.1} parent=1 // pred_check_branch
      %60 = sbr.rel (0) target = $region25
    $region24: #{tpu_custom_call.1} parent=1 // pred_region
      _
    $region25: #{tpu_custom_call.1} parent=1 // pred_fallthru
      _
    // Predicated region
    $region26: #{tpu_custom_call.1} parent=1 // pred_check
      _
    $region27: #{tpu_custom_call.1} parent=1 // pred_check_branch
      %62 = sbr.rel (0) target = $region29
    $region28: #{tpu_custom_call.1} parent=1 // pred_region
      %s64 = ssub.s32 512, 512
      %65 = vsyncadd [#allocation9], %s64
      %s66 = sshll.u32 [#allocation8], 4
      %s67 = int_to_ptr.vmem [resolvable:$true] %s66
      %72 = dma.hbm_to_vmem [thread:$0]  %s6, 512, %s67, [#allocation9], 128, 128, 8
    $region29: #{tpu_custom_call.1} parent=1 // pred_fallthru
      _
    // Predicated region
    $region30: #{tpu_custom_call.1} parent=1 // pred_check
      _
    $region31: #{tpu_custom_call.1} parent=1 // pred_check_branch
      %74 = sbr.rel (0) target = $region33
    $region32: #{tpu_custom_call.1} parent=1 // pred_region
      _
    $region33: #{tpu_custom_call.1} parent=1 // pred_fallthru
      _
    // Predicated region
    $region34: #{tpu_custom_call.1} parent=1 // pred_check
      _
    $region35: #{tpu_custom_call.1} parent=1 // pred_check_branch
      %76 = sbr.rel (0) target = $region37
    $region36: #{tpu_custom_call.1} parent=1 // pred_region
      %s78 = ssub.s32 1024, 1024
      %79 = vsyncadd [#allocation9], %s78
      %s80 = sshll.u32 [#allocation10], 4
      %s81 = int_to_ptr.vmem [resolvable:$true] %s80
      %86 = dma.hbm_to_vmem [thread:$0]  %s8, 1024, %s81, [#allocation9], 128, 128, 8
    $region37: #{tpu_custom_call.1} parent=1 // pred_fallthru
      _
    // Predicated region
    $region38: #{tpu_custom_call.1} parent=1 // pred_check
      _
    $region39: #{tpu_custom_call.1} parent=1 // pred_check_branch
      %88 = sbr.rel (0) target = $region41
    $region40: #{tpu_custom_call.1} parent=1 // pred_region
      _
    $region41: #{tpu_custom_call.1} parent=1 // pred_fallthru
      _
    // Predicated region
    $region42: #{tpu_custom_call.1} parent=1 // pred_check
      _
    $region43: #{tpu_custom_call.1} parent=1 // pred_check_branch
      %90 = sbr.rel (0) target = $region45
    $region44: #{tpu_custom_call.1} parent=1 // pred_region
      %91 = dma.done [#allocation3], 256
    $region45: #{tpu_custom_call.1} parent=1 // pred_fallthru
      _
    // Predicated region
    $region46: #{tpu_custom_call.1} parent=1 // pred_check
      _
    $region47: #{tpu_custom_call.1} parent=1 // pred_check_branch
      %93 = sbr.rel (0) target = $region49
    $region48: #{tpu_custom_call.1} parent=1 // pred_region
      %94 = dma.done [#allocation6], 1536
    $region49: #{tpu_custom_call.1} parent=1 // pred_fallthru
      _
    // Predicated region
    $region50: #{tpu_custom_call.1} parent=1 // pred_check
      _
    $region51: #{tpu_custom_call.1} parent=1 // pred_check_branch
      %96 = sbr.rel (0) target = $region53
    $region52: #{tpu_custom_call.1} parent=1 // pred_region
      %97 = dma.done [#allocation6], 1536
    $region53: #{tpu_custom_call.1} parent=1 // pred_fallthru
      _
    // Predicated region
    $region54: #{tpu_custom_call.1} parent=1 // pred_check
      _
    $region55: #{tpu_custom_call.1} parent=1 // pred_check_branch
      %99 = sbr.rel (0) target = $region57
    $region56: #{tpu_custom_call.1} parent=1 // pred_region
      %100 = dma.done [#allocation9], 512
    $region57: #{tpu_custom_call.1} parent=1 // pred_fallthru
      _
    // Predicated region
    $region58: #{tpu_custom_call.1} parent=1 // pred_check
      _
    $region59: #{tpu_custom_call.1} parent=1 // pred_check_branch
      %102 = sbr.rel (0) target = $region61
    $region60: #{tpu_custom_call.1} parent=1 // pred_region
      %103 = dma.done [#allocation9], 1024
    $region61: #{tpu_custom_call.1} parent=1 // pred_fallthru
      _
    %v104 = vld [vmem:[#allocation2] sm:$0xff]
    %v105 = vld [vmem:[#allocation2 + $0x8] sm:$0xff]
    %v106 = vld [vmem:[%s5] sm:$0x3]
    %v107 = vlaneseq
    %v108 = vshrl.u32 %v107, 7
    %v109 = vadd.s32 %v108, 8
    %v110 = vadd.s32 %v108, 16
    %v111 = vadd.s32 %v108, 24
    %v112 = vlaneseq
    %v113 = vand.u32 %v112, 127
    %v114 = vmul.u32 %v113, 4
    %vm115 = vcmp.ge.s32.totalorder %v108, %v114
    %vm116 = vcmp.ge.s32.totalorder %v109, %v114
    %vm117 = vcmp.ge.s32.totalorder %v110, %v114
    %vm118 = vcmp.ge.s32.totalorder %v111, %v114
    %v119 = vadd.s32 %v114, 4
    %vm120 = vcmp.lt.s32.totalorder %v108, %v119
    %vm121 = vcmp.lt.s32.totalorder %v109, %v119
    %vm122 = vcmp.lt.s32.totalorder %v110, %v119
    %vm123 = vcmp.lt.s32.totalorder %v111, %v119
    %vm124 = vmand %vm115, %vm120
    %vm125 = vmand %vm116, %vm121
    %vm126 = vmand %vm117, %vm122
    %vm127 = vmand %vm118, %vm123
    %v128 = vsel %vm124, 1, 0
    %v129 = vsel %vm125, 1, 0
    %v130 = vsel %vm126, 1, 0
    %v131 = vsel %vm127, 1, 0
    %v132 = vcvt.s32.f32 %v128
    %v133 = vcvt.s32.f32 %v129
    %v134 = vcvt.s32.f32 %v130
    %v135 = vcvt.s32.f32 %v131
    %v136 = vmul.u32 %v108, 4
    %vm137 = vcmp.ge.s32.totalorder %v113, %v136
    %v138 = vadd.s32 %v136, 4
    %vm139 = vcmp.lt.s32.totalorder %v113, %v138
    %vm140 = vmand %vm137, %vm139
    %v141 = vsel %vm140, 1, 0
    %v142 = vcvt.s32.f32 %v141
    %v143 = vld [vmem:[#allocation5] sm:$0xff]
    %v144 = vld [vmem:[#allocation5 + $0x8] sm:$0xff]
    %v145 = vld [vmem:[#allocation5 + $0x10] sm:$0xff]
    %v146 = vld [vmem:[#allocation5 + $0x18] sm:$0xff]
    %v147 = vld [vmem:[%s2] sm:$0x1]
    %v149 = vlaneseq
    %v150 = vshrl.u32 %v149, 7
    %v151 = vsub.s32 0, %v150
    %v152 = vrot.slane %v147, %v151
    %vm154 = vcmask 261120
    %v156 = vsel %vm154, %v104, 0
    %v159 = vsel %vm154, %v105, 0
    %161 = vmatprep.subr.mxu0 0.0
    %162 = vmatpush1.msra.mxu0 %v143
    %163 = vmatprep.subr.mxu0 0.0
    %164 = vmatpush1.msra.mxu0 %v144
    %165 = vmatprep.subr.mxu0 0.0
    %166 = vmatpush1.msra.mxu0 %v145
    %167 = vmatprep.subr.mxu0 0.0
    %168 = vmatpush1.msra.mxu0 %v146
    %169 = vmatprep.subr.mxu0 0.0
    %170 = vmatpush1.msra.mxu0 0.0
    %171 = vmatprep.subr.mxu0 0.0
    %172 = vmatpush1.msra.mxu0 0.0
    %173 = vmatprep.subr.mxu0 0.0
    %174 = vmatpush1.msra.mxu0 0.0
    %175 = vmatprep.subr.mxu0 0.0
    %176 = vmatpush1.msra.mxu0 0.0
    %177 = vmatprep.subr.mxu0 0.0
    %178 = vmatpush1.msra.mxu0 0.0
    %179 = vmatprep.subr.mxu0 0.0
    %180 = vmatpush1.msra.mxu0 0.0
    %181 = vmatprep.subr.mxu0 0.0
    %182 = vmatpush1.msra.mxu0 0.0
    %183 = vmatprep.subr.mxu0 0.0
    %184 = vmatpush1.msra.mxu0 0.0
    %185 = vmatprep.subr.mxu0 0.0
    %186 = vmatpush1.msra.mxu0 0.0
    %187 = vmatprep.subr.mxu0 0.0
    %188 = vmatpush1.msra.mxu0 0.0
    %189 = vmatprep.subr.mxu0 0.0
    %190 = vmatpush1.msra.mxu0 0.0
    %191 = vmatprep.subr.mxu0 0.0
    %192 = vmatpush1.msra.mxu0 0.0
    %193 = vmatprep.subr.mxu0 0.0
    %194 = vmatpush1.msra.mxu0 0.0
    %195 = vmatprep.subr.mxu0 0.0
    %196 = vmatpush1.msra.mxu0 0.0
    %197 = vmatprep.subr.mxu0 0.0
    %198 = vmatpush1.msra.mxu0 0.0
    %199 = vmatprep.subr.mxu0 0.0
    %200 = vmatpush1.msra.mxu0 0.0
    %201 = vmatprep.subr.mxu0 0.0
    %202 = vmatpush1.msra.mxu0 0.0
    %203 = vmatprep.subr.mxu0 0.0
    %204 = vmatpush1.msra.mxu0 0.0
    %205 = vmatprep.subr.mxu0 0.0
    %206 = vmatpush1.msra.mxu0 0.0
    %207 = vmatprep.subr.mxu0 0.0
    %208 = vmatpush1.msra.mxu0 0.0
    %209 = vmatprep.subr.mxu0 0.0
    %210 = vmatpush1.msra.mxu0 0.0
    %211 = vmatprep.subr.mxu0 0.0
    %212 = vmatpush1.msra.mxu0 0.0
    %213 = vmatprep.subr.mxu0 0.0
    %214 = vmatpush1.msra.mxu0 0.0
    %215 = vmatprep.subr.mxu0 0.0
    %216 = vmatpush1.msra.mxu0 0.0
    %217 = vmatprep.subr.mxu0 0.0
    %218 = vmatpush1.msra.mxu0 0.0
    %219 = vmatprep.subr.mxu0 0.0
    %220 = vmatpush1.msra.mxu0 0.0
    %221 = vmatprep.subr.mxu0 0.0
    %222 = vmatpush1.msra.mxu0 0.0
    %223 = vmatprep.subr.mxu0 0.0
    %224 = vmatpush1.msra.mxu0 0.0
    %225 = vmatprep.mubr.f32.mxu0 0.0
    %226 = vmatmul.mubr.f32.gmra.mrb[0].mxu0 %v156
    %v227 = vpop.f32.mrb[0].mxu0
    %v228 = vadd.f32 %v152, %v227
    %v229 = vpop.f32.mrb[0].mxu0
    %230 = vmatprep.mubr.f32.mxu0 0.0
    %231 = vmatmul.mubr.f32.gmra.mrb[0].mxu0 %v159
    %v232 = vpop.f32.mrb[0].mxu0
    %v233 = vadd.f32 %v152, %v232
    %v234 = vpop.f32.mrb[0].mxu0
    %235 = vdwg.mxu0
    %v236 = vmul.f32 %v228, 0.5
    %v237 = vmul.f32 %v233, 0.5
    %v240 = vcombine.high %v236, %v236
    %v242 = vunpack.c.l.s4 1966171168
    %v243 = vunpack.c.0.s8 %v242
    %v244 = vlaneseq
    %v245 = vshrl.u32 %v244, 7
    %v246 = vsub.s32 %v243, %v245
    %v247 = vrot.slane %v236, %v246
    %v249 = vunpack.c.l.s4 1966171168
    %v250 = vunpack.c.0.s8 %v249
    %v251 = vlaneseq
    %v252 = vshrl.u32 %v251, 7
    %v253 = vsub.s32 %v250, %v252
    %v254 = vrot.slane %v240, %v253
    %v255 = vcombine.high %v247, %v247
    %v256 = vcombine.high %v254, %v254
    %v258 = vunpack.c.l.s4 1966171168
    %v259 = vunpack.c.0.s8 %v258
    %v260 = vlaneseq
    %v261 = vshrl.u32 %v260, 7
    %v262 = vsub.s32 %v259, %v261
    %v263 = vrot.slane %v247, %v262
    %v265 = vunpack.c.l.s4 1966171168
    %v266 = vunpack.c.0.s8 %v265
    %v267 = vlaneseq
    %v268 = vshrl.u32 %v267, 7
    %v269 = vsub.s32 %v266, %v268
    %v270 = vrot.slane %v254, %v269
    %v272 = vunpack.c.l.s4 1966171168
    %v273 = vunpack.c.0.s8 %v272
    %v274 = vlaneseq
    %v275 = vshrl.u32 %v274, 7
    %v276 = vsub.s32 %v273, %v275
    %v277 = vrot.slane %v255, %v276
    %v279 = vunpack.c.l.s4 1966171168
    %v280 = vunpack.c.0.s8 %v279
    %v281 = vlaneseq
    %v282 = vshrl.u32 %v281, 7
    %v283 = vsub.s32 %v280, %v282
    %v284 = vrot.slane %v256, %v283
    %v285 = vcombine.high %v263, %v263
    %v286 = vcombine.high %v270, %v270
    %v287 = vcombine.high %v277, %v277
    %v288 = vcombine.high %v284, %v284
    %v289 = vcombine.high %v237, %v237
    %v291 = vunpack.c.l.s4 1966171168
    %v292 = vunpack.c.0.s8 %v291
    %v293 = vlaneseq
    %v294 = vshrl.u32 %v293, 7
    %v295 = vsub.s32 %v292, %v294
    %v296 = vrot.slane %v237, %v295
    %v298 = vunpack.c.l.s4 1966171168
    %v299 = vunpack.c.0.s8 %v298
    %v300 = vlaneseq
    %v301 = vshrl.u32 %v300, 7
    %v302 = vsub.s32 %v299, %v301
    %v303 = vrot.slane %v289, %v302
    %v304 = vcombine.high %v296, %v296
    %v305 = vcombine.high %v303, %v303
    %v307 = vunpack.c.l.s4 1966171168
    %v308 = vunpack.c.0.s8 %v307
    %v309 = vlaneseq
    %v310 = vshrl.u32 %v309, 7
    %v311 = vsub.s32 %v308, %v310
    %v312 = vrot.slane %v296, %v311
    %v314 = vunpack.c.l.s4 1966171168
    %v315 = vunpack.c.0.s8 %v314
    %v316 = vlaneseq
    %v317 = vshrl.u32 %v316, 7
    %v318 = vsub.s32 %v315, %v317
    %v319 = vrot.slane %v303, %v318
    %v321 = vunpack.c.l.s4 1966171168
    %v322 = vunpack.c.0.s8 %v321
    %v323 = vlaneseq
    %v324 = vshrl.u32 %v323, 7
    %v325 = vsub.s32 %v322, %v324
    %v326 = vrot.slane %v304, %v325
    %v328 = vunpack.c.l.s4 1966171168
    %v329 = vunpack.c.0.s8 %v328
    %v330 = vlaneseq
    %v331 = vshrl.u32 %v330, 7
    %v332 = vsub.s32 %v329, %v331
    %v333 = vrot.slane %v305, %v332
    %v334 = vcombine.high %v312, %v312
    %v335 = vcombine.high %v319, %v319
    %v336 = vcombine.high %v326, %v326
    %v337 = vcombine.high %v333, %v333
    %v338 = vlaneseq
    %v339 = vshrl.u32 %v338, 7
    %v340 = vsub.s32 0, %v339
    %v341 = vrot.slane %v263, %v340
    %v342 = vlaneseq
    %v343 = vshrl.u32 %v342, 7
    %v344 = vsub.s32 0, %v343
    %v345 = vrot.slane %v277, %v344
    %v346 = vlaneseq
    %v347 = vshrl.u32 %v346, 7
    %v348 = vsub.s32 0, %v347
    %v349 = vrot.slane %v285, %v348
    %v350 = vlaneseq
    %v351 = vshrl.u32 %v350, 7
    %v352 = vsub.s32 0, %v351
    %v353 = vrot.slane %v287, %v352
    %v354 = vlaneseq
    %v355 = vshrl.u32 %v354, 7
    %v356 = vsub.s32 0, %v355
    %v357 = vrot.slane %v270, %v356
    %v358 = vlaneseq
    %v359 = vshrl.u32 %v358, 7
    %v360 = vsub.s32 0, %v359
    %v361 = vrot.slane %v284, %v360
    %v362 = vlaneseq
    %v363 = vshrl.u32 %v362, 7
    %v364 = vsub.s32 0, %v363
    %v365 = vrot.slane %v286, %v364
    %v366 = vlaneseq
    %v367 = vshrl.u32 %v366, 7
    %v368 = vsub.s32 0, %v367
    %v369 = vrot.slane %v288, %v368
    %v370 = vlaneseq
    %v371 = vshrl.u32 %v370, 7
    %v372 = vsub.s32 0, %v371
    %v373 = vrot.slane %v312, %v372
    %v374 = vlaneseq
    %v375 = vshrl.u32 %v374, 7
    %v376 = vsub.s32 0, %v375
    %v377 = vrot.slane %v326, %v376
    %v378 = vlaneseq
    %v379 = vshrl.u32 %v378, 7
    %v380 = vsub.s32 0, %v379
    %v381 = vrot.slane %v334, %v380
    %v382 = vlaneseq
    %v383 = vshrl.u32 %v382, 7
    %v384 = vsub.s32 0, %v383
    %v385 = vrot.slane %v336, %v384
    %v386 = vlaneseq
    %v387 = vshrl.u32 %v386, 7
    %v388 = vsub.s32 0, %v387
    %v389 = vrot.slane %v319, %v388
    %v390 = vlaneseq
    %v391 = vshrl.u32 %v390, 7
    %v392 = vsub.s32 0, %v391
    %v393 = vrot.slane %v333, %v392
    %v394 = vlaneseq
    %v395 = vshrl.u32 %v394, 7
    %v396 = vsub.s32 0, %v395
    %v397 = vrot.slane %v335, %v396
    %v398 = vlaneseq
    %v399 = vshrl.u32 %v398, 7
    %v400 = vsub.s32 0, %v399
    %v401 = vrot.slane %v337, %v400
    %420 = vrot.lane.b32.xlu0 %v228, 96
    %v421 = vpop.permute.xlu0 %420
    %422 = vrot.lane.b32.xlu0 %v233, 96
    %v423 = vpop.permute.xlu0 %422
    %v426 = vmul.f32 %v341, %v421
    %v427 = vmul.f32 %v345, %v421
    %v428 = vmul.f32 %v349, %v421
    %v429 = vmul.f32 %v353, %v421
    %v430 = vmul.f32 %v357, %v421
    %v431 = vmul.f32 %v361, %v421
    %v432 = vmul.f32 %v365, %v421
    %v433 = vmul.f32 %v369, %v421
    %v434 = vmul.f32 %v373, %v423
    %v435 = vmul.f32 %v377, %v423
    %v436 = vmul.f32 %v381, %v423
    %v437 = vmul.f32 %v385, %v423
    %v438 = vmul.f32 %v389, %v423
    %v439 = vmul.f32 %v393, %v423
    %v440 = vmul.f32 %v397, %v423
    %v441 = vmul.f32 %v401, %v423
    %v443 = vsel %vm154, %v426, 0
    %v446 = vsel %vm154, %v427, 0
    %v449 = vsel %vm154, %v428, 0
    %v452 = vsel %vm154, %v429, 0
    %v455 = vsel %vm154, %v430, 0
    %v458 = vsel %vm154, %v431, 0
    %v461 = vsel %vm154, %v432, 0
    %v464 = vsel %vm154, %v433, 0
    %v467 = vsel %vm154, %v434, 0
    %v470 = vsel %vm154, %v435, 0
    %v473 = vsel %vm154, %v436, 0
    %v476 = vsel %vm154, %v437, 0
    %v479 = vsel %vm154, %v438, 0
    %v482 = vsel %vm154, %v439, 0
    %v485 = vsel %vm154, %v440, 0
    %v488 = vsel %vm154, %v441, 0
    %490 = vmatprep.subr.mxu0 0.0
    %491 = vmatpush1.msra.mxu0 %v132
    %492 = vmatprep.subr.mxu0 0.0
    %493 = vmatpush1.msra.mxu0 %v133
    %494 = vmatprep.subr.mxu0 0.0
    %495 = vmatpush1.msra.mxu0 %v134
    %496 = vmatprep.subr.mxu0 0.0
    %497 = vmatpush1.msra.mxu0 %v135
    %498 = vmatprep.subr.mxu0 0.0
    %499 = vmatpush1.msra.mxu0 0.0
    %500 = vmatprep.subr.mxu0 0.0
    %501 = vmatpush1.msra.mxu0 0.0
    %502 = vmatprep.subr.mxu0 0.0
    %503 = vmatpush1.msra.mxu0 0.0
    %504 = vmatprep.subr.mxu0 0.0
    %505 = vmatpush1.msra.mxu0 0.0
    %506 = vmatprep.subr.mxu0 0.0
    %507 = vmatpush1.msra.mxu0 0.0
    %508 = vmatprep.subr.mxu0 0.0
    %509 = vmatpush1.msra.mxu0 0.0
    %510 = vmatprep.subr.mxu0 0.0
    %511 = vmatpush1.msra.mxu0 0.0
    %512 = vmatprep.subr.mxu0 0.0
    %513 = vmatpush1.msra.mxu0 0.0
    %514 = vmatprep.subr.mxu0 0.0
    %515 = vmatpush1.msra.mxu0 0.0
    %516 = vmatprep.subr.mxu0 0.0
    %517 = vmatpush1.msra.mxu0 0.0
    %518 = vmatprep.subr.mxu0 0.0
    %519 = vmatpush1.msra.mxu0 0.0
    %520 = vmatprep.subr.mxu0 0.0
    %521 = vmatpush1.msra.mxu0 0.0
    %522 = vmatprep.subr.mxu0 0.0
    %523 = vmatpush1.msra.mxu0 0.0
    %524 = vmatprep.subr.mxu0 0.0
    %525 = vmatpush1.msra.mxu0 0.0
    %526 = vmatprep.subr.mxu0 0.0
    %527 = vmatpush1.msra.mxu0 0.0
    %528 = vmatprep.subr.mxu0 0.0
    %529 = vmatpush1.msra.mxu0 0.0
    %530 = vmatprep.subr.mxu0 0.0
    %531 = vmatpush1.msra.mxu0 0.0
    %532 = vmatprep.subr.mxu0 0.0
    %533 = vmatpush1.msra.mxu0 0.0
    %534 = vmatprep.subr.mxu0 0.0
    %535 = vmatpush1.msra.mxu0 0.0
    %536 = vmatprep.subr.mxu0 0.0
    %537 = vmatpush1.msra.mxu0 0.0
    %538 = vmatprep.subr.mxu0 0.0
    %539 = vmatpush1.msra.mxu0 0.0
    %540 = vmatprep.subr.mxu0 0.0
    %541 = vmatpush1.msra.mxu0 0.0
    %542 = vmatprep.subr.mxu0 0.0
    %543 = vmatpush1.msra.mxu0 0.0
    %544 = vmatprep.subr.mxu0 0.0
    %545 = vmatpush1.msra.mxu0 0.0
    %546 = vmatprep.subr.mxu0 0.0
    %547 = vmatpush1.msra.mxu0 0.0
    %548 = vmatprep.subr.mxu0 0.0
    %549 = vmatpush1.msra.mxu0 0.0
    %550 = vmatprep.subr.mxu0 0.0
    %551 = vmatpush1.msra.mxu0 0.0
    %552 = vmatprep.subr.mxu0 0.0
    %553 = vmatpush1.msra.mxu0 0.0
    %554 = vmatprep.mubr.f32.mxu0 0.0
    %555 = vmatmul.mubr.f32.gmra.mrb[0].mxu0 %v443
    %v556 = vpop.f32.mrb[0].mxu0
    %v557 = vadd.f32 0.0, %v556
    %v558 = vpop.f32.mrb[0].mxu0
    %559 = vmatprep.mubr.f32.mxu0 0.0
    %560 = vmatmul.mubr.f32.gmra.mrb[0].mxu0 %v446
    %v561 = vpop.f32.mrb[0].mxu0
    %v562 = vadd.f32 0.0, %v561
    %v563 = vpop.f32.mrb[0].mxu0
    %564 = vmatprep.mubr.f32.mxu0 0.0
    %565 = vmatmul.mubr.f32.gmra.mrb[0].mxu0 %v449
    %v566 = vpop.f32.mrb[0].mxu0
    %v567 = vadd.f32 0.0, %v566
    %v568 = vpop.f32.mrb[0].mxu0
    %569 = vmatprep.mubr.f32.mxu0 0.0
    %570 = vmatmul.mubr.f32.gmra.mrb[0].mxu0 %v452
    %v571 = vpop.f32.mrb[0].mxu0
    %v572 = vadd.f32 0.0, %v571
    %v573 = vpop.f32.mrb[0].mxu0
    %574 = vmatprep.mubr.f32.mxu0 0.0
    %575 = vmatmul.mubr.f32.gmra.mrb[0].mxu0 %v455
    %v576 = vpop.f32.mrb[0].mxu0
    %v577 = vadd.f32 0.0, %v576
    %v578 = vpop.f32.mrb[0].mxu0
    %579 = vmatprep.mubr.f32.mxu0 0.0
    %580 = vmatmul.mubr.f32.gmra.mrb[0].mxu0 %v458
    %v581 = vpop.f32.mrb[0].mxu0
    %v582 = vadd.f32 0.0, %v581
    %v583 = vpop.f32.mrb[0].mxu0
    %584 = vmatprep.mubr.f32.mxu0 0.0
    %585 = vmatmul.mubr.f32.gmra.mrb[0].mxu0 %v461
    %v586 = vpop.f32.mrb[0].mxu0
    %v587 = vadd.f32 0.0, %v586
    %v588 = vpop.f32.mrb[0].mxu0
    %589 = vmatprep.mubr.f32.mxu0 0.0
    %590 = vmatmul.mubr.f32.gmra.mrb[0].mxu0 %v464
    %v591 = vpop.f32.mrb[0].mxu0
    %v592 = vadd.f32 0.0, %v591
    %v593 = vpop.f32.mrb[0].mxu0
    %594 = vmatprep.mubr.f32.mxu0 0.0
    %595 = vmatmul.mubr.f32.gmra.mrb[0].mxu0 %v467
    %v596 = vpop.f32.mrb[0].mxu0
    %v597 = vadd.f32 0.0, %v596
    %v598 = vpop.f32.mrb[0].mxu0
    %599 = vmatprep.mubr.f32.mxu0 0.0
    %600 = vmatmul.mubr.f32.gmra.mrb[0].mxu0 %v470
    %v601 = vpop.f32.mrb[0].mxu0
    %v602 = vadd.f32 0.0, %v601
    %v603 = vpop.f32.mrb[0].mxu0
    %604 = vmatprep.mubr.f32.mxu0 0.0
    %605 = vmatmul.mubr.f32.gmra.mrb[0].mxu0 %v473
    %v606 = vpop.f32.mrb[0].mxu0
    %v607 = vadd.f32 0.0, %v606
    %v608 = vpop.f32.mrb[0].mxu0
    %609 = vmatprep.mubr.f32.mxu0 0.0
    %610 = vmatmul.mubr.f32.gmra.mrb[0].mxu0 %v476
    %v611 = vpop.f32.mrb[0].mxu0
    %v612 = vadd.f32 0.0, %v611
    %v613 = vpop.f32.mrb[0].mxu0
    %614 = vmatprep.mubr.f32.mxu0 0.0
    %615 = vmatmul.mubr.f32.gmra.mrb[0].mxu0 %v479
    %v616 = vpop.f32.mrb[0].mxu0
    %v617 = vadd.f32 0.0, %v616
    %v618 = vpop.f32.mrb[0].mxu0
    %619 = vmatprep.mubr.f32.mxu0 0.0
    %620 = vmatmul.mubr.f32.gmra.mrb[0].mxu0 %v482
    %v621 = vpop.f32.mrb[0].mxu0
    %v622 = vadd.f32 0.0, %v621
    %v623 = vpop.f32.mrb[0].mxu0
    %624 = vmatprep.mubr.f32.mxu0 0.0
    %625 = vmatmul.mubr.f32.gmra.mrb[0].mxu0 %v485
    %v626 = vpop.f32.mrb[0].mxu0
    %v627 = vadd.f32 0.0, %v626
    %v628 = vpop.f32.mrb[0].mxu0
    %629 = vmatprep.mubr.f32.mxu0 0.0
    %630 = vmatmul.mubr.f32.gmra.mrb[0].mxu0 %v488
    %v631 = vpop.f32.mrb[0].mxu0
    %v632 = vadd.f32 0.0, %v631
    %v633 = vpop.f32.mrb[0].mxu0
    %634 = vdwg.mxu0
    %vm635 = vcmask 64512
    %v636 = vsel %vm635, %v557, -inf
    %v637 = vrot.slane %v636, 4
    %v638 = vmax.f32 %v636, %v637
    %v639 = vrot.slane %v638, 2
    %v640 = vmax.f32 %v638, %v639
    %v641 = vrot.slane %v640, 1
    %v642 = vmax.f32 %v640, %v641
    %v643 = vsel %vm635, %v562, -inf
    %v644 = vrot.slane %v643, 4
    %v645 = vmax.f32 %v643, %v644
    %v646 = vrot.slane %v645, 2
    %v647 = vmax.f32 %v645, %v646
    %v648 = vrot.slane %v647, 1
    %v649 = vmax.f32 %v647, %v648
    %v650 = vsel %vm635, %v567, -inf
    %v651 = vrot.slane %v650, 4
    %v652 = vmax.f32 %v650, %v651
    %v653 = vrot.slane %v652, 2
    %v654 = vmax.f32 %v652, %v653
    %v655 = vrot.slane %v654, 1
    %v656 = vmax.f32 %v654, %v655
    %v657 = vsel %vm635, %v572, -inf
    %v658 = vrot.slane %v657, 4
    %v659 = vmax.f32 %v657, %v658
    %v660 = vrot.slane %v659, 2
    %v661 = vmax.f32 %v659, %v660
    %v662 = vrot.slane %v661, 1
    %v663 = vmax.f32 %v661, %v662
    %v664 = vsel %vm635, %v577, -inf
    %v665 = vrot.slane %v664, 4
    %v666 = vmax.f32 %v664, %v665
    %v667 = vrot.slane %v666, 2
    %v668 = vmax.f32 %v666, %v667
    %v669 = vrot.slane %v668, 1
    %v670 = vmax.f32 %v668, %v669
    %v671 = vsel %vm635, %v582, -inf
    %v672 = vrot.slane %v671, 4
    %v673 = vmax.f32 %v671, %v672
    %v674 = vrot.slane %v673, 2
    %v675 = vmax.f32 %v673, %v674
    %v676 = vrot.slane %v675, 1
    %v677 = vmax.f32 %v675, %v676
    %v678 = vsel %vm635, %v587, -inf
    %v679 = vrot.slane %v678, 4
    %v680 = vmax.f32 %v678, %v679
    %v681 = vrot.slane %v680, 2
    %v682 = vmax.f32 %v680, %v681
    %v683 = vrot.slane %v682, 1
    %v684 = vmax.f32 %v682, %v683
    %v685 = vsel %vm635, %v592, -inf
    %v686 = vrot.slane %v685, 4
    %v687 = vmax.f32 %v685, %v686
    %v688 = vrot.slane %v687, 2
    %v689 = vmax.f32 %v687, %v688
    %v690 = vrot.slane %v689, 1
    %v691 = vmax.f32 %v689, %v690
    %v692 = vsel %vm635, %v597, -inf
    %v693 = vrot.slane %v692, 4
    %v694 = vmax.f32 %v692, %v693
    %v695 = vrot.slane %v694, 2
    %v696 = vmax.f32 %v694, %v695
    %v697 = vrot.slane %v696, 1
    %v698 = vmax.f32 %v696, %v697
    %v699 = vsel %vm635, %v602, -inf
    %v700 = vrot.slane %v699, 4
    %v701 = vmax.f32 %v699, %v700
    %v702 = vrot.slane %v701, 2
    %v703 = vmax.f32 %v701, %v702
    %v704 = vrot.slane %v703, 1
    %v705 = vmax.f32 %v703, %v704
    %v706 = vsel %vm635, %v607, -inf
    %v707 = vrot.slane %v706, 4
    %v708 = vmax.f32 %v706, %v707
    %v709 = vrot.slane %v708, 2
    %v710 = vmax.f32 %v708, %v709
    %v711 = vrot.slane %v710, 1
    %v712 = vmax.f32 %v710, %v711
    %v713 = vsel %vm635, %v612, -inf
    %v714 = vrot.slane %v713, 4
    %v715 = vmax.f32 %v713, %v714
    %v716 = vrot.slane %v715, 2
    %v717 = vmax.f32 %v715, %v716
    %v718 = vrot.slane %v717, 1
    %v719 = vmax.f32 %v717, %v718
    %v720 = vsel %vm635, %v617, -inf
    %v721 = vrot.slane %v720, 4
    %v722 = vmax.f32 %v720, %v721
    %v723 = vrot.slane %v722, 2
    %v724 = vmax.f32 %v722, %v723
    %v725 = vrot.slane %v724, 1
    %v726 = vmax.f32 %v724, %v725
    %v727 = vsel %vm635, %v622, -inf
    %v728 = vrot.slane %v727, 4
    %v729 = vmax.f32 %v727, %v728
    %v730 = vrot.slane %v729, 2
    %v731 = vmax.f32 %v729, %v730
    %v732 = vrot.slane %v731, 1
    %v733 = vmax.f32 %v731, %v732
    %v734 = vsel %vm635, %v627, -inf
    %v735 = vrot.slane %v734, 4
    %v736 = vmax.f32 %v734, %v735
    %v737 = vrot.slane %v736, 2
    %v738 = vmax.f32 %v736, %v737
    %v739 = vrot.slane %v738, 1
    %v740 = vmax.f32 %v738, %v739
    %v741 = vsel %vm635, %v632, -inf
    %v742 = vrot.slane %v741, 4
    %v743 = vmax.f32 %v741, %v742
    %v744 = vrot.slane %v743, 2
    %v745 = vmax.f32 %v743, %v744
    %v746 = vrot.slane %v745, 1
    %v747 = vmax.f32 %v745, %v746
    %v748 = vsub.f32 %v557, %v642
    %v749 = vsub.f32 %v562, %v649
    %v750 = vsub.f32 %v567, %v656
    %v751 = vsub.f32 %v572, %v663
    %v752 = vsub.f32 %v577, %v670
    %v753 = vsub.f32 %v582, %v677
    %v754 = vsub.f32 %v587, %v684
    %v755 = vsub.f32 %v592, %v691
    %v756 = vsub.f32 %v597, %v698
    %v757 = vsub.f32 %v602, %v705
    %v758 = vsub.f32 %v607, %v712
    %v759 = vsub.f32 %v612, %v719
    %v760 = vsub.f32 %v617, %v726
    %v761 = vsub.f32 %v622, %v733
    %v762 = vsub.f32 %v627, %v740
    %v763 = vsub.f32 %v632, %v747
    %v764 = vmul.f32 %v748, 1.442695
    %v765 = vpow.pop %v764
    %v766 = vmul.f32 %v749, 1.442695
    %v767 = vpow.pop %v766
    %v768 = vmul.f32 %v750, 1.442695
    %v769 = vpow.pop %v768
    %v770 = vmul.f32 %v751, 1.442695
    %v771 = vpow.pop %v770
    %v772 = vmul.f32 %v752, 1.442695
    %v773 = vpow.pop %v772
    %v774 = vmul.f32 %v753, 1.442695
    %v775 = vpow.pop %v774
    %v776 = vmul.f32 %v754, 1.442695
    %v777 = vpow.pop %v776
    %v778 = vmul.f32 %v755, 1.442695
    %v779 = vpow.pop %v778
    %v780 = vmul.f32 %v756, 1.442695
    %v781 = vpow.pop %v780
    %v782 = vmul.f32 %v757, 1.442695
    %v783 = vpow.pop %v782
    %v784 = vmul.f32 %v758, 1.442695
    %v785 = vpow.pop %v784
    %v786 = vmul.f32 %v759, 1.442695
    %v787 = vpow.pop %v786
    %v788 = vmul.f32 %v760, 1.442695
    %v789 = vpow.pop %v788
    %v790 = vmul.f32 %v761, 1.442695
    %v791 = vpow.pop %v790
    %v792 = vmul.f32 %v762, 1.442695
    %v793 = vpow.pop %v792
    %v794 = vmul.f32 %v763, 1.442695
    %v795 = vpow.pop %v794
    %v796 = vsel %vm635, %v765, 0.0
    %v797 = vrot.slane %v796, 4
    %v798 = vadd.f32 %v796, %v797
    %v799 = vrot.slane %v798, 2
    %v800 = vadd.f32 %v798, %v799
    %v801 = vrot.slane %v800, 1
    %v802 = vadd.f32 %v800, %v801
    %v803 = vsel %vm635, %v767, 0.0
    %v804 = vrot.slane %v803, 4
    %v805 = vadd.f32 %v803, %v804
    %v806 = vrot.slane %v805, 2
    %v807 = vadd.f32 %v805, %v806
    %v808 = vrot.slane %v807, 1
    %v809 = vadd.f32 %v807, %v808
    %v810 = vsel %vm635, %v769, 0.0
    %v811 = vrot.slane %v810, 4
    %v812 = vadd.f32 %v810, %v811
    %v813 = vrot.slane %v812, 2
    %v814 = vadd.f32 %v812, %v813
    %v815 = vrot.slane %v814, 1
    %v816 = vadd.f32 %v814, %v815
    %v817 = vsel %vm635, %v771, 0.0
    %v818 = vrot.slane %v817, 4
    %v819 = vadd.f32 %v817, %v818
    %v820 = vrot.slane %v819, 2
    %v821 = vadd.f32 %v819, %v820
    %v822 = vrot.slane %v821, 1
    %v823 = vadd.f32 %v821, %v822
    %v824 = vsel %vm635, %v773, 0.0
    %v825 = vrot.slane %v824, 4
    %v826 = vadd.f32 %v824, %v825
    %v827 = vrot.slane %v826, 2
    %v828 = vadd.f32 %v826, %v827
    %v829 = vrot.slane %v828, 1
    %v830 = vadd.f32 %v828, %v829
    %v831 = vsel %vm635, %v775, 0.0
    %v832 = vrot.slane %v831, 4
    %v833 = vadd.f32 %v831, %v832
    %v834 = vrot.slane %v833, 2
    %v835 = vadd.f32 %v833, %v834
    %v836 = vrot.slane %v835, 1
    %v837 = vadd.f32 %v835, %v836
    %v838 = vsel %vm635, %v777, 0.0
    %v839 = vrot.slane %v838, 4
    %v840 = vadd.f32 %v838, %v839
    %v841 = vrot.slane %v840, 2
    %v842 = vadd.f32 %v840, %v841
    %v843 = vrot.slane %v842, 1
    %v844 = vadd.f32 %v842, %v843
    %v845 = vsel %vm635, %v779, 0.0
    %v846 = vrot.slane %v845, 4
    %v847 = vadd.f32 %v845, %v846
    %v848 = vrot.slane %v847, 2
    %v849 = vadd.f32 %v847, %v848
    %v850 = vrot.slane %v849, 1
    %v851 = vadd.f32 %v849, %v850
    %v852 = vsel %vm635, %v781, 0.0
    %v853 = vrot.slane %v852, 4
    %v854 = vadd.f32 %v852, %v853
    %v855 = vrot.slane %v854, 2
    %v856 = vadd.f32 %v854, %v855
    %v857 = vrot.slane %v856, 1
    %v858 = vadd.f32 %v856, %v857
    %v859 = vsel %vm635, %v783, 0.0
    %v860 = vrot.slane %v859, 4
    %v861 = vadd.f32 %v859, %v860
    %v862 = vrot.slane %v861, 2
    %v863 = vadd.f32 %v861, %v862
    %v864 = vrot.slane %v863, 1
    %v865 = vadd.f32 %v863, %v864
    %v866 = vsel %vm635, %v785, 0.0
    %v867 = vrot.slane %v866, 4
    %v868 = vadd.f32 %v866, %v867
    %v869 = vrot.slane %v868, 2
    %v870 = vadd.f32 %v868, %v869
    %v871 = vrot.slane %v870, 1
    %v872 = vadd.f32 %v870, %v871
    %v873 = vsel %vm635, %v787, 0.0
    %v874 = vrot.slane %v873, 4
    %v875 = vadd.f32 %v873, %v874
    %v876 = vrot.slane %v875, 2
    %v877 = vadd.f32 %v875, %v876
    %v878 = vrot.slane %v877, 1
    %v879 = vadd.f32 %v877, %v878
    %v880 = vsel %vm635, %v789, 0.0
    %v881 = vrot.slane %v880, 4
    %v882 = vadd.f32 %v880, %v881
    %v883 = vrot.slane %v882, 2
    %v884 = vadd.f32 %v882, %v883
    %v885 = vrot.slane %v884, 1
    %v886 = vadd.f32 %v884, %v885
    %v887 = vsel %vm635, %v791, 0.0
    %v888 = vrot.slane %v887, 4
    %v889 = vadd.f32 %v887, %v888
    %v890 = vrot.slane %v889, 2
    %v891 = vadd.f32 %v889, %v890
    %v892 = vrot.slane %v891, 1
    %v893 = vadd.f32 %v891, %v892
    %v894 = vsel %vm635, %v793, 0.0
    %v895 = vrot.slane %v894, 4
    %v896 = vadd.f32 %v894, %v895
    %v897 = vrot.slane %v896, 2
    %v898 = vadd.f32 %v896, %v897
    %v899 = vrot.slane %v898, 1
    %v900 = vadd.f32 %v898, %v899
    %v901 = vsel %vm635, %v795, 0.0
    %v902 = vrot.slane %v901, 4
    %v903 = vadd.f32 %v901, %v902
    %v904 = vrot.slane %v903, 2
    %v905 = vadd.f32 %v903, %v904
    %v906 = vrot.slane %v905, 1
    %v907 = vadd.f32 %v905, %v906
    %v908 = vrcp.pop %v802
    %v909 = vrcp.pop %v809
    %v910 = vrcp.pop %v816
    %v911 = vrcp.pop %v823
    %v912 = vrcp.pop %v830
    %v913 = vrcp.pop %v837
    %v914 = vrcp.pop %v844
    %v915 = vrcp.pop %v851
    %v916 = vrcp.pop %v858
    %v917 = vrcp.pop %v865
    %v918 = vrcp.pop %v872
    %v919 = vrcp.pop %v879
    %v920 = vrcp.pop %v886
    %v921 = vrcp.pop %v893
    %v922 = vrcp.pop %v900
    %v923 = vrcp.pop %v907
    %v924 = vmul.f32 %v765, %v908
    %v925 = vmul.f32 %v767, %v909
    %v926 = vmul.f32 %v769, %v910
    %v927 = vmul.f32 %v771, %v911
    %v928 = vmul.f32 %v773, %v912
    %v929 = vmul.f32 %v775, %v913
    %v930 = vmul.f32 %v777, %v914
    %v931 = vmul.f32 %v779, %v915
    %v932 = vmul.f32 %v781, %v916
    %v933 = vmul.f32 %v783, %v917
    %v934 = vmul.f32 %v785, %v918
    %v935 = vmul.f32 %v787, %v919
    %v936 = vmul.f32 %v789, %v920
    %v937 = vmul.f32 %v791, %v921
    %v938 = vmul.f32 %v793, %v922
    %v939 = vmul.f32 %v795, %v923
    %v941 = vsel %vm635, %v924, 0
    %v944 = vsel %vm635, %v925, 0
    %v947 = vsel %vm635, %v926, 0
    %v950 = vsel %vm635, %v927, 0
    %v953 = vsel %vm635, %v928, 0
    %v956 = vsel %vm635, %v929, 0
    %v959 = vsel %vm635, %v930, 0
    %v962 = vsel %vm635, %v931, 0
    %v965 = vsel %vm635, %v932, 0
    %v968 = vsel %vm635, %v933, 0
    %v971 = vsel %vm635, %v934, 0
    %v974 = vsel %vm635, %v935, 0
    %v977 = vsel %vm635, %v936, 0
    %v980 = vsel %vm635, %v937, 0
    %v983 = vsel %vm635, %v938, 0
    %v986 = vsel %vm635, %v939, 0
    %988 = vmatprep.subr.mxu0 0.0
    %989 = vmatpush1.msra.mxu0 %v142
    %990 = vmatprep.subr.mxu0 0.0
    %991 = vmatpush1.msra.mxu0 0.0
    %992 = vmatprep.subr.mxu0 0.0
    %993 = vmatpush1.msra.mxu0 0.0
    %994 = vmatprep.subr.mxu0 0.0
    %995 = vmatpush1.msra.mxu0 0.0
    %996 = vmatprep.subr.mxu0 0.0
    %997 = vmatpush1.msra.mxu0 0.0
    %998 = vmatprep.subr.mxu0 0.0
    %999 = vmatpush1.msra.mxu0 0.0
    %1000 = vmatprep.subr.mxu0 0.0
    %1001 = vmatpush1.msra.mxu0 0.0
    %1002 = vmatprep.subr.mxu0 0.0
    %1003 = vmatpush1.msra.mxu0 0.0
    %1004 = vmatprep.subr.mxu0 0.0
    %1005 = vmatpush1.msra.mxu0 0.0
    %1006 = vmatprep.subr.mxu0 0.0
    %1007 = vmatpush1.msra.mxu0 0.0
    %1008 = vmatprep.subr.mxu0 0.0
    %1009 = vmatpush1.msra.mxu0 0.0
    %1010 = vmatprep.subr.mxu0 0.0
    %1011 = vmatpush1.msra.mxu0 0.0
    %1012 = vmatprep.subr.mxu0 0.0
    %1013 = vmatpush1.msra.mxu0 0.0
    %1014 = vmatprep.subr.mxu0 0.0
    %1015 = vmatpush1.msra.mxu0 0.0
    %1016 = vmatprep.subr.mxu0 0.0
    %1017 = vmatpush1.msra.mxu0 0.0
    %1018 = vmatprep.subr.mxu0 0.0
    %1019 = vmatpush1.msra.mxu0 0.0
    %1020 = vmatprep.subr.mxu0 0.0
    %1021 = vmatpush1.msra.mxu0 0.0
    %1022 = vmatprep.subr.mxu0 0.0
    %1023 = vmatpush1.msra.mxu0 0.0
    %1024 = vmatprep.subr.mxu0 0.0
    %1025 = vmatpush1.msra.mxu0 0.0
    %1026 = vmatprep.subr.mxu0 0.0
    %1027 = vmatpush1.msra.mxu0 0.0
    %1028 = vmatprep.subr.mxu0 0.0
    %1029 = vmatpush1.msra.mxu0 0.0
    %1030 = vmatprep.subr.mxu0 0.0
    %1031 = vmatpush1.msra.mxu0 0.0
    %1032 = vmatprep.subr.mxu0 0.0
    %1033 = vmatpush1.msra.mxu0 0.0
    %1034 = vmatprep.subr.mxu0 0.0
    %1035 = vmatpush1.msra.mxu0 0.0
    %1036 = vmatprep.subr.mxu0 0.0
    %1037 = vmatpush1.msra.mxu0 0.0
    %1038 = vmatprep.subr.mxu0 0.0
    %1039 = vmatpush1.msra.mxu0 0.0
    %1040 = vmatprep.subr.mxu0 0.0
    %1041 = vmatpush1.msra.mxu0 0.0
    %1042 = vmatprep.subr.mxu0 0.0
    %1043 = vmatpush1.msra.mxu0 0.0
    %1044 = vmatprep.subr.mxu0 0.0
    %1045 = vmatpush1.msra.mxu0 0.0
    %1046 = vmatprep.subr.mxu0 0.0
    %1047 = vmatpush1.msra.mxu0 0.0
    %1048 = vmatprep.subr.mxu0 0.0
    %1049 = vmatpush1.msra.mxu0 0.0
    %1050 = vmatprep.subr.mxu0 0.0
    %1051 = vmatpush1.msra.mxu0 0.0
    %1052 = vmatprep.mubr.f32.mxu0 0.0
    %1053 = vmatmul.mubr.f32.gmra.mrb[0].mxu0 %v941
    %v1054 = vpop.f32.mrb[0].mxu0
    %v1055 = vadd.f32 0.0, %v1054
    %v1056 = vpop.f32.mrb[0].mxu0
    %1057 = vmatprep.mubr.f32.mxu0 0.0
    %1058 = vmatmul.mubr.f32.gmra.mrb[0].mxu0 %v944
    %v1059 = vpop.f32.mrb[0].mxu0
    %v1060 = vadd.f32 0.0, %v1059
    %v1061 = vpop.f32.mrb[0].mxu0
    %1062 = vmatprep.mubr.f32.mxu0 0.0
    %1063 = vmatmul.mubr.f32.gmra.mrb[0].mxu0 %v947
    %v1064 = vpop.f32.mrb[0].mxu0
    %v1065 = vadd.f32 0.0, %v1064
    %v1066 = vpop.f32.mrb[0].mxu0
    %1067 = vmatprep.mubr.f32.mxu0 0.0
    %1068 = vmatmul.mubr.f32.gmra.mrb[0].mxu0 %v950
    %v1069 = vpop.f32.mrb[0].mxu0
    %v1070 = vadd.f32 0.0, %v1069
    %v1071 = vpop.f32.mrb[0].mxu0
    %1072 = vmatprep.mubr.f32.mxu0 0.0
    %1073 = vmatmul.mubr.f32.gmra.mrb[0].mxu0 %v953
    %v1074 = vpop.f32.mrb[0].mxu0
    %v1075 = vadd.f32 0.0, %v1074
    %v1076 = vpop.f32.mrb[0].mxu0
    %1077 = vmatprep.mubr.f32.mxu0 0.0
    %1078 = vmatmul.mubr.f32.gmra.mrb[0].mxu0 %v956
    %v1079 = vpop.f32.mrb[0].mxu0
    %v1080 = vadd.f32 0.0, %v1079
    %v1081 = vpop.f32.mrb[0].mxu0
    %1082 = vmatprep.mubr.f32.mxu0 0.0
    %1083 = vmatmul.mubr.f32.gmra.mrb[0].mxu0 %v959
    %v1084 = vpop.f32.mrb[0].mxu0
    %v1085 = vadd.f32 0.0, %v1084
    %v1086 = vpop.f32.mrb[0].mxu0
    %1087 = vmatprep.mubr.f32.mxu0 0.0
    %1088 = vmatmul.mubr.f32.gmra.mrb[0].mxu0 %v962
    %v1089 = vpop.f32.mrb[0].mxu0
    %v1090 = vadd.f32 0.0, %v1089
    %v1091 = vpop.f32.mrb[0].mxu0
    %1092 = vmatprep.mubr.f32.mxu0 0.0
    %1093 = vmatmul.mubr.f32.gmra.mrb[0].mxu0 %v965
    %v1094 = vpop.f32.mrb[0].mxu0
    %v1095 = vadd.f32 0.0, %v1094
    %v1096 = vpop.f32.mrb[0].mxu0
    %1097 = vmatprep.mubr.f32.mxu0 0.0
    %1098 = vmatmul.mubr.f32.gmra.mrb[0].mxu0 %v968
    %v1099 = vpop.f32.mrb[0].mxu0
    %v1100 = vadd.f32 0.0, %v1099
    %v1101 = vpop.f32.mrb[0].mxu0
    %1102 = vmatprep.mubr.f32.mxu0 0.0
    %1103 = vmatmul.mubr.f32.gmra.mrb[0].mxu0 %v971
    %v1104 = vpop.f32.mrb[0].mxu0
    %v1105 = vadd.f32 0.0, %v1104
    %v1106 = vpop.f32.mrb[0].mxu0
    %1107 = vmatprep.mubr.f32.mxu0 0.0
    %1108 = vmatmul.mubr.f32.gmra.mrb[0].mxu0 %v974
    %v1109 = vpop.f32.mrb[0].mxu0
    %v1110 = vadd.f32 0.0, %v1109
    %v1111 = vpop.f32.mrb[0].mxu0
    %1112 = vmatprep.mubr.f32.mxu0 0.0
    %1113 = vmatmul.mubr.f32.gmra.mrb[0].mxu0 %v977
    %v1114 = vpop.f32.mrb[0].mxu0
    %v1115 = vadd.f32 0.0, %v1114
    %v1116 = vpop.f32.mrb[0].mxu0
    %1117 = vmatprep.mubr.f32.mxu0 0.0
    %1118 = vmatmul.mubr.f32.gmra.mrb[0].mxu0 %v980
    %v1119 = vpop.f32.mrb[0].mxu0
    %v1120 = vadd.f32 0.0, %v1119
    %v1121 = vpop.f32.mrb[0].mxu0
    %1122 = vmatprep.mubr.f32.mxu0 0.0
    %1123 = vmatmul.mubr.f32.gmra.mrb[0].mxu0 %v983
    %v1124 = vpop.f32.mrb[0].mxu0
    %v1125 = vadd.f32 0.0, %v1124
    %v1126 = vpop.f32.mrb[0].mxu0
    %1127 = vmatprep.mubr.f32.mxu0 0.0
    %1128 = vmatmul.mubr.f32.gmra.mrb[0].mxu0 %v986
    %v1129 = vpop.f32.mrb[0].mxu0
    %v1130 = vadd.f32 0.0, %v1129
    %v1131 = vpop.f32.mrb[0].mxu0
    %1132 = vdwg.mxu0
    %1133 = vrot.lane.b32.xlu0 %v228, 64
    %v1134 = vpop.permute.xlu0 %1133
    %1135 = vrot.lane.b32.xlu0 %v233, 64
    %v1136 = vpop.permute.xlu0 %1135
    %v1139 = vmul.f32 %v1055, %v1134
    %v1140 = vmul.f32 %v1060, %v1134
    %v1141 = vmul.f32 %v1065, %v1134
    %v1142 = vmul.f32 %v1070, %v1134
    %v1143 = vmul.f32 %v1075, %v1134
    %v1144 = vmul.f32 %v1080, %v1134
    %v1145 = vmul.f32 %v1085, %v1134
    %v1146 = vmul.f32 %v1090, %v1134
    %v1147 = vmul.f32 %v1095, %v1136
    %v1148 = vmul.f32 %v1100, %v1136
    %v1149 = vmul.f32 %v1105, %v1136
    %v1150 = vmul.f32 %v1110, %v1136
    %v1151 = vmul.f32 %v1115, %v1136
    %v1152 = vmul.f32 %v1120, %v1136
    %v1153 = vmul.f32 %v1125, %v1136
    %v1154 = vmul.f32 %v1130, %v1136
    %v1155 = vsel %vm154, %v1139, 0.0
    %v1156 = vrot.slane %v1155, 4
    %v1157 = vadd.f32 %v1155, %v1156
    %v1158 = vrot.slane %v1157, 2
    %v1159 = vadd.f32 %v1157, %v1158
    %v1160 = vrot.slane %v1159, 1
    %v1161 = vadd.f32 %v1159, %v1160
    %v1162 = vsel %vm154, %v1140, 0.0
    %v1163 = vrot.slane %v1162, 4
    %v1164 = vadd.f32 %v1162, %v1163
    %v1165 = vrot.slane %v1164, 2
    %v1166 = vadd.f32 %v1164, %v1165
    %v1167 = vrot.slane %v1166, 1
    %v1168 = vadd.f32 %v1166, %v1167
    %v1169 = vsel %vm154, %v1141, 0.0
    %v1170 = vrot.slane %v1169, 4
    %v1171 = vadd.f32 %v1169, %v1170
    %v1172 = vrot.slane %v1171, 2
    %v1173 = vadd.f32 %v1171, %v1172
    %v1174 = vrot.slane %v1173, 1
    %v1175 = vadd.f32 %v1173, %v1174
    %v1176 = vsel %vm154, %v1142, 0.0
    %v1177 = vrot.slane %v1176, 4
    %v1178 = vadd.f32 %v1176, %v1177
    %v1179 = vrot.slane %v1178, 2
    %v1180 = vadd.f32 %v1178, %v1179
    %v1181 = vrot.slane %v1180, 1
    %v1182 = vadd.f32 %v1180, %v1181
    %v1183 = vsel %vm154, %v1143, 0.0
    %v1184 = vrot.slane %v1183, 4
    %v1185 = vadd.f32 %v1183, %v1184
    %v1186 = vrot.slane %v1185, 2
    %v1187 = vadd.f32 %v1185, %v1186
    %v1188 = vrot.slane %v1187, 1
    %v1189 = vadd.f32 %v1187, %v1188
    %v1190 = vsel %vm154, %v1144, 0.0
    %v1191 = vrot.slane %v1190, 4
    %v1192 = vadd.f32 %v1190, %v1191
    %v1193 = vrot.slane %v1192, 2
    %v1194 = vadd.f32 %v1192, %v1193
    %v1195 = vrot.slane %v1194, 1
    %v1196 = vadd.f32 %v1194, %v1195
    %v1197 = vsel %vm154, %v1145, 0.0
    %v1198 = vrot.slane %v1197, 4
    %v1199 = vadd.f32 %v1197, %v1198
    %v1200 = vrot.slane %v1199, 2
    %v1201 = vadd.f32 %v1199, %v1200
    %v1202 = vrot.slane %v1201, 1
    %v1203 = vadd.f32 %v1201, %v1202
    %v1204 = vsel %vm154, %v1146, 0.0
    %v1205 = vrot.slane %v1204, 4
    %v1206 = vadd.f32 %v1204, %v1205
    %v1207 = vrot.slane %v1206, 2
    %v1208 = vadd.f32 %v1206, %v1207
    %v1209 = vrot.slane %v1208, 1
    %v1210 = vadd.f32 %v1208, %v1209
    %v1211 = vsel %vm154, %v1147, 0.0
    %v1212 = vrot.slane %v1211, 4
    %v1213 = vadd.f32 %v1211, %v1212
    %v1214 = vrot.slane %v1213, 2
    %v1215 = vadd.f32 %v1213, %v1214
    %v1216 = vrot.slane %v1215, 1
    %v1217 = vadd.f32 %v1215, %v1216
    %v1218 = vsel %vm154, %v1148, 0.0
    %v1219 = vrot.slane %v1218, 4
    %v1220 = vadd.f32 %v1218, %v1219
    %v1221 = vrot.slane %v1220, 2
    %v1222 = vadd.f32 %v1220, %v1221
    %v1223 = vrot.slane %v1222, 1
    %v1224 = vadd.f32 %v1222, %v1223
    %v1225 = vsel %vm154, %v1149, 0.0
    %v1226 = vrot.slane %v1225, 4
    %v1227 = vadd.f32 %v1225, %v1226
    %v1228 = vrot.slane %v1227, 2
    %v1229 = vadd.f32 %v1227, %v1228
    %v1230 = vrot.slane %v1229, 1
    %v1231 = vadd.f32 %v1229, %v1230
    %v1232 = vsel %vm154, %v1150, 0.0
    %v1233 = vrot.slane %v1232, 4
    %v1234 = vadd.f32 %v1232, %v1233
    %v1235 = vrot.slane %v1234, 2
    %v1236 = vadd.f32 %v1234, %v1235
    %v1237 = vrot.slane %v1236, 1
    %v1238 = vadd.f32 %v1236, %v1237
    %v1239 = vsel %vm154, %v1151, 0.0
    %v1240 = vrot.slane %v1239, 4
    %v1241 = vadd.f32 %v1239, %v1240
    %v1242 = vrot.slane %v1241, 2
    %v1243 = vadd.f32 %v1241, %v1242
    %v1244 = vrot.slane %v1243, 1
    %v1245 = vadd.f32 %v1243, %v1244
    %v1246 = vsel %vm154, %v1152, 0.0
    %v1247 = vrot.slane %v1246, 4
    %v1248 = vadd.f32 %v1246, %v1247
    %v1249 = vrot.slane %v1248, 2
    %v1250 = vadd.f32 %v1248, %v1249
    %v1251 = vrot.slane %v1250, 1
    %v1252 = vadd.f32 %v1250, %v1251
    %v1253 = vsel %vm154, %v1153, 0.0
    %v1254 = vrot.slane %v1253, 4
    %v1255 = vadd.f32 %v1253, %v1254
    %v1256 = vrot.slane %v1255, 2
    %v1257 = vadd.f32 %v1255, %v1256
    %v1258 = vrot.slane %v1257, 1
    %v1259 = vadd.f32 %v1257, %v1258
    %v1260 = vsel %vm154, %v1154, 0.0
    %v1261 = vrot.slane %v1260, 4
    %v1262 = vadd.f32 %v1260, %v1261
    %v1263 = vrot.slane %v1262, 2
    %v1264 = vadd.f32 %v1262, %v1263
    %v1265 = vrot.slane %v1264, 1
    %v1266 = vadd.f32 %v1264, %v1265
    %v1267 = vld [vmem:[#allocation7] sm:$0xff]
    %v1268 = vld [vmem:[#allocation7 + $0x8] sm:$0xff]
    %v1269 = vld [vmem:[#allocation7 + $0x10] sm:$0xff]
    %v1270 = vld [vmem:[#allocation7 + $0x18] sm:$0xff]
    %v1271 = vld [vmem:[%s4] sm:$0x1]
    %v1273 = vlaneseq
    %v1274 = vshrl.u32 %v1273, 7
    %v1275 = vsub.s32 0, %v1274
    %v1276 = vrot.slane %v1271, %v1275
    %vm1294 = vcmask 1041409
    %v1295 = vsel %vm1294, %v1168, %v1161
    %vm1296 = vcmask 1042434
    %v1297 = vsel %vm1296, %v1175, %v1295
    %vm1298 = vcmask 1043459
    %v1299 = vsel %vm1298, %v1182, %v1297
    %vm1300 = vcmask 1044484
    %v1301 = vsel %vm1300, %v1189, %v1299
    %vm1302 = vcmask 1045509
    %v1303 = vsel %vm1302, %v1196, %v1301
    %vm1304 = vcmask 1046534
    %v1305 = vsel %vm1304, %v1203, %v1303
    %vm1306 = vcmask 1047559
    %v1307 = vsel %vm1306, %v1210, %v1305
    %v1308 = vsel %vm1294, %v1224, %v1217
    %v1309 = vsel %vm1296, %v1231, %v1308
    %v1310 = vsel %vm1298, %v1238, %v1309
    %v1311 = vsel %vm1300, %v1245, %v1310
    %v1312 = vsel %vm1302, %v1252, %v1311
    %v1313 = vsel %vm1304, %v1259, %v1312
    %v1314 = vsel %vm1306, %v1266, %v1313
    %v1315 = vsel %vm154, %v1307, 0
    %v1317 = vsel %vm154, %v1314, 0
    %1319 = vmatprep.subr.mxu0 0.0
    %1320 = vmatpush1.msra.mxu0 %v1267
    %1321 = vmatprep.subr.mxu0 0.0
    %1322 = vmatpush1.msra.mxu0 %v1268
    %1323 = vmatprep.subr.mxu0 0.0
    %1324 = vmatpush1.msra.mxu0 %v1269
    %1325 = vmatprep.subr.mxu0 0.0
    %1326 = vmatpush1.msra.mxu0 %v1270
    %1327 = vmatprep.subr.mxu0 0.0
    %1328 = vmatpush1.msra.mxu0 0.0
    %1329 = vmatprep.subr.mxu0 0.0
    %1330 = vmatpush1.msra.mxu0 0.0
    %1331 = vmatprep.subr.mxu0 0.0
    %1332 = vmatpush1.msra.mxu0 0.0
    %1333 = vmatprep.subr.mxu0 0.0
    %1334 = vmatpush1.msra.mxu0 0.0
    %1335 = vmatprep.subr.mxu0 0.0
    %1336 = vmatpush1.msra.mxu0 0.0
    %1337 = vmatprep.subr.mxu0 0.0
    %1338 = vmatpush1.msra.mxu0 0.0
    %1339 = vmatprep.subr.mxu0 0.0
    %1340 = vmatpush1.msra.mxu0 0.0
    %1341 = vmatprep.subr.mxu0 0.0
    %1342 = vmatpush1.msra.mxu0 0.0
    %1343 = vmatprep.subr.mxu0 0.0
    %1344 = vmatpush1.msra.mxu0 0.0
    %1345 = vmatprep.subr.mxu0 0.0
    %1346 = vmatpush1.msra.mxu0 0.0
    %1347 = vmatprep.subr.mxu0 0.0
    %1348 = vmatpush1.msra.mxu0 0.0
    %1349 = vmatprep.subr.mxu0 0.0
    %1350 = vmatpush1.msra.mxu0 0.0
    %1351 = vmatprep.subr.mxu0 0.0
    %1352 = vmatpush1.msra.mxu0 0.0
    %1353 = vmatprep.subr.mxu0 0.0
    %1354 = vmatpush1.msra.mxu0 0.0
    %1355 = vmatprep.subr.mxu0 0.0
    %1356 = vmatpush1.msra.mxu0 0.0
    %1357 = vmatprep.subr.mxu0 0.0
    %1358 = vmatpush1.msra.mxu0 0.0
    %1359 = vmatprep.subr.mxu0 0.0
    %1360 = vmatpush1.msra.mxu0 0.0
    %1361 = vmatprep.subr.mxu0 0.0
    %1362 = vmatpush1.msra.mxu0 0.0
    %1363 = vmatprep.subr.mxu0 0.0
    %1364 = vmatpush1.msra.mxu0 0.0
    %1365 = vmatprep.subr.mxu0 0.0
    %1366 = vmatpush1.msra.mxu0 0.0
    %1367 = vmatprep.subr.mxu0 0.0
    %1368 = vmatpush1.msra.mxu0 0.0
    %1369 = vmatprep.subr.mxu0 0.0
    %1370 = vmatpush1.msra.mxu0 0.0
    %1371 = vmatprep.subr.mxu0 0.0
    %1372 = vmatpush1.msra.mxu0 0.0
    %1373 = vmatprep.subr.mxu0 0.0
    %1374 = vmatpush1.msra.mxu0 0.0
    %1375 = vmatprep.subr.mxu0 0.0
    %1376 = vmatpush1.msra.mxu0 0.0
    %1377 = vmatprep.subr.mxu0 0.0
    %1378 = vmatpush1.msra.mxu0 0.0
    %1379 = vmatprep.subr.mxu0 0.0
    %1380 = vmatpush1.msra.mxu0 0.0
    %1381 = vmatprep.subr.mxu0 0.0
    %1382 = vmatpush1.msra.mxu0 0.0
    %1383 = vmatprep.mubr.f32.mxu0 0.0
    %1384 = vmatmul.mubr.f32.gmra.mrb[0].mxu0 %v1315
    %v1385 = vpop.f32.mrb[0].mxu0
    %v1386 = vadd.f32 %v1276, %v1385
    %v1387 = vpop.f32.mrb[0].mxu0
    %1388 = vmatprep.mubr.f32.mxu0 0.0
    %1389 = vmatmul.mubr.f32.gmra.mrb[0].mxu0 %v1317
    %v1390 = vpop.f32.mrb[0].mxu0
    %v1391 = vadd.f32 %v1276, %v1390
    %v1392 = vpop.f32.mrb[0].mxu0
    %1393 = vdwg.mxu0
    %v1394 = vadd.f32 %v1386, %v104
    %v1395 = vadd.f32 %v1391, %v105
    %v1396 = vsel %vm154, %v1394, 0.0
    %1397 = vadd.xlane.f32.xlu0 %v1396
    %v1398 = vpop.xlane.xlu0 %1397
    %v1399 = vsel %vm154, %v1395, 0.0
    %1400 = vadd.xlane.f32.xlu0 %v1399
    %v1401 = vpop.xlane.xlu0 %1400
    %v1402 = vrcp.pop 32.0
    %v1403 = vmul.f32 %v1398, %v1402
    %v1404 = vmul.f32 %v1401, %v1402
    %v1405 = vmul.f32 %v1394, %v1394
    %v1406 = vmul.f32 %v1395, %v1395
    %v1407 = vsel %vm154, %v1405, 0.0
    %1408 = vadd.xlane.f32.xlu0 %v1407
    %v1409 = vpop.xlane.xlu0 %1408
    %v1410 = vsel %vm154, %v1406, 0.0
    %1411 = vadd.xlane.f32.xlu0 %v1410
    %v1412 = vpop.xlane.xlu0 %1411
    %v1413 = vmul.f32 %v1409, %v1402
    %v1414 = vmul.f32 %v1412, %v1402
    %v1415 = vmul.f32 %v1403, %v1403
    %v1416 = vmul.f32 %v1404, %v1404
    %v1417 = vsub.f32 %v1413, %v1415
    %v1418 = vsub.f32 %v1414, %v1416
    %v1419 = vsub.f32 %v1394, %v1403
    %v1420 = vsub.f32 %v1395, %v1404
    %v1421 = vadd.f32 %v1417, 1e-05
    %v1422 = vadd.f32 %v1418, 1e-05
    %v1423 = vrsqrt.pop %v1421
    %v1424 = vrsqrt.pop %v1422
    %v1425 = vmul.f32 %v1419, %v1423
    %v1426 = vmul.f32 %v1420, %v1424
    %v1427 = vlaneseq
    %v1428 = vshrl.u32 %v1427, 7
    %v1429 = vsub.s32 0, %v1428
    %v1430 = vrot.slane %v106, %v1429
    %v1431 = vmul.f32 %v1425, %v1430
    %v1432 = vmul.f32 %v1426, %v1430
    %v1433 = vlaneseq
    %v1434 = vshrl.u32 %v1433, 7
    %v1435 = vsub.s32 1, %v1434
    %v1436 = vrot.slane %v106, %v1435
    %v1437 = vadd.f32 %v1431, %v1436
    %v1438 = vadd.f32 %v1432, %v1436
    %s1439 = scalar_lea.vmem [#allocation5], 32
    %v1440 = vld [vmem:[%s1439] sm:$0xff]
    %v1441 = vld [vmem:[%s1439 + $0x8] sm:$0xff]
    %v1442 = vld [vmem:[%s1439 + $0x10] sm:$0xff]
    %v1443 = vld [vmem:[%s1439 + $0x18] sm:$0xff]
    %s1444 = scalar_lea.vmem %s2, 1
    %v1445 = vld [vmem:[%s1444] sm:$0x1]
    %v1447 = vlaneseq
    %v1448 = vshrl.u32 %v1447, 7
    %v1449 = vsub.s32 0, %v1448
    %v1450 = vrot.slane %v1445, %v1449
    %v1453 = vsel %vm154, %v1437, 0
    %v1456 = vsel %vm154, %v1438, 0
    %1458 = vmatprep.subr.mxu0 0.0
    %1459 = vmatpush1.msra.mxu0 %v1440
    %1460 = vmatprep.subr.mxu0 0.0
    %1461 = vmatpush1.msra.mxu0 %v1441
    %1462 = vmatprep.subr.mxu0 0.0
    %1463 = vmatpush1.msra.mxu0 %v1442
    %1464 = vmatprep.subr.mxu0 0.0
    %1465 = vmatpush1.msra.mxu0 %v1443
    %1466 = vmatprep.subr.mxu0 0.0
    %1467 = vmatpush1.msra.mxu0 0.0
    %1468 = vmatprep.subr.mxu0 0.0
    %1469 = vmatpush1.msra.mxu0 0.0
    %1470 = vmatprep.subr.mxu0 0.0
    %1471 = vmatpush1.msra.mxu0 0.0
    %1472 = vmatprep.subr.mxu0 0.0
    %1473 = vmatpush1.msra.mxu0 0.0
    %1474 = vmatprep.subr.mxu0 0.0
    %1475 = vmatpush1.msra.mxu0 0.0
    %1476 = vmatprep.subr.mxu0 0.0
    %1477 = vmatpush1.msra.mxu0 0.0
    %1478 = vmatprep.subr.mxu0 0.0
    %1479 = vmatpush1.msra.mxu0 0.0
    %1480 = vmatprep.subr.mxu0 0.0
    %1481 = vmatpush1.msra.mxu0 0.0
    %1482 = vmatprep.subr.mxu0 0.0
    %1483 = vmatpush1.msra.mxu0 0.0
    %1484 = vmatprep.subr.mxu0 0.0
    %1485 = vmatpush1.msra.mxu0 0.0
    %1486 = vmatprep.subr.mxu0 0.0
    %1487 = vmatpush1.msra.mxu0 0.0
    %1488 = vmatprep.subr.mxu0 0.0
    %1489 = vmatpush1.msra.mxu0 0.0
    %1490 = vmatprep.subr.mxu0 0.0
    %1491 = vmatpush1.msra.mxu0 0.0
    %1492 = vmatprep.subr.mxu0 0.0
    %1493 = vmatpush1.msra.mxu0 0.0
    %1494 = vmatprep.subr.mxu0 0.0
    %1495 = vmatpush1.msra.mxu0 0.0
    %1496 = vmatprep.subr.mxu0 0.0
    %1497 = vmatpush1.msra.mxu0 0.0
    %1498 = vmatprep.subr.mxu0 0.0
    %1499 = vmatpush1.msra.mxu0 0.0
    %1500 = vmatprep.subr.mxu0 0.0
    %1501 = vmatpush1.msra.mxu0 0.0
    %1502 = vmatprep.subr.mxu0 0.0
    %1503 = vmatpush1.msra.mxu0 0.0
    %1504 = vmatprep.subr.mxu0 0.0
    %1505 = vmatpush1.msra.mxu0 0.0
    %1506 = vmatprep.subr.mxu0 0.0
    %1507 = vmatpush1.msra.mxu0 0.0
    %1508 = vmatprep.subr.mxu0 0.0
    %1509 = vmatpush1.msra.mxu0 0.0
    %1510 = vmatprep.subr.mxu0 0.0
    %1511 = vmatpush1.msra.mxu0 0.0
    %1512 = vmatprep.subr.mxu0 0.0
    %1513 = vmatpush1.msra.mxu0 0.0
    %1514 = vmatprep.subr.mxu0 0.0
    %1515 = vmatpush1.msra.mxu0 0.0
    %1516 = vmatprep.subr.mxu0 0.0
    %1517 = vmatpush1.msra.mxu0 0.0
    %1518 = vmatprep.subr.mxu0 0.0
    %1519 = vmatpush1.msra.mxu0 0.0
    %1520 = vmatprep.subr.mxu0 0.0
    %1521 = vmatpush1.msra.mxu0 0.0
    %1522 = vmatprep.mubr.f32.mxu0 0.0
    %1523 = vmatmul.mubr.f32.gmra.mrb[0].mxu0 %v1453
    %v1524 = vpop.f32.mrb[0].mxu0
    %v1525 = vadd.f32 %v1450, %v1524
    %v1526 = vpop.f32.mrb[0].mxu0
    %1527 = vmatprep.mubr.f32.mxu0 0.0
    %1528 = vmatmul.mubr.f32.gmra.mrb[0].mxu0 %v1456
    %v1529 = vpop.f32.mrb[0].mxu0
    %v1530 = vadd.f32 %v1450, %v1529
    %v1531 = vpop.f32.mrb[0].mxu0
    %1532 = vdwg.mxu0
    %v1533 = vmul.f32 %v1525, 0.5
    %v1534 = vmul.f32 %v1530, 0.5
    %v1537 = vcombine.high %v1533, %v1533
    %v1539 = vunpack.c.l.s4 1966171168
    %v1540 = vunpack.c.0.s8 %v1539
    %v1541 = vlaneseq
    %v1542 = vshrl.u32 %v1541, 7
    %v1543 = vsub.s32 %v1540, %v1542
    %v1544 = vrot.slane %v1533, %v1543
    %v1546 = vunpack.c.l.s4 1966171168
    %v1547 = vunpack.c.0.s8 %v1546
    %v1548 = vlaneseq
    %v1549 = vshrl.u32 %v1548, 7
    %v1550 = vsub.s32 %v1547, %v1549
    %v1551 = vrot.slane %v1537, %v1550
    %v1552 = vcombine.high %v1544, %v1544
    %v1553 = vcombine.high %v1551, %v1551
    %v1555 = vunpack.c.l.s4 1966171168
    %v1556 = vunpack.c.0.s8 %v1555
    %v1557 = vlaneseq
    %v1558 = vshrl.u32 %v1557, 7
    %v1559 = vsub.s32 %v1556, %v1558
    %v1560 = vrot.slane %v1544, %v1559
    %v1562 = vunpack.c.l.s4 1966171168
    %v1563 = vunpack.c.0.s8 %v1562
    %v1564 = vlaneseq
    %v1565 = vshrl.u32 %v1564, 7
    %v1566 = vsub.s32 %v1563, %v1565
    %v1567 = vrot.slane %v1551, %v1566
    %v1569 = vunpack.c.l.s4 1966171168
    %v1570 = vunpack.c.0.s8 %v1569
    %v1571 = vlaneseq
    %v1572 = vshrl.u32 %v1571, 7
    %v1573 = vsub.s32 %v1570, %v1572
    %v1574 = vrot.slane %v1552, %v1573
    %v1576 = vunpack.c.l.s4 1966171168
    %v1577 = vunpack.c.0.s8 %v1576
    %v1578 = vlaneseq
    %v1579 = vshrl.u32 %v1578, 7
    %v1580 = vsub.s32 %v1577, %v1579
    %v1581 = vrot.slane %v1553, %v1580
    %v1582 = vcombine.high %v1560, %v1560
    %v1583 = vcombine.high %v1567, %v1567
    %v1584 = vcombine.high %v1574, %v1574
    %v1585 = vcombine.high %v1581, %v1581
    %v1586 = vcombine.high %v1534, %v1534
    %v1588 = vunpack.c.l.s4 1966171168
    %v1589 = vunpack.c.0.s8 %v1588
    %v1590 = vlaneseq
    %v1591 = vshrl.u32 %v1590, 7
    %v1592 = vsub.s32 %v1589, %v1591
    %v1593 = vrot.slane %v1534, %v1592
    %v1595 = vunpack.c.l.s4 1966171168
    %v1596 = vunpack.c.0.s8 %v1595
    %v1597 = vlaneseq
    %v1598 = vshrl.u32 %v1597, 7
    %v1599 = vsub.s32 %v1596, %v1598
    %v1600 = vrot.slane %v1586, %v1599
    %v1601 = vcombine.high %v1593, %v1593
    %v1602 = vcombine.high %v1600, %v1600
    %v1604 = vunpack.c.l.s4 1966171168
    %v1605 = vunpack.c.0.s8 %v1604
    %v1606 = vlaneseq
    %v1607 = vshrl.u32 %v1606, 7
    %v1608 = vsub.s32 %v1605, %v1607
    %v1609 = vrot.slane %v1593, %v1608
    %v1611 = vunpack.c.l.s4 1966171168
    %v1612 = vunpack.c.0.s8 %v1611
    %v1613 = vlaneseq
    %v1614 = vshrl.u32 %v1613, 7
    %v1615 = vsub.s32 %v1612, %v1614
    %v1616 = vrot.slane %v1600, %v1615
    %v1618 = vunpack.c.l.s4 1966171168
    %v1619 = vunpack.c.0.s8 %v1618
    %v1620 = vlaneseq
    %v1621 = vshrl.u32 %v1620, 7
    %v1622 = vsub.s32 %v1619, %v1621
    %v1623 = vrot.slane %v1601, %v1622
    %v1625 = vunpack.c.l.s4 1966171168
    %v1626 = vunpack.c.0.s8 %v1625
    %v1627 = vlaneseq
    %v1628 = vshrl.u32 %v1627, 7
    %v1629 = vsub.s32 %v1626, %v1628
    %v1630 = vrot.slane %v1602, %v1629
    %v1631 = vcombine.high %v1609, %v1609
    %v1632 = vcombine.high %v1616, %v1616
    %v1633 = vcombine.high %v1623, %v1623
    %v1634 = vcombine.high %v1630, %v1630
    %v1635 = vlaneseq
    %v1636 = vshrl.u32 %v1635, 7
    %v1637 = vsub.s32 0, %v1636
    %v1638 = vrot.slane %v1560, %v1637
    %v1639 = vlaneseq
    %v1640 = vshrl.u32 %v1639, 7
    %v1641 = vsub.s32 0, %v1640
    %v1642 = vrot.slane %v1574, %v1641
    %v1643 = vlaneseq
    %v1644 = vshrl.u32 %v1643, 7
    %v1645 = vsub.s32 0, %v1644
    %v1646 = vrot.slane %v1582, %v1645
    %v1647 = vlaneseq
    %v1648 = vshrl.u32 %v1647, 7
    %v1649 = vsub.s32 0, %v1648
    %v1650 = vrot.slane %v1584, %v1649
    %v1651 = vlaneseq
    %v1652 = vshrl.u32 %v1651, 7
    %v1653 = vsub.s32 0, %v1652
    %v1654 = vrot.slane %v1567, %v1653
    %v1655 = vlaneseq
    %v1656 = vshrl.u32 %v1655, 7
    %v1657 = vsub.s32 0, %v1656
    %v1658 = vrot.slane %v1581, %v1657
    %v1659 = vlaneseq
    %v1660 = vshrl.u32 %v1659, 7
    %v1661 = vsub.s32 0, %v1660
    %v1662 = vrot.slane %v1583, %v1661
    %v1663 = vlaneseq
    %v1664 = vshrl.u32 %v1663, 7
    %v1665 = vsub.s32 0, %v1664
    %v1666 = vrot.slane %v1585, %v1665
    %v1667 = vlaneseq
    %v1668 = vshrl.u32 %v1667, 7
    %v1669 = vsub.s32 0, %v1668
    %v1670 = vrot.slane %v1609, %v1669
    %v1671 = vlaneseq
    %v1672 = vshrl.u32 %v1671, 7
    %v1673 = vsub.s32 0, %v1672
    %v1674 = vrot.slane %v1623, %v1673
    %v1675 = vlaneseq
    %v1676 = vshrl.u32 %v1675, 7
    %v1677 = vsub.s32 0, %v1676
    %v1678 = vrot.slane %v1631, %v1677
    %v1679 = vlaneseq
    %v1680 = vshrl.u32 %v1679, 7
    %v1681 = vsub.s32 0, %v1680
    %v1682 = vrot.slane %v1633, %v1681
    %v1683 = vlaneseq
    %v1684 = vshrl.u32 %v1683, 7
    %v1685 = vsub.s32 0, %v1684
    %v1686 = vrot.slane %v1616, %v1685
    %v1687 = vlaneseq
    %v1688 = vshrl.u32 %v1687, 7
    %v1689 = vsub.s32 0, %v1688
    %v1690 = vrot.slane %v1630, %v1689
    %v1691 = vlaneseq
    %v1692 = vshrl.u32 %v1691, 7
    %v1693 = vsub.s32 0, %v1692
    %v1694 = vrot.slane %v1632, %v1693
    %v1695 = vlaneseq
    %v1696 = vshrl.u32 %v1695, 7
    %v1697 = vsub.s32 0, %v1696
    %v1698 = vrot.slane %v1634, %v1697
    %1717 = vrot.lane.b32.xlu0 %v1525, 96
    %v1718 = vpop.permute.xlu0 %1717
    %1719 = vrot.lane.b32.xlu0 %v1530, 96
    %v1720 = vpop.permute.xlu0 %1719
    %v1723 = vmul.f32 %v1638, %v1718
    %v1724 = vmul.f32 %v1642, %v1718
    %v1725 = vmul.f32 %v1646, %v1718
    %v1726 = vmul.f32 %v1650, %v1718
    %v1727 = vmul.f32 %v1654, %v1718
    %v1728 = vmul.f32 %v1658, %v1718
    %v1729 = vmul.f32 %v1662, %v1718
    %v1730 = vmul.f32 %v1666, %v1718
    %v1731 = vmul.f32 %v1670, %v1720
    %v1732 = vmul.f32 %v1674, %v1720
    %v1733 = vmul.f32 %v1678, %v1720
    %v1734 = vmul.f32 %v1682, %v1720
    %v1735 = vmul.f32 %v1686, %v1720
    %v1736 = vmul.f32 %v1690, %v1720
    %v1737 = vmul.f32 %v1694, %v1720
    %v1738 = vmul.f32 %v1698, %v1720
    %v1740 = vsel %vm154, %v1723, 0
    %v1743 = vsel %vm154, %v1724, 0
    %v1746 = vsel %vm154, %v1725, 0
    %v1749 = vsel %vm154, %v1726, 0
    %v1752 = vsel %vm154, %v1727, 0
    %v1755 = vsel %vm154, %v1728, 0
    %v1758 = vsel %vm154, %v1729, 0
    %v1761 = vsel %vm154, %v1730, 0
    %v1764 = vsel %vm154, %v1731, 0
    %v1767 = vsel %vm154, %v1732, 0
    %v1770 = vsel %vm154, %v1733, 0
    %v1773 = vsel %vm154, %v1734, 0
    %v1776 = vsel %vm154, %v1735, 0
    %v1779 = vsel %vm154, %v1736, 0
    %v1782 = vsel %vm154, %v1737, 0
    %v1785 = vsel %vm154, %v1738, 0
    %1787 = vmatprep.subr.mxu0 0.0
    %1788 = vmatpush1.msra.mxu0 %v132
    %1789 = vmatprep.subr.mxu0 0.0
    %1790 = vmatpush1.msra.mxu0 %v133
    %1791 = vmatprep.subr.mxu0 0.0
    %1792 = vmatpush1.msra.mxu0 %v134
    %1793 = vmatprep.subr.mxu0 0.0
    %1794 = vmatpush1.msra.mxu0 %v135
    %1795 = vmatprep.subr.mxu0 0.0
    %1796 = vmatpush1.msra.mxu0 0.0
    %1797 = vmatprep.subr.mxu0 0.0
    %1798 = vmatpush1.msra.mxu0 0.0
    %1799 = vmatprep.subr.mxu0 0.0
    %1800 = vmatpush1.msra.mxu0 0.0
    %1801 = vmatprep.subr.mxu0 0.0
    %1802 = vmatpush1.msra.mxu0 0.0
    %1803 = vmatprep.subr.mxu0 0.0
    %1804 = vmatpush1.msra.mxu0 0.0
    %1805 = vmatprep.subr.mxu0 0.0
    %1806 = vmatpush1.msra.mxu0 0.0
    %1807 = vmatprep.subr.mxu0 0.0
    %1808 = vmatpush1.msra.mxu0 0.0
    %1809 = vmatprep.subr.mxu0 0.0
    %1810 = vmatpush1.msra.mxu0 0.0
    %1811 = vmatprep.subr.mxu0 0.0
    %1812 = vmatpush1.msra.mxu0 0.0
    %1813 = vmatprep.subr.mxu0 0.0
    %1814 = vmatpush1.msra.mxu0 0.0
    %1815 = vmatprep.subr.mxu0 0.0
    %1816 = vmatpush1.msra.mxu0 0.0
    %1817 = vmatprep.subr.mxu0 0.0
    %1818 = vmatpush1.msra.mxu0 0.0
    %1819 = vmatprep.subr.mxu0 0.0
    %1820 = vmatpush1.msra.mxu0 0.0
    %1821 = vmatprep.subr.mxu0 0.0
    %1822 = vmatpush1.msra.mxu0 0.0
    %1823 = vmatprep.subr.mxu0 0.0
    %1824 = vmatpush1.msra.mxu0 0.0
    %1825 = vmatprep.subr.mxu0 0.0
    %1826 = vmatpush1.msra.mxu0 0.0
    %1827 = vmatprep.subr.mxu0 0.0
    %1828 = vmatpush1.msra.mxu0 0.0
    %1829 = vmatprep.subr.mxu0 0.0
    %1830 = vmatpush1.msra.mxu0 0.0
    %1831 = vmatprep.subr.mxu0 0.0
    %1832 = vmatpush1.msra.mxu0 0.0
    %1833 = vmatprep.subr.mxu0 0.0
    %1834 = vmatpush1.msra.mxu0 0.0
    %1835 = vmatprep.subr.mxu0 0.0
    %1836 = vmatpush1.msra.mxu0 0.0
    %1837 = vmatprep.subr.mxu0 0.0
    %1838 = vmatpush1.msra.mxu0 0.0
    %1839 = vmatprep.subr.mxu0 0.0
    %1840 = vmatpush1.msra.mxu0 0.0
    %1841 = vmatprep.subr.mxu0 0.0
    %1842 = vmatpush1.msra.mxu0 0.0
    %1843 = vmatprep.subr.mxu0 0.0
    %1844 = vmatpush1.msra.mxu0 0.0
    %1845 = vmatprep.subr.mxu0 0.0
    %1846 = vmatpush1.msra.mxu0 0.0
    %1847 = vmatprep.subr.mxu0 0.0
    %1848 = vmatpush1.msra.mxu0 0.0
    %1849 = vmatprep.subr.mxu0 0.0
    %1850 = vmatpush1.msra.mxu0 0.0
    %1851 = vmatprep.mubr.f32.mxu0 0.0
    %1852 = vmatmul.mubr.f32.gmra.mrb[0].mxu0 %v1740
    %v1853 = vpop.f32.mrb[0].mxu0
    %v1854 = vadd.f32 0.0, %v1853
    %v1855 = vpop.f32.mrb[0].mxu0
    %1856 = vmatprep.mubr.f32.mxu0 0.0
    %1857 = vmatmul.mubr.f32.gmra.mrb[0].mxu0 %v1743
    %v1858 = vpop.f32.mrb[0].mxu0
    %v1859 = vadd.f32 0.0, %v1858
    %v1860 = vpop.f32.mrb[0].mxu0
    %1861 = vmatprep.mubr.f32.mxu0 0.0
    %1862 = vmatmul.mubr.f32.gmra.mrb[0].mxu0 %v1746
    %v1863 = vpop.f32.mrb[0].mxu0
    %v1864 = vadd.f32 0.0, %v1863
    %v1865 = vpop.f32.mrb[0].mxu0
    %1866 = vmatprep.mubr.f32.mxu0 0.0
    %1867 = vmatmul.mubr.f32.gmra.mrb[0].mxu0 %v1749
    %v1868 = vpop.f32.mrb[0].mxu0
    %v1869 = vadd.f32 0.0, %v1868
    %v1870 = vpop.f32.mrb[0].mxu0
    %1871 = vmatprep.mubr.f32.mxu0 0.0
    %1872 = vmatmul.mubr.f32.gmra.mrb[0].mxu0 %v1752
    %v1873 = vpop.f32.mrb[0].mxu0
    %v1874 = vadd.f32 0.0, %v1873
    %v1875 = vpop.f32.mrb[0].mxu0
    %1876 = vmatprep.mubr.f32.mxu0 0.0
    %1877 = vmatmul.mubr.f32.gmra.mrb[0].mxu0 %v1755
    %v1878 = vpop.f32.mrb[0].mxu0
    %v1879 = vadd.f32 0.0, %v1878
    %v1880 = vpop.f32.mrb[0].mxu0
    %1881 = vmatprep.mubr.f32.mxu0 0.0
    %1882 = vmatmul.mubr.f32.gmra.mrb[0].mxu0 %v1758
    %v1883 = vpop.f32.mrb[0].mxu0
    %v1884 = vadd.f32 0.0, %v1883
    %v1885 = vpop.f32.mrb[0].mxu0
    %1886 = vmatprep.mubr.f32.mxu0 0.0
    %1887 = vmatmul.mubr.f32.gmra.mrb[0].mxu0 %v1761
    %v1888 = vpop.f32.mrb[0].mxu0
    %v1889 = vadd.f32 0.0, %v1888
    %v1890 = vpop.f32.mrb[0].mxu0
    %1891 = vmatprep.mubr.f32.mxu0 0.0
    %1892 = vmatmul.mubr.f32.gmra.mrb[0].mxu0 %v1764
    %v1893 = vpop.f32.mrb[0].mxu0
    %v1894 = vadd.f32 0.0, %v1893
    %v1895 = vpop.f32.mrb[0].mxu0
    %1896 = vmatprep.mubr.f32.mxu0 0.0
    %1897 = vmatmul.mubr.f32.gmra.mrb[0].mxu0 %v1767
    %v1898 = vpop.f32.mrb[0].mxu0
    %v1899 = vadd.f32 0.0, %v1898
    %v1900 = vpop.f32.mrb[0].mxu0
    %1901 = vmatprep.mubr.f32.mxu0 0.0
    %1902 = vmatmul.mubr.f32.gmra.mrb[0].mxu0 %v1770
    %v1903 = vpop.f32.mrb[0].mxu0
    %v1904 = vadd.f32 0.0, %v1903
    %v1905 = vpop.f32.mrb[0].mxu0
    %1906 = vmatprep.mubr.f32.mxu0 0.0
    %1907 = vmatmul.mubr.f32.gmra.mrb[0].mxu0 %v1773
    %v1908 = vpop.f32.mrb[0].mxu0
    %v1909 = vadd.f32 0.0, %v1908
    %v1910 = vpop.f32.mrb[0].mxu0
    %1911 = vmatprep.mubr.f32.mxu0 0.0
    %1912 = vmatmul.mubr.f32.gmra.mrb[0].mxu0 %v1776
    %v1913 = vpop.f32.mrb[0].mxu0
    %v1914 = vadd.f32 0.0, %v1913
    %v1915 = vpop.f32.mrb[0].mxu0
    %1916 = vmatprep.mubr.f32.mxu0 0.0
    %1917 = vmatmul.mubr.f32.gmra.mrb[0].mxu0 %v1779
    %v1918 = vpop.f32.mrb[0].mxu0
    %v1919 = vadd.f32 0.0, %v1918
    %v1920 = vpop.f32.mrb[0].mxu0
    %1921 = vmatprep.mubr.f32.mxu0 0.0
    %1922 = vmatmul.mubr.f32.gmra.mrb[0].mxu0 %v1782
    %v1923 = vpop.f32.mrb[0].mxu0
    %v1924 = vadd.f32 0.0, %v1923
    %v1925 = vpop.f32.mrb[0].mxu0
    %1926 = vmatprep.mubr.f32.mxu0 0.0
    %1927 = vmatmul.mubr.f32.gmra.mrb[0].mxu0 %v1785
    %v1928 = vpop.f32.mrb[0].mxu0
    %v1929 = vadd.f32 0.0, %v1928
    %v1930 = vpop.f32.mrb[0].mxu0
    %1931 = vdwg.mxu0
    %v1932 = vsel %vm635, %v1854, -inf
    %v1933 = vrot.slane %v1932, 4
    %v1934 = vmax.f32 %v1932, %v1933
    %v1935 = vrot.slane %v1934, 2
    %v1936 = vmax.f32 %v1934, %v1935
    %v1937 = vrot.slane %v1936, 1
    %v1938 = vmax.f32 %v1936, %v1937
    %v1939 = vsel %vm635, %v1859, -inf
    %v1940 = vrot.slane %v1939, 4
    %v1941 = vmax.f32 %v1939, %v1940
    %v1942 = vrot.slane %v1941, 2
    %v1943 = vmax.f32 %v1941, %v1942
    %v1944 = vrot.slane %v1943, 1
    %v1945 = vmax.f32 %v1943, %v1944
    %v1946 = vsel %vm635, %v1864, -inf
    %v1947 = vrot.slane %v1946, 4
    %v1948 = vmax.f32 %v1946, %v1947
    %v1949 = vrot.slane %v1948, 2
    %v1950 = vmax.f32 %v1948, %v1949
    %v1951 = vrot.slane %v1950, 1
    %v1952 = vmax.f32 %v1950, %v1951
    %v1953 = vsel %vm635, %v1869, -inf
    %v1954 = vrot.slane %v1953, 4
    %v1955 = vmax.f32 %v1953, %v1954
    %v1956 = vrot.slane %v1955, 2
    %v1957 = vmax.f32 %v1955, %v1956
    %v1958 = vrot.slane %v1957, 1
    %v1959 = vmax.f32 %v1957, %v1958
    %v1960 = vsel %vm635, %v1874, -inf
    %v1961 = vrot.slane %v1960, 4
    %v1962 = vmax.f32 %v1960, %v1961
    %v1963 = vrot.slane %v1962, 2
    %v1964 = vmax.f32 %v1962, %v1963
    %v1965 = vrot.slane %v1964, 1
    %v1966 = vmax.f32 %v1964, %v1965
    %v1967 = vsel %vm635, %v1879, -inf
    %v1968 = vrot.slane %v1967, 4
    %v1969 = vmax.f32 %v1967, %v1968
    %v1970 = vrot.slane %v1969, 2
    %v1971 = vmax.f32 %v1969, %v1970
    %v1972 = vrot.slane %v1971, 1
    %v1973 = vmax.f32 %v1971, %v1972
    %v1974 = vsel %vm635, %v1884, -inf
    %v1975 = vrot.slane %v1974, 4
    %v1976 = vmax.f32 %v1974, %v1975
    %v1977 = vrot.slane %v1976, 2
    %v1978 = vmax.f32 %v1976, %v1977
    %v1979 = vrot.slane %v1978, 1
    %v1980 = vmax.f32 %v1978, %v1979
    %v1981 = vsel %vm635, %v1889, -inf
    %v1982 = vrot.slane %v1981, 4
    %v1983 = vmax.f32 %v1981, %v1982
    %v1984 = vrot.slane %v1983, 2
    %v1985 = vmax.f32 %v1983, %v1984
    %v1986 = vrot.slane %v1985, 1
    %v1987 = vmax.f32 %v1985, %v1986
    %v1988 = vsel %vm635, %v1894, -inf
    %v1989 = vrot.slane %v1988, 4
    %v1990 = vmax.f32 %v1988, %v1989
    %v1991 = vrot.slane %v1990, 2
    %v1992 = vmax.f32 %v1990, %v1991
    %v1993 = vrot.slane %v1992, 1
    %v1994 = vmax.f32 %v1992, %v1993
    %v1995 = vsel %vm635, %v1899, -inf
    %v1996 = vrot.slane %v1995, 4
    %v1997 = vmax.f32 %v1995, %v1996
    %v1998 = vrot.slane %v1997, 2
    %v1999 = vmax.f32 %v1997, %v1998
    %v2000 = vrot.slane %v1999, 1
    %v2001 = vmax.f32 %v1999, %v2000
    %v2002 = vsel %vm635, %v1904, -inf
    %v2003 = vrot.slane %v2002, 4
    %v2004 = vmax.f32 %v2002, %v2003
    %v2005 = vrot.slane %v2004, 2
    %v2006 = vmax.f32 %v2004, %v2005
    %v2007 = vrot.slane %v2006, 1
    %v2008 = vmax.f32 %v2006, %v2007
    %v2009 = vsel %vm635, %v1909, -inf
    %v2010 = vrot.slane %v2009, 4
    %v2011 = vmax.f32 %v2009, %v2010
    %v2012 = vrot.slane %v2011, 2
    %v2013 = vmax.f32 %v2011, %v2012
    %v2014 = vrot.slane %v2013, 1
    %v2015 = vmax.f32 %v2013, %v2014
    %v2016 = vsel %vm635, %v1914, -inf
    %v2017 = vrot.slane %v2016, 4
    %v2018 = vmax.f32 %v2016, %v2017
    %v2019 = vrot.slane %v2018, 2
    %v2020 = vmax.f32 %v2018, %v2019
    %v2021 = vrot.slane %v2020, 1
    %v2022 = vmax.f32 %v2020, %v2021
    %v2023 = vsel %vm635, %v1919, -inf
    %v2024 = vrot.slane %v2023, 4
    %v2025 = vmax.f32 %v2023, %v2024
    %v2026 = vrot.slane %v2025, 2
    %v2027 = vmax.f32 %v2025, %v2026
    %v2028 = vrot.slane %v2027, 1
    %v2029 = vmax.f32 %v2027, %v2028
    %v2030 = vsel %vm635, %v1924, -inf
    %v2031 = vrot.slane %v2030, 4
    %v2032 = vmax.f32 %v2030, %v2031
    %v2033 = vrot.slane %v2032, 2
    %v2034 = vmax.f32 %v2032, %v2033
    %v2035 = vrot.slane %v2034, 1
    %v2036 = vmax.f32 %v2034, %v2035
    %v2037 = vsel %vm635, %v1929, -inf
    %v2038 = vrot.slane %v2037, 4
    %v2039 = vmax.f32 %v2037, %v2038
    %v2040 = vrot.slane %v2039, 2
    %v2041 = vmax.f32 %v2039, %v2040
    %v2042 = vrot.slane %v2041, 1
    %v2043 = vmax.f32 %v2041, %v2042
    %v2044 = vsub.f32 %v1854, %v1938
    %v2045 = vsub.f32 %v1859, %v1945
    %v2046 = vsub.f32 %v1864, %v1952
    %v2047 = vsub.f32 %v1869, %v1959
    %v2048 = vsub.f32 %v1874, %v1966
    %v2049 = vsub.f32 %v1879, %v1973
    %v2050 = vsub.f32 %v1884, %v1980
    %v2051 = vsub.f32 %v1889, %v1987
    %v2052 = vsub.f32 %v1894, %v1994
    %v2053 = vsub.f32 %v1899, %v2001
    %v2054 = vsub.f32 %v1904, %v2008
    %v2055 = vsub.f32 %v1909, %v2015
    %v2056 = vsub.f32 %v1914, %v2022
    %v2057 = vsub.f32 %v1919, %v2029
    %v2058 = vsub.f32 %v1924, %v2036
    %v2059 = vsub.f32 %v1929, %v2043
    %v2060 = vmul.f32 %v2044, 1.442695
    %v2061 = vpow.pop %v2060
    %v2062 = vmul.f32 %v2045, 1.442695
    %v2063 = vpow.pop %v2062
    %v2064 = vmul.f32 %v2046, 1.442695
    %v2065 = vpow.pop %v2064
    %v2066 = vmul.f32 %v2047, 1.442695
    %v2067 = vpow.pop %v2066
    %v2068 = vmul.f32 %v2048, 1.442695
    %v2069 = vpow.pop %v2068
    %v2070 = vmul.f32 %v2049, 1.442695
    %v2071 = vpow.pop %v2070
    %v2072 = vmul.f32 %v2050, 1.442695
    %v2073 = vpow.pop %v2072
    %v2074 = vmul.f32 %v2051, 1.442695
    %v2075 = vpow.pop %v2074
    %v2076 = vmul.f32 %v2052, 1.442695
    %v2077 = vpow.pop %v2076
    %v2078 = vmul.f32 %v2053, 1.442695
    %v2079 = vpow.pop %v2078
    %v2080 = vmul.f32 %v2054, 1.442695
    %v2081 = vpow.pop %v2080
    %v2082 = vmul.f32 %v2055, 1.442695
    %v2083 = vpow.pop %v2082
    %v2084 = vmul.f32 %v2056, 1.442695
    %v2085 = vpow.pop %v2084
    %v2086 = vmul.f32 %v2057, 1.442695
    %v2087 = vpow.pop %v2086
    %v2088 = vmul.f32 %v2058, 1.442695
    %v2089 = vpow.pop %v2088
    %v2090 = vmul.f32 %v2059, 1.442695
    %v2091 = vpow.pop %v2090
    %v2092 = vsel %vm635, %v2061, 0.0
    %v2093 = vrot.slane %v2092, 4
    %v2094 = vadd.f32 %v2092, %v2093
    %v2095 = vrot.slane %v2094, 2
    %v2096 = vadd.f32 %v2094, %v2095
    %v2097 = vrot.slane %v2096, 1
    %v2098 = vadd.f32 %v2096, %v2097
    %v2099 = vsel %vm635, %v2063, 0.0
    %v2100 = vrot.slane %v2099, 4
    %v2101 = vadd.f32 %v2099, %v2100
    %v2102 = vrot.slane %v2101, 2
    %v2103 = vadd.f32 %v2101, %v2102
    %v2104 = vrot.slane %v2103, 1
    %v2105 = vadd.f32 %v2103, %v2104
    %v2106 = vsel %vm635, %v2065, 0.0
    %v2107 = vrot.slane %v2106, 4
    %v2108 = vadd.f32 %v2106, %v2107
    %v2109 = vrot.slane %v2108, 2
    %v2110 = vadd.f32 %v2108, %v2109
    %v2111 = vrot.slane %v2110, 1
    %v2112 = vadd.f32 %v2110, %v2111
    %v2113 = vsel %vm635, %v2067, 0.0
    %v2114 = vrot.slane %v2113, 4
    %v2115 = vadd.f32 %v2113, %v2114
    %v2116 = vrot.slane %v2115, 2
    %v2117 = vadd.f32 %v2115, %v2116
    %v2118 = vrot.slane %v2117, 1
    %v2119 = vadd.f32 %v2117, %v2118
    %v2120 = vsel %vm635, %v2069, 0.0
    %v2121 = vrot.slane %v2120, 4
    %v2122 = vadd.f32 %v2120, %v2121
    %v2123 = vrot.slane %v2122, 2
    %v2124 = vadd.f32 %v2122, %v2123
    %v2125 = vrot.slane %v2124, 1
    %v2126 = vadd.f32 %v2124, %v2125
    %v2127 = vsel %vm635, %v2071, 0.0
    %v2128 = vrot.slane %v2127, 4
    %v2129 = vadd.f32 %v2127, %v2128
    %v2130 = vrot.slane %v2129, 2
    %v2131 = vadd.f32 %v2129, %v2130
    %v2132 = vrot.slane %v2131, 1
    %v2133 = vadd.f32 %v2131, %v2132
    %v2134 = vsel %vm635, %v2073, 0.0
    %v2135 = vrot.slane %v2134, 4
    %v2136 = vadd.f32 %v2134, %v2135
    %v2137 = vrot.slane %v2136, 2
    %v2138 = vadd.f32 %v2136, %v2137
    %v2139 = vrot.slane %v2138, 1
    %v2140 = vadd.f32 %v2138, %v2139
    %v2141 = vsel %vm635, %v2075, 0.0
    %v2142 = vrot.slane %v2141, 4
    %v2143 = vadd.f32 %v2141, %v2142
    %v2144 = vrot.slane %v2143, 2
    %v2145 = vadd.f32 %v2143, %v2144
    %v2146 = vrot.slane %v2145, 1
    %v2147 = vadd.f32 %v2145, %v2146
    %v2148 = vsel %vm635, %v2077, 0.0
    %v2149 = vrot.slane %v2148, 4
    %v2150 = vadd.f32 %v2148, %v2149
    %v2151 = vrot.slane %v2150, 2
    %v2152 = vadd.f32 %v2150, %v2151
    %v2153 = vrot.slane %v2152, 1
    %v2154 = vadd.f32 %v2152, %v2153
    %v2155 = vsel %vm635, %v2079, 0.0
    %v2156 = vrot.slane %v2155, 4
    %v2157 = vadd.f32 %v2155, %v2156
    %v2158 = vrot.slane %v2157, 2
    %v2159 = vadd.f32 %v2157, %v2158
    %v2160 = vrot.slane %v2159, 1
    %v2161 = vadd.f32 %v2159, %v2160
    %v2162 = vsel %vm635, %v2081, 0.0
    %v2163 = vrot.slane %v2162, 4
    %v2164 = vadd.f32 %v2162, %v2163
    %v2165 = vrot.slane %v2164, 2
    %v2166 = vadd.f32 %v2164, %v2165
    %v2167 = vrot.slane %v2166, 1
    %v2168 = vadd.f32 %v2166, %v2167
    %v2169 = vsel %vm635, %v2083, 0.0
    %v2170 = vrot.slane %v2169, 4
    %v2171 = vadd.f32 %v2169, %v2170
    %v2172 = vrot.slane %v2171, 2
    %v2173 = vadd.f32 %v2171, %v2172
    %v2174 = vrot.slane %v2173, 1
    %v2175 = vadd.f32 %v2173, %v2174
    %v2176 = vsel %vm635, %v2085, 0.0
    %v2177 = vrot.slane %v2176, 4
    %v2178 = vadd.f32 %v2176, %v2177
    %v2179 = vrot.slane %v2178, 2
    %v2180 = vadd.f32 %v2178, %v2179
    %v2181 = vrot.slane %v2180, 1
    %v2182 = vadd.f32 %v2180, %v2181
    %v2183 = vsel %vm635, %v2087, 0.0
    %v2184 = vrot.slane %v2183, 4
    %v2185 = vadd.f32 %v2183, %v2184
    %v2186 = vrot.slane %v2185, 2
    %v2187 = vadd.f32 %v2185, %v2186
    %v2188 = vrot.slane %v2187, 1
    %v2189 = vadd.f32 %v2187, %v2188
    %v2190 = vsel %vm635, %v2089, 0.0
    %v2191 = vrot.slane %v2190, 4
    %v2192 = vadd.f32 %v2190, %v2191
    %v2193 = vrot.slane %v2192, 2
    %v2194 = vadd.f32 %v2192, %v2193
    %v2195 = vrot.slane %v2194, 1
    %v2196 = vadd.f32 %v2194, %v2195
    %v2197 = vsel %vm635, %v2091, 0.0
    %v2198 = vrot.slane %v2197, 4
    %v2199 = vadd.f32 %v2197, %v2198
    %v2200 = vrot.slane %v2199, 2
    %v2201 = vadd.f32 %v2199, %v2200
    %v2202 = vrot.slane %v2201, 1
    %v2203 = vadd.f32 %v2201, %v2202
    %v2204 = vrcp.pop %v2098
    %v2205 = vrcp.pop %v2105
    %v2206 = vrcp.pop %v2112
    %v2207 = vrcp.pop %v2119
    %v2208 = vrcp.pop %v2126
    %v2209 = vrcp.pop %v2133
    %v2210 = vrcp.pop %v2140
    %v2211 = vrcp.pop %v2147
    %v2212 = vrcp.pop %v2154
    %v2213 = vrcp.pop %v2161
    %v2214 = vrcp.pop %v2168
    %v2215 = vrcp.pop %v2175
    %v2216 = vrcp.pop %v2182
    %v2217 = vrcp.pop %v2189
    %v2218 = vrcp.pop %v2196
    %v2219 = vrcp.pop %v2203
    %v2220 = vmul.f32 %v2061, %v2204
    %v2221 = vmul.f32 %v2063, %v2205
    %v2222 = vmul.f32 %v2065, %v2206
    %v2223 = vmul.f32 %v2067, %v2207
    %v2224 = vmul.f32 %v2069, %v2208
    %v2225 = vmul.f32 %v2071, %v2209
    %v2226 = vmul.f32 %v2073, %v2210
    %v2227 = vmul.f32 %v2075, %v2211
    %v2228 = vmul.f32 %v2077, %v2212
    %v2229 = vmul.f32 %v2079, %v2213
    %v2230 = vmul.f32 %v2081, %v2214
    %v2231 = vmul.f32 %v2083, %v2215
    %v2232 = vmul.f32 %v2085, %v2216
    %v2233 = vmul.f32 %v2087, %v2217
    %v2234 = vmul.f32 %v2089, %v2218
    %v2235 = vmul.f32 %v2091, %v2219
    %v2237 = vsel %vm635, %v2220, 0
    %v2240 = vsel %vm635, %v2221, 0
    %v2243 = vsel %vm635, %v2222, 0
    %v2246 = vsel %vm635, %v2223, 0
    %v2249 = vsel %vm635, %v2224, 0
    %v2252 = vsel %vm635, %v2225, 0
    %v2255 = vsel %vm635, %v2226, 0
    %v2258 = vsel %vm635, %v2227, 0
    %v2261 = vsel %vm635, %v2228, 0
    %v2264 = vsel %vm635, %v2229, 0
    %v2267 = vsel %vm635, %v2230, 0
    %v2270 = vsel %vm635, %v2231, 0
    %v2273 = vsel %vm635, %v2232, 0
    %v2276 = vsel %vm635, %v2233, 0
    %v2279 = vsel %vm635, %v2234, 0
    %v2282 = vsel %vm635, %v2235, 0
    %2284 = vmatprep.subr.mxu0 0.0
    %2285 = vmatpush1.msra.mxu0 %v142
    %2286 = vmatprep.subr.mxu0 0.0
    %2287 = vmatpush1.msra.mxu0 0.0
    %2288 = vmatprep.subr.mxu0 0.0
    %2289 = vmatpush1.msra.mxu0 0.0
    %2290 = vmatprep.subr.mxu0 0.0
    %2291 = vmatpush1.msra.mxu0 0.0
    %2292 = vmatprep.subr.mxu0 0.0
    %2293 = vmatpush1.msra.mxu0 0.0
    %2294 = vmatprep.subr.mxu0 0.0
    %2295 = vmatpush1.msra.mxu0 0.0
    %2296 = vmatprep.subr.mxu0 0.0
    %2297 = vmatpush1.msra.mxu0 0.0
    %2298 = vmatprep.subr.mxu0 0.0
    %2299 = vmatpush1.msra.mxu0 0.0
    %2300 = vmatprep.subr.mxu0 0.0
    %2301 = vmatpush1.msra.mxu0 0.0
    %2302 = vmatprep.subr.mxu0 0.0
    %2303 = vmatpush1.msra.mxu0 0.0
    %2304 = vmatprep.subr.mxu0 0.0
    %2305 = vmatpush1.msra.mxu0 0.0
    %2306 = vmatprep.subr.mxu0 0.0
    %2307 = vmatpush1.msra.mxu0 0.0
    %2308 = vmatprep.subr.mxu0 0.0
    %2309 = vmatpush1.msra.mxu0 0.0
    %2310 = vmatprep.subr.mxu0 0.0
    %2311 = vmatpush1.msra.mxu0 0.0
    %2312 = vmatprep.subr.mxu0 0.0
    %2313 = vmatpush1.msra.mxu0 0.0
    %2314 = vmatprep.subr.mxu0 0.0
    %2315 = vmatpush1.msra.mxu0 0.0
    %2316 = vmatprep.subr.mxu0 0.0
    %2317 = vmatpush1.msra.mxu0 0.0
    %2318 = vmatprep.subr.mxu0 0.0
    %2319 = vmatpush1.msra.mxu0 0.0
    %2320 = vmatprep.subr.mxu0 0.0
    %2321 = vmatpush1.msra.mxu0 0.0
    %2322 = vmatprep.subr.mxu0 0.0
    %2323 = vmatpush1.msra.mxu0 0.0
    %2324 = vmatprep.subr.mxu0 0.0
    %2325 = vmatpush1.msra.mxu0 0.0
    %2326 = vmatprep.subr.mxu0 0.0
    %2327 = vmatpush1.msra.mxu0 0.0
    %2328 = vmatprep.subr.mxu0 0.0
    %2329 = vmatpush1.msra.mxu0 0.0
    %2330 = vmatprep.subr.mxu0 0.0
    %2331 = vmatpush1.msra.mxu0 0.0
    %2332 = vmatprep.subr.mxu0 0.0
    %2333 = vmatpush1.msra.mxu0 0.0
    %2334 = vmatprep.subr.mxu0 0.0
    %2335 = vmatpush1.msra.mxu0 0.0
    %2336 = vmatprep.subr.mxu0 0.0
    %2337 = vmatpush1.msra.mxu0 0.0
    %2338 = vmatprep.subr.mxu0 0.0
    %2339 = vmatpush1.msra.mxu0 0.0
    %2340 = vmatprep.subr.mxu0 0.0
    %2341 = vmatpush1.msra.mxu0 0.0
    %2342 = vmatprep.subr.mxu0 0.0
    %2343 = vmatpush1.msra.mxu0 0.0
    %2344 = vmatprep.subr.mxu0 0.0
    %2345 = vmatpush1.msra.mxu0 0.0
    %2346 = vmatprep.subr.mxu0 0.0
    %2347 = vmatpush1.msra.mxu0 0.0
    %2348 = vmatprep.mubr.f32.mxu0 0.0
    %2349 = vmatmul.mubr.f32.gmra.mrb[0].mxu0 %v2237
    %v2350 = vpop.f32.mrb[0].mxu0
    %v2351 = vadd.f32 0.0, %v2350
    %v2352 = vpop.f32.mrb[0].mxu0
    %2353 = vmatprep.mubr.f32.mxu0 0.0
    %2354 = vmatmul.mubr.f32.gmra.mrb[0].mxu0 %v2240
    %v2355 = vpop.f32.mrb[0].mxu0
    %v2356 = vadd.f32 0.0, %v2355
    %v2357 = vpop.f32.mrb[0].mxu0
    %2358 = vmatprep.mubr.f32.mxu0 0.0
    %2359 = vmatmul.mubr.f32.gmra.mrb[0].mxu0 %v2243
    %v2360 = vpop.f32.mrb[0].mxu0
    %v2361 = vadd.f32 0.0, %v2360
    %v2362 = vpop.f32.mrb[0].mxu0
    %2363 = vmatprep.mubr.f32.mxu0 0.0
    %2364 = vmatmul.mubr.f32.gmra.mrb[0].mxu0 %v2246
    %v2365 = vpop.f32.mrb[0].mxu0
    %v2366 = vadd.f32 0.0, %v2365
    %v2367 = vpop.f32.mrb[0].mxu0
    %2368 = vmatprep.mubr.f32.mxu0 0.0
    %2369 = vmatmul.mubr.f32.gmra.mrb[0].mxu0 %v2249
    %v2370 = vpop.f32.mrb[0].mxu0
    %v2371 = vadd.f32 0.0, %v2370
    %v2372 = vpop.f32.mrb[0].mxu0
    %2373 = vmatprep.mubr.f32.mxu0 0.0
    %2374 = vmatmul.mubr.f32.gmra.mrb[0].mxu0 %v2252
    %v2375 = vpop.f32.mrb[0].mxu0
    %v2376 = vadd.f32 0.0, %v2375
    %v2377 = vpop.f32.mrb[0].mxu0
    %2378 = vmatprep.mubr.f32.mxu0 0.0
    %2379 = vmatmul.mubr.f32.gmra.mrb[0].mxu0 %v2255
    %v2380 = vpop.f32.mrb[0].mxu0
    %v2381 = vadd.f32 0.0, %v2380
    %v2382 = vpop.f32.mrb[0].mxu0
    %2383 = vmatprep.mubr.f32.mxu0 0.0
    %2384 = vmatmul.mubr.f32.gmra.mrb[0].mxu0 %v2258
    %v2385 = vpop.f32.mrb[0].mxu0
    %v2386 = vadd.f32 0.0, %v2385
    %v2387 = vpop.f32.mrb[0].mxu0
    %2388 = vmatprep.mubr.f32.mxu0 0.0
    %2389 = vmatmul.mubr.f32.gmra.mrb[0].mxu0 %v2261
    %v2390 = vpop.f32.mrb[0].mxu0
    %v2391 = vadd.f32 0.0, %v2390
    %v2392 = vpop.f32.mrb[0].mxu0
    %2393 = vmatprep.mubr.f32.mxu0 0.0
    %2394 = vmatmul.mubr.f32.gmra.mrb[0].mxu0 %v2264
    %v2395 = vpop.f32.mrb[0].mxu0
    %v2396 = vadd.f32 0.0, %v2395
    %v2397 = vpop.f32.mrb[0].mxu0
    %2398 = vmatprep.mubr.f32.mxu0 0.0
    %2399 = vmatmul.mubr.f32.gmra.mrb[0].mxu0 %v2267
    %v2400 = vpop.f32.mrb[0].mxu0
    %v2401 = vadd.f32 0.0, %v2400
    %v2402 = vpop.f32.mrb[0].mxu0
    %2403 = vmatprep.mubr.f32.mxu0 0.0
    %2404 = vmatmul.mubr.f32.gmra.mrb[0].mxu0 %v2270
    %v2405 = vpop.f32.mrb[0].mxu0
    %v2406 = vadd.f32 0.0, %v2405
    %v2407 = vpop.f32.mrb[0].mxu0
    %2408 = vmatprep.mubr.f32.mxu0 0.0
    %2409 = vmatmul.mubr.f32.gmra.mrb[0].mxu0 %v2273
    %v2410 = vpop.f32.mrb[0].mxu0
    %v2411 = vadd.f32 0.0, %v2410
    %v2412 = vpop.f32.mrb[0].mxu0
    %2413 = vmatprep.mubr.f32.mxu0 0.0
    %2414 = vmatmul.mubr.f32.gmra.mrb[0].mxu0 %v2276
    %v2415 = vpop.f32.mrb[0].mxu0
    %v2416 = vadd.f32 0.0, %v2415
    %v2417 = vpop.f32.mrb[0].mxu0
    %2418 = vmatprep.mubr.f32.mxu0 0.0
    %2419 = vmatmul.mubr.f32.gmra.mrb[0].mxu0 %v2279
    %v2420 = vpop.f32.mrb[0].mxu0
    %v2421 = vadd.f32 0.0, %v2420
    %v2422 = vpop.f32.mrb[0].mxu0
    %2423 = vmatprep.mubr.f32.mxu0 0.0
    %2424 = vmatmul.mubr.f32.gmra.mrb[0].mxu0 %v2282
    %v2425 = vpop.f32.mrb[0].mxu0
    %v2426 = vadd.f32 0.0, %v2425
    %v2427 = vpop.f32.mrb[0].mxu0
    %2428 = vdwg.mxu0
    %2429 = vrot.lane.b32.xlu0 %v1525, 64
    %v2430 = vpop.permute.xlu0 %2429
    %2431 = vrot.lane.b32.xlu0 %v1530, 64
    %v2432 = vpop.permute.xlu0 %2431
    %v2435 = vmul.f32 %v2351, %v2430
    %v2436 = vmul.f32 %v2356, %v2430
    %v2437 = vmul.f32 %v2361, %v2430
    %v2438 = vmul.f32 %v2366, %v2430
    %v2439 = vmul.f32 %v2371, %v2430
    %v2440 = vmul.f32 %v2376, %v2430
    %v2441 = vmul.f32 %v2381, %v2430
    %v2442 = vmul.f32 %v2386, %v2430
    %v2443 = vmul.f32 %v2391, %v2432
    %v2444 = vmul.f32 %v2396, %v2432
    %v2445 = vmul.f32 %v2401, %v2432
    %v2446 = vmul.f32 %v2406, %v2432
    %v2447 = vmul.f32 %v2411, %v2432
    %v2448 = vmul.f32 %v2416, %v2432
    %v2449 = vmul.f32 %v2421, %v2432
    %v2450 = vmul.f32 %v2426, %v2432
    %v2451 = vsel %vm154, %v2435, 0.0
    %v2452 = vrot.slane %v2451, 4
    %v2453 = vadd.f32 %v2451, %v2452
    %v2454 = vrot.slane %v2453, 2
    %v2455 = vadd.f32 %v2453, %v2454
    %v2456 = vrot.slane %v2455, 1
    %v2457 = vadd.f32 %v2455, %v2456
    %v2458 = vsel %vm154, %v2436, 0.0
    %v2459 = vrot.slane %v2458, 4
    %v2460 = vadd.f32 %v2458, %v2459
    %v2461 = vrot.slane %v2460, 2
    %v2462 = vadd.f32 %v2460, %v2461
    %v2463 = vrot.slane %v2462, 1
    %v2464 = vadd.f32 %v2462, %v2463
    %v2465 = vsel %vm154, %v2437, 0.0
    %v2466 = vrot.slane %v2465, 4
    %v2467 = vadd.f32 %v2465, %v2466
    %v2468 = vrot.slane %v2467, 2
    %v2469 = vadd.f32 %v2467, %v2468
    %v2470 = vrot.slane %v2469, 1
    %v2471 = vadd.f32 %v2469, %v2470
    %v2472 = vsel %vm154, %v2438, 0.0
    %v2473 = vrot.slane %v2472, 4
    %v2474 = vadd.f32 %v2472, %v2473
    %v2475 = vrot.slane %v2474, 2
    %v2476 = vadd.f32 %v2474, %v2475
    %v2477 = vrot.slane %v2476, 1
    %v2478 = vadd.f32 %v2476, %v2477
    %v2479 = vsel %vm154, %v2439, 0.0
    %v2480 = vrot.slane %v2479, 4
    %v2481 = vadd.f32 %v2479, %v2480
    %v2482 = vrot.slane %v2481, 2
    %v2483 = vadd.f32 %v2481, %v2482
    %v2484 = vrot.slane %v2483, 1
    %v2485 = vadd.f32 %v2483, %v2484
    %v2486 = vsel %vm154, %v2440, 0.0
    %v2487 = vrot.slane %v2486, 4
    %v2488 = vadd.f32 %v2486, %v2487
    %v2489 = vrot.slane %v2488, 2
    %v2490 = vadd.f32 %v2488, %v2489
    %v2491 = vrot.slane %v2490, 1
    %v2492 = vadd.f32 %v2490, %v2491
    %v2493 = vsel %vm154, %v2441, 0.0
    %v2494 = vrot.slane %v2493, 4
    %v2495 = vadd.f32 %v2493, %v2494
    %v2496 = vrot.slane %v2495, 2
    %v2497 = vadd.f32 %v2495, %v2496
    %v2498 = vrot.slane %v2497, 1
    %v2499 = vadd.f32 %v2497, %v2498
    %v2500 = vsel %vm154, %v2442, 0.0
    %v2501 = vrot.slane %v2500, 4
    %v2502 = vadd.f32 %v2500, %v2501
    %v2503 = vrot.slane %v2502, 2
    %v2504 = vadd.f32 %v2502, %v2503
    %v2505 = vrot.slane %v2504, 1
    %v2506 = vadd.f32 %v2504, %v2505
    %v2507 = vsel %vm154, %v2443, 0.0
    %v2508 = vrot.slane %v2507, 4
    %v2509 = vadd.f32 %v2507, %v2508
    %v2510 = vrot.slane %v2509, 2
    %v2511 = vadd.f32 %v2509, %v2510
    %v2512 = vrot.slane %v2511, 1
    %v2513 = vadd.f32 %v2511, %v2512
    %v2514 = vsel %vm154, %v2444, 0.0
    %v2515 = vrot.slane %v2514, 4
    %v2516 = vadd.f32 %v2514, %v2515
    %v2517 = vrot.slane %v2516, 2
    %v2518 = vadd.f32 %v2516, %v2517
    %v2519 = vrot.slane %v2518, 1
    %v2520 = vadd.f32 %v2518, %v2519
    %v2521 = vsel %vm154, %v2445, 0.0
    %v2522 = vrot.slane %v2521, 4
    %v2523 = vadd.f32 %v2521, %v2522
    %v2524 = vrot.slane %v2523, 2
    %v2525 = vadd.f32 %v2523, %v2524
    %v2526 = vrot.slane %v2525, 1
    %v2527 = vadd.f32 %v2525, %v2526
    %v2528 = vsel %vm154, %v2446, 0.0
    %v2529 = vrot.slane %v2528, 4
    %v2530 = vadd.f32 %v2528, %v2529
    %v2531 = vrot.slane %v2530, 2
    %v2532 = vadd.f32 %v2530, %v2531
    %v2533 = vrot.slane %v2532, 1
    %v2534 = vadd.f32 %v2532, %v2533
    %v2535 = vsel %vm154, %v2447, 0.0
    %v2536 = vrot.slane %v2535, 4
    %v2537 = vadd.f32 %v2535, %v2536
    %v2538 = vrot.slane %v2537, 2
    %v2539 = vadd.f32 %v2537, %v2538
    %v2540 = vrot.slane %v2539, 1
    %v2541 = vadd.f32 %v2539, %v2540
    %v2542 = vsel %vm154, %v2448, 0.0
    %v2543 = vrot.slane %v2542, 4
    %v2544 = vadd.f32 %v2542, %v2543
    %v2545 = vrot.slane %v2544, 2
    %v2546 = vadd.f32 %v2544, %v2545
    %v2547 = vrot.slane %v2546, 1
    %v2548 = vadd.f32 %v2546, %v2547
    %v2549 = vsel %vm154, %v2449, 0.0
    %v2550 = vrot.slane %v2549, 4
    %v2551 = vadd.f32 %v2549, %v2550
    %v2552 = vrot.slane %v2551, 2
    %v2553 = vadd.f32 %v2551, %v2552
    %v2554 = vrot.slane %v2553, 1
    %v2555 = vadd.f32 %v2553, %v2554
    %v2556 = vsel %vm154, %v2450, 0.0
    %v2557 = vrot.slane %v2556, 4
    %v2558 = vadd.f32 %v2556, %v2557
    %v2559 = vrot.slane %v2558, 2
    %v2560 = vadd.f32 %v2558, %v2559
    %v2561 = vrot.slane %v2560, 1
    %v2562 = vadd.f32 %v2560, %v2561
    %s2563 = scalar_lea.vmem [#allocation7], 32
    %v2564 = vld [vmem:[%s2563] sm:$0xff]
    %v2565 = vld [vmem:[%s2563 + $0x8] sm:$0xff]
    %v2566 = vld [vmem:[%s2563 + $0x10] sm:$0xff]
    %v2567 = vld [vmem:[%s2563 + $0x18] sm:$0xff]
    %s2568 = scalar_lea.vmem %s4, 1
    %v2569 = vld [vmem:[%s2568] sm:$0x1]
    %v2571 = vlaneseq
    %v2572 = vshrl.u32 %v2571, 7
    %v2573 = vsub.s32 0, %v2572
    %v2574 = vrot.slane %v2569, %v2573
    %v2592 = vsel %vm1294, %v2464, %v2457
    %v2593 = vsel %vm1296, %v2471, %v2592
    %v2594 = vsel %vm1298, %v2478, %v2593
    %v2595 = vsel %vm1300, %v2485, %v2594
    %v2596 = vsel %vm1302, %v2492, %v2595
    %v2597 = vsel %vm1304, %v2499, %v2596
    %v2598 = vsel %vm1306, %v2506, %v2597
    %v2599 = vsel %vm1294, %v2520, %v2513
    %v2600 = vsel %vm1296, %v2527, %v2599
    %v2601 = vsel %vm1298, %v2534, %v2600
    %v2602 = vsel %vm1300, %v2541, %v2601
    %v2603 = vsel %vm1302, %v2548, %v2602
    %v2604 = vsel %vm1304, %v2555, %v2603
    %v2605 = vsel %vm1306, %v2562, %v2604
    %v2606 = vsel %vm154, %v2598, 0
    %v2608 = vsel %vm154, %v2605, 0
    %2610 = vmatprep.subr.mxu0 0.0
    %2611 = vmatpush1.msra.mxu0 %v2564
    %2612 = vmatprep.subr.mxu0 0.0
    %2613 = vmatpush1.msra.mxu0 %v2565
    %2614 = vmatprep.subr.mxu0 0.0
    %2615 = vmatpush1.msra.mxu0 %v2566
    %2616 = vmatprep.subr.mxu0 0.0
    %2617 = vmatpush1.msra.mxu0 %v2567
    %2618 = vmatprep.subr.mxu0 0.0
    %2619 = vmatpush1.msra.mxu0 0.0
    %2620 = vmatprep.subr.mxu0 0.0
    %2621 = vmatpush1.msra.mxu0 0.0
    %2622 = vmatprep.subr.mxu0 0.0
    %2623 = vmatpush1.msra.mxu0 0.0
    %2624 = vmatprep.subr.mxu0 0.0
    %2625 = vmatpush1.msra.mxu0 0.0
    %2626 = vmatprep.subr.mxu0 0.0
    %2627 = vmatpush1.msra.mxu0 0.0
    %2628 = vmatprep.subr.mxu0 0.0
    %2629 = vmatpush1.msra.mxu0 0.0
    %2630 = vmatprep.subr.mxu0 0.0
    %2631 = vmatpush1.msra.mxu0 0.0
    %2632 = vmatprep.subr.mxu0 0.0
    %2633 = vmatpush1.msra.mxu0 0.0
    %2634 = vmatprep.subr.mxu0 0.0
    %2635 = vmatpush1.msra.mxu0 0.0
    %2636 = vmatprep.subr.mxu0 0.0
    %2637 = vmatpush1.msra.mxu0 0.0
    %2638 = vmatprep.subr.mxu0 0.0
    %2639 = vmatpush1.msra.mxu0 0.0
    %2640 = vmatprep.subr.mxu0 0.0
    %2641 = vmatpush1.msra.mxu0 0.0
    %2642 = vmatprep.subr.mxu0 0.0
    %2643 = vmatpush1.msra.mxu0 0.0
    %2644 = vmatprep.subr.mxu0 0.0
    %2645 = vmatpush1.msra.mxu0 0.0
    %2646 = vmatprep.subr.mxu0 0.0
    %2647 = vmatpush1.msra.mxu0 0.0
    %2648 = vmatprep.subr.mxu0 0.0
    %2649 = vmatpush1.msra.mxu0 0.0
    %2650 = vmatprep.subr.mxu0 0.0
    %2651 = vmatpush1.msra.mxu0 0.0
    %2652 = vmatprep.subr.mxu0 0.0
    %2653 = vmatpush1.msra.mxu0 0.0
    %2654 = vmatprep.subr.mxu0 0.0
    %2655 = vmatpush1.msra.mxu0 0.0
    %2656 = vmatprep.subr.mxu0 0.0
    %2657 = vmatpush1.msra.mxu0 0.0
    %2658 = vmatprep.subr.mxu0 0.0
    %2659 = vmatpush1.msra.mxu0 0.0
    %2660 = vmatprep.subr.mxu0 0.0
    %2661 = vmatpush1.msra.mxu0 0.0
    %2662 = vmatprep.subr.mxu0 0.0
    %2663 = vmatpush1.msra.mxu0 0.0
    %2664 = vmatprep.subr.mxu0 0.0
    %2665 = vmatpush1.msra.mxu0 0.0
    %2666 = vmatprep.subr.mxu0 0.0
    %2667 = vmatpush1.msra.mxu0 0.0
    %2668 = vmatprep.subr.mxu0 0.0
    %2669 = vmatpush1.msra.mxu0 0.0
    %2670 = vmatprep.subr.mxu0 0.0
    %2671 = vmatpush1.msra.mxu0 0.0
    %2672 = vmatprep.subr.mxu0 0.0
    %2673 = vmatpush1.msra.mxu0 0.0
    %2674 = vmatprep.mubr.f32.mxu0 0.0
    %2675 = vmatmul.mubr.f32.gmra.mrb[0].mxu0 %v2606
    %v2676 = vpop.f32.mrb[0].mxu0
    %v2677 = vadd.f32 %v2574, %v2676
    %v2678 = vpop.f32.mrb[0].mxu0
    %2679 = vmatprep.mubr.f32.mxu0 0.0
    %2680 = vmatmul.mubr.f32.gmra.mrb[0].mxu0 %v2608
    %v2681 = vpop.f32.mrb[0].mxu0
    %v2682 = vadd.f32 %v2574, %v2681
    %v2683 = vpop.f32.mrb[0].mxu0
    %2684 = vdwg.mxu0
    %v2685 = vadd.f32 %v2677, %v1437
    %v2686 = vadd.f32 %v2682, %v1438
    %v2687 = vsel %vm154, %v2685, 0.0
    %2688 = vadd.xlane.f32.xlu0 %v2687
    %v2689 = vpop.xlane.xlu0 %2688
    %v2690 = vsel %vm154, %v2686, 0.0
    %2691 = vadd.xlane.f32.xlu0 %v2690
    %v2692 = vpop.xlane.xlu0 %2691
    %v2693 = vmul.f32 %v2689, %v1402
    %v2694 = vmul.f32 %v2692, %v1402
    %v2695 = vmul.f32 %v2685, %v2685
    %v2696 = vmul.f32 %v2686, %v2686
    %v2697 = vsel %vm154, %v2695, 0.0
    %2698 = vadd.xlane.f32.xlu0 %v2697
    %v2699 = vpop.xlane.xlu0 %2698
    %v2700 = vsel %vm154, %v2696, 0.0
    %2701 = vadd.xlane.f32.xlu0 %v2700
    %v2702 = vpop.xlane.xlu0 %2701
    %v2703 = vmul.f32 %v2699, %v1402
    %v2704 = vmul.f32 %v2702, %v1402
    %v2705 = vmul.f32 %v2693, %v2693
    %v2706 = vmul.f32 %v2694, %v2694
    %v2707 = vsub.f32 %v2703, %v2705
    %v2708 = vsub.f32 %v2704, %v2706
    %v2709 = vsub.f32 %v2685, %v2693
    %v2710 = vsub.f32 %v2686, %v2694
    %v2711 = vadd.f32 %v2707, 1e-05
    %v2712 = vadd.f32 %v2708, 1e-05
    %v2713 = vrsqrt.pop %v2711
    %v2714 = vrsqrt.pop %v2712
    %v2715 = vmul.f32 %v2709, %v2713
    %v2716 = vmul.f32 %v2710, %v2714
    %v2717 = vmul.f32 %v2715, %v1430
    %v2718 = vmul.f32 %v2716, %v1430
    %v2719 = vadd.f32 %v2717, %v1436
    %v2720 = vadd.f32 %v2718, %v1436
    %s2721 = scalar_lea.vmem [#allocation5], 64
    %v2722 = vld [vmem:[%s2721] sm:$0xff]
    %v2723 = vld [vmem:[%s2721 + $0x8] sm:$0xff]
    %v2724 = vld [vmem:[%s2721 + $0x10] sm:$0xff]
    %v2725 = vld [vmem:[%s2721 + $0x18] sm:$0xff]
    %s2726 = scalar_lea.vmem %s2, 2
    %v2727 = vld [vmem:[%s2726] sm:$0x1]
    %v2729 = vlaneseq
    %v2730 = vshrl.u32 %v2729, 7
    %v2731 = vsub.s32 0, %v2730
    %v2732 = vrot.slane %v2727, %v2731
    %v2735 = vsel %vm154, %v2719, 0
    %v2738 = vsel %vm154, %v2720, 0
    %2740 = vmatprep.subr.mxu0 0.0
    %2741 = vmatpush1.msra.mxu0 %v2722
    %2742 = vmatprep.subr.mxu0 0.0
    %2743 = vmatpush1.msra.mxu0 %v2723
    %2744 = vmatprep.subr.mxu0 0.0
    %2745 = vmatpush1.msra.mxu0 %v2724
    %2746 = vmatprep.subr.mxu0 0.0
    %2747 = vmatpush1.msra.mxu0 %v2725
    %2748 = vmatprep.subr.mxu0 0.0
    %2749 = vmatpush1.msra.mxu0 0.0
    %2750 = vmatprep.subr.mxu0 0.0
    %2751 = vmatpush1.msra.mxu0 0.0
    %2752 = vmatprep.subr.mxu0 0.0
    %2753 = vmatpush1.msra.mxu0 0.0
    %2754 = vmatprep.subr.mxu0 0.0
    %2755 = vmatpush1.msra.mxu0 0.0
    %2756 = vmatprep.subr.mxu0 0.0
    %2757 = vmatpush1.msra.mxu0 0.0
    %2758 = vmatprep.subr.mxu0 0.0
    %2759 = vmatpush1.msra.mxu0 0.0
    %2760 = vmatprep.subr.mxu0 0.0
    %2761 = vmatpush1.msra.mxu0 0.0
    %2762 = vmatprep.subr.mxu0 0.0
    %2763 = vmatpush1.msra.mxu0 0.0
    %2764 = vmatprep.subr.mxu0 0.0
    %2765 = vmatpush1.msra.mxu0 0.0
    %2766 = vmatprep.subr.mxu0 0.0
    %2767 = vmatpush1.msra.mxu0 0.0
    %2768 = vmatprep.subr.mxu0 0.0
    %2769 = vmatpush1.msra.mxu0 0.0
    %2770 = vmatprep.subr.mxu0 0.0
    %2771 = vmatpush1.msra.mxu0 0.0
    %2772 = vmatprep.subr.mxu0 0.0
    %2773 = vmatpush1.msra.mxu0 0.0
    %2774 = vmatprep.subr.mxu0 0.0
    %2775 = vmatpush1.msra.mxu0 0.0
    %2776 = vmatprep.subr.mxu0 0.0
    %2777 = vmatpush1.msra.mxu0 0.0
    %2778 = vmatprep.subr.mxu0 0.0
    %2779 = vmatpush1.msra.mxu0 0.0
    %2780 = vmatprep.subr.mxu0 0.0
    %2781 = vmatpush1.msra.mxu0 0.0
    %2782 = vmatprep.subr.mxu0 0.0
    %2783 = vmatpush1.msra.mxu0 0.0
    %2784 = vmatprep.subr.mxu0 0.0
    %2785 = vmatpush1.msra.mxu0 0.0
    %2786 = vmatprep.subr.mxu0 0.0
    %2787 = vmatpush1.msra.mxu0 0.0
    %2788 = vmatprep.subr.mxu0 0.0
    %2789 = vmatpush1.msra.mxu0 0.0
    %2790 = vmatprep.subr.mxu0 0.0
    %2791 = vmatpush1.msra.mxu0 0.0
    %2792 = vmatprep.subr.mxu0 0.0
    %2793 = vmatpush1.msra.mxu0 0.0
    %2794 = vmatprep.subr.mxu0 0.0
    %2795 = vmatpush1.msra.mxu0 0.0
    %2796 = vmatprep.subr.mxu0 0.0
    %2797 = vmatpush1.msra.mxu0 0.0
    %2798 = vmatprep.subr.mxu0 0.0
    %2799 = vmatpush1.msra.mxu0 0.0
    %2800 = vmatprep.subr.mxu0 0.0
    %2801 = vmatpush1.msra.mxu0 0.0
    %2802 = vmatprep.subr.mxu0 0.0
    %2803 = vmatpush1.msra.mxu0 0.0
    %2804 = vmatprep.mubr.f32.mxu0 0.0
    %2805 = vmatmul.mubr.f32.gmra.mrb[0].mxu0 %v2735
    %v2806 = vpop.f32.mrb[0].mxu0
    %v2807 = vadd.f32 %v2732, %v2806
    %v2808 = vpop.f32.mrb[0].mxu0
    %2809 = vmatprep.mubr.f32.mxu0 0.0
    %2810 = vmatmul.mubr.f32.gmra.mrb[0].mxu0 %v2738
    %v2811 = vpop.f32.mrb[0].mxu0
    %v2812 = vadd.f32 %v2732, %v2811
    %v2813 = vpop.f32.mrb[0].mxu0
    %2814 = vdwg.mxu0
    %v2815 = vmul.f32 %v2807, 0.5
    %v2816 = vmul.f32 %v2812, 0.5
    %v2819 = vcombine.high %v2815, %v2815
    %v2821 = vunpack.c.l.s4 1966171168
    %v2822 = vunpack.c.0.s8 %v2821
    %v2823 = vlaneseq
    %v2824 = vshrl.u32 %v2823, 7
    %v2825 = vsub.s32 %v2822, %v2824
    %v2826 = vrot.slane %v2815, %v2825
    %v2828 = vunpack.c.l.s4 1966171168
    %v2829 = vunpack.c.0.s8 %v2828
    %v2830 = vlaneseq
    %v2831 = vshrl.u32 %v2830, 7
    %v2832 = vsub.s32 %v2829, %v2831
    %v2833 = vrot.slane %v2819, %v2832
    %v2834 = vcombine.high %v2826, %v2826
    %v2835 = vcombine.high %v2833, %v2833
    %v2837 = vunpack.c.l.s4 1966171168
    %v2838 = vunpack.c.0.s8 %v2837
    %v2839 = vlaneseq
    %v2840 = vshrl.u32 %v2839, 7
    %v2841 = vsub.s32 %v2838, %v2840
    %v2842 = vrot.slane %v2826, %v2841
    %v2844 = vunpack.c.l.s4 1966171168
    %v2845 = vunpack.c.0.s8 %v2844
    %v2846 = vlaneseq
    %v2847 = vshrl.u32 %v2846, 7
    %v2848 = vsub.s32 %v2845, %v2847
    %v2849 = vrot.slane %v2833, %v2848
    %v2851 = vunpack.c.l.s4 1966171168
    %v2852 = vunpack.c.0.s8 %v2851
    %v2853 = vlaneseq
    %v2854 = vshrl.u32 %v2853, 7
    %v2855 = vsub.s32 %v2852, %v2854
    %v2856 = vrot.slane %v2834, %v2855
    %v2858 = vunpack.c.l.s4 1966171168
    %v2859 = vunpack.c.0.s8 %v2858
    %v2860 = vlaneseq
    %v2861 = vshrl.u32 %v2860, 7
    %v2862 = vsub.s32 %v2859, %v2861
    %v2863 = vrot.slane %v2835, %v2862
    %v2864 = vcombine.high %v2842, %v2842
    %v2865 = vcombine.high %v2849, %v2849
    %v2866 = vcombine.high %v2856, %v2856
    %v2867 = vcombine.high %v2863, %v2863
    %v2868 = vcombine.high %v2816, %v2816
    %v2870 = vunpack.c.l.s4 1966171168
    %v2871 = vunpack.c.0.s8 %v2870
    %v2872 = vlaneseq
    %v2873 = vshrl.u32 %v2872, 7
    %v2874 = vsub.s32 %v2871, %v2873
    %v2875 = vrot.slane %v2816, %v2874
    %v2877 = vunpack.c.l.s4 1966171168
    %v2878 = vunpack.c.0.s8 %v2877
    %v2879 = vlaneseq
    %v2880 = vshrl.u32 %v2879, 7
    %v2881 = vsub.s32 %v2878, %v2880
    %v2882 = vrot.slane %v2868, %v2881
    %v2883 = vcombine.high %v2875, %v2875
    %v2884 = vcombine.high %v2882, %v2882
    %v2886 = vunpack.c.l.s4 1966171168
    %v2887 = vunpack.c.0.s8 %v2886
    %v2888 = vlaneseq
    %v2889 = vshrl.u32 %v2888, 7
    %v2890 = vsub.s32 %v2887, %v2889
    %v2891 = vrot.slane %v2875, %v2890
    %v2893 = vunpack.c.l.s4 1966171168
    %v2894 = vunpack.c.0.s8 %v2893
    %v2895 = vlaneseq
    %v2896 = vshrl.u32 %v2895, 7
    %v2897 = vsub.s32 %v2894, %v2896
    %v2898 = vrot.slane %v2882, %v2897
    %v2900 = vunpack.c.l.s4 1966171168
    %v2901 = vunpack.c.0.s8 %v2900
    %v2902 = vlaneseq
    %v2903 = vshrl.u32 %v2902, 7
    %v2904 = vsub.s32 %v2901, %v2903
    %v2905 = vrot.slane %v2883, %v2904
    %v2907 = vunpack.c.l.s4 1966171168
    %v2908 = vunpack.c.0.s8 %v2907
    %v2909 = vlaneseq
    %v2910 = vshrl.u32 %v2909, 7
    %v2911 = vsub.s32 %v2908, %v2910
    %v2912 = vrot.slane %v2884, %v2911
    %v2913 = vcombine.high %v2891, %v2891
    %v2914 = vcombine.high %v2898, %v2898
    %v2915 = vcombine.high %v2905, %v2905
    %v2916 = vcombine.high %v2912, %v2912
    %v2917 = vlaneseq
    %v2918 = vshrl.u32 %v2917, 7
    %v2919 = vsub.s32 0, %v2918
    %v2920 = vrot.slane %v2842, %v2919
    %v2921 = vlaneseq
    %v2922 = vshrl.u32 %v2921, 7
    %v2923 = vsub.s32 0, %v2922
    %v2924 = vrot.slane %v2856, %v2923
    %v2925 = vlaneseq
    %v2926 = vshrl.u32 %v2925, 7
    %v2927 = vsub.s32 0, %v2926
    %v2928 = vrot.slane %v2864, %v2927
    %v2929 = vlaneseq
    %v2930 = vshrl.u32 %v2929, 7
    %v2931 = vsub.s32 0, %v2930
    %v2932 = vrot.slane %v2866, %v2931
    %v2933 = vlaneseq
    %v2934 = vshrl.u32 %v2933, 7
    %v2935 = vsub.s32 0, %v2934
    %v2936 = vrot.slane %v2849, %v2935
    %v2937 = vlaneseq
    %v2938 = vshrl.u32 %v2937, 7
    %v2939 = vsub.s32 0, %v2938
    %v2940 = vrot.slane %v2863, %v2939
    %v2941 = vlaneseq
    %v2942 = vshrl.u32 %v2941, 7
    %v2943 = vsub.s32 0, %v2942
    %v2944 = vrot.slane %v2865, %v2943
    %v2945 = vlaneseq
    %v2946 = vshrl.u32 %v2945, 7
    %v2947 = vsub.s32 0, %v2946
    %v2948 = vrot.slane %v2867, %v2947
    %v2949 = vlaneseq
    %v2950 = vshrl.u32 %v2949, 7
    %v2951 = vsub.s32 0, %v2950
    %v2952 = vrot.slane %v2891, %v2951
    %v2953 = vlaneseq
    %v2954 = vshrl.u32 %v2953, 7
    %v2955 = vsub.s32 0, %v2954
    %v2956 = vrot.slane %v2905, %v2955
    %v2957 = vlaneseq
    %v2958 = vshrl.u32 %v2957, 7
    %v2959 = vsub.s32 0, %v2958
    %v2960 = vrot.slane %v2913, %v2959
    %v2961 = vlaneseq
    %v2962 = vshrl.u32 %v2961, 7
    %v2963 = vsub.s32 0, %v2962
    %v2964 = vrot.slane %v2915, %v2963
    %v2965 = vlaneseq
    %v2966 = vshrl.u32 %v2965, 7
    %v2967 = vsub.s32 0, %v2966
    %v2968 = vrot.slane %v2898, %v2967
    %v2969 = vlaneseq
    %v2970 = vshrl.u32 %v2969, 7
    %v2971 = vsub.s32 0, %v2970
    %v2972 = vrot.slane %v2912, %v2971
    %v2973 = vlaneseq
    %v2974 = vshrl.u32 %v2973, 7
    %v2975 = vsub.s32 0, %v2974
    %v2976 = vrot.slane %v2914, %v2975
    %v2977 = vlaneseq
    %v2978 = vshrl.u32 %v2977, 7
    %v2979 = vsub.s32 0, %v2978
    %v2980 = vrot.slane %v2916, %v2979
    %2999 = vrot.lane.b32.xlu0 %v2807, 96
    %v3000 = vpop.permute.xlu0 %2999
    %3001 = vrot.lane.b32.xlu0 %v2812, 96
    %v3002 = vpop.permute.xlu0 %3001
    %v3005 = vmul.f32 %v2920, %v3000
    %v3006 = vmul.f32 %v2924, %v3000
    %v3007 = vmul.f32 %v2928, %v3000
    %v3008 = vmul.f32 %v2932, %v3000
    %v3009 = vmul.f32 %v2936, %v3000
    %v3010 = vmul.f32 %v2940, %v3000
    %v3011 = vmul.f32 %v2944, %v3000
    %v3012 = vmul.f32 %v2948, %v3000
    %v3013 = vmul.f32 %v2952, %v3002
    %v3014 = vmul.f32 %v2956, %v3002
    %v3015 = vmul.f32 %v2960, %v3002
    %v3016 = vmul.f32 %v2964, %v3002
    %v3017 = vmul.f32 %v2968, %v3002
    %v3018 = vmul.f32 %v2972, %v3002
    %v3019 = vmul.f32 %v2976, %v3002
    %v3020 = vmul.f32 %v2980, %v3002
    %v3022 = vsel %vm154, %v3005, 0
    %v3025 = vsel %vm154, %v3006, 0
    %v3028 = vsel %vm154, %v3007, 0
    %v3031 = vsel %vm154, %v3008, 0
    %v3034 = vsel %vm154, %v3009, 0
    %v3037 = vsel %vm154, %v3010, 0
    %v3040 = vsel %vm154, %v3011, 0
    %v3043 = vsel %vm154, %v3012, 0
    %v3046 = vsel %vm154, %v3013, 0
    %v3049 = vsel %vm154, %v3014, 0
    %v3052 = vsel %vm154, %v3015, 0
    %v3055 = vsel %vm154, %v3016, 0
    %v3058 = vsel %vm154, %v3017, 0
    %v3061 = vsel %vm154, %v3018, 0
    %v3064 = vsel %vm154, %v3019, 0
    %v3067 = vsel %vm154, %v3020, 0
    %3069 = vmatprep.subr.mxu0 0.0
    %3070 = vmatpush1.msra.mxu0 %v132
    %3071 = vmatprep.subr.mxu0 0.0
    %3072 = vmatpush1.msra.mxu0 %v133
    %3073 = vmatprep.subr.mxu0 0.0
    %3074 = vmatpush1.msra.mxu0 %v134
    %3075 = vmatprep.subr.mxu0 0.0
    %3076 = vmatpush1.msra.mxu0 %v135
    %3077 = vmatprep.subr.mxu0 0.0
    %3078 = vmatpush1.msra.mxu0 0.0
    %3079 = vmatprep.subr.mxu0 0.0
    %3080 = vmatpush1.msra.mxu0 0.0
    %3081 = vmatprep.subr.mxu0 0.0
    %3082 = vmatpush1.msra.mxu0 0.0
    %3083 = vmatprep.subr.mxu0 0.0
    %3084 = vmatpush1.msra.mxu0 0.0
    %3085 = vmatprep.subr.mxu0 0.0
    %3086 = vmatpush1.msra.mxu0 0.0
    %3087 = vmatprep.subr.mxu0 0.0
    %3088 = vmatpush1.msra.mxu0 0.0
    %3089 = vmatprep.subr.mxu0 0.0
    %3090 = vmatpush1.msra.mxu0 0.0
    %3091 = vmatprep.subr.mxu0 0.0
    %3092 = vmatpush1.msra.mxu0 0.0
    %3093 = vmatprep.subr.mxu0 0.0
    %3094 = vmatpush1.msra.mxu0 0.0
    %3095 = vmatprep.subr.mxu0 0.0
    %3096 = vmatpush1.msra.mxu0 0.0
    %3097 = vmatprep.subr.mxu0 0.0
    %3098 = vmatpush1.msra.mxu0 0.0
    %3099 = vmatprep.subr.mxu0 0.0
    %3100 = vmatpush1.msra.mxu0 0.0
    %3101 = vmatprep.subr.mxu0 0.0
    %3102 = vmatpush1.msra.mxu0 0.0
    %3103 = vmatprep.subr.mxu0 0.0
    %3104 = vmatpush1.msra.mxu0 0.0
    %3105 = vmatprep.subr.mxu0 0.0
    %3106 = vmatpush1.msra.mxu0 0.0
    %3107 = vmatprep.subr.mxu0 0.0
    %3108 = vmatpush1.msra.mxu0 0.0
    %3109 = vmatprep.subr.mxu0 0.0
    %3110 = vmatpush1.msra.mxu0 0.0
    %3111 = vmatprep.subr.mxu0 0.0
    %3112 = vmatpush1.msra.mxu0 0.0
    %3113 = vmatprep.subr.mxu0 0.0
    %3114 = vmatpush1.msra.mxu0 0.0
    %3115 = vmatprep.subr.mxu0 0.0
    %3116 = vmatpush1.msra.mxu0 0.0
    %3117 = vmatprep.subr.mxu0 0.0
    %3118 = vmatpush1.msra.mxu0 0.0
    %3119 = vmatprep.subr.mxu0 0.0
    %3120 = vmatpush1.msra.mxu0 0.0
    %3121 = vmatprep.subr.mxu0 0.0
    %3122 = vmatpush1.msra.mxu0 0.0
    %3123 = vmatprep.subr.mxu0 0.0
    %3124 = vmatpush1.msra.mxu0 0.0
    %3125 = vmatprep.subr.mxu0 0.0
    %3126 = vmatpush1.msra.mxu0 0.0
    %3127 = vmatprep.subr.mxu0 0.0
    %3128 = vmatpush1.msra.mxu0 0.0
    %3129 = vmatprep.subr.mxu0 0.0
    %3130 = vmatpush1.msra.mxu0 0.0
    %3131 = vmatprep.subr.mxu0 0.0
    %3132 = vmatpush1.msra.mxu0 0.0
    %3133 = vmatprep.mubr.f32.mxu0 0.0
    %3134 = vmatmul.mubr.f32.gmra.mrb[0].mxu0 %v3022
    %v3135 = vpop.f32.mrb[0].mxu0
    %v3136 = vadd.f32 0.0, %v3135
    %v3137 = vpop.f32.mrb[0].mxu0
    %3138 = vmatprep.mubr.f32.mxu0 0.0
    %3139 = vmatmul.mubr.f32.gmra.mrb[0].mxu0 %v3025
    %v3140 = vpop.f32.mrb[0].mxu0
    %v3141 = vadd.f32 0.0, %v3140
    %v3142 = vpop.f32.mrb[0].mxu0
    %3143 = vmatprep.mubr.f32.mxu0 0.0
    %3144 = vmatmul.mubr.f32.gmra.mrb[0].mxu0 %v3028
    %v3145 = vpop.f32.mrb[0].mxu0
    %v3146 = vadd.f32 0.0, %v3145
    %v3147 = vpop.f32.mrb[0].mxu0
    %3148 = vmatprep.mubr.f32.mxu0 0.0
    %3149 = vmatmul.mubr.f32.gmra.mrb[0].mxu0 %v3031
    %v3150 = vpop.f32.mrb[0].mxu0
    %v3151 = vadd.f32 0.0, %v3150
    %v3152 = vpop.f32.mrb[0].mxu0
    %3153 = vmatprep.mubr.f32.mxu0 0.0
    %3154 = vmatmul.mubr.f32.gmra.mrb[0].mxu0 %v3034
    %v3155 = vpop.f32.mrb[0].mxu0
    %v3156 = vadd.f32 0.0, %v3155
    %v3157 = vpop.f32.mrb[0].mxu0
    %3158 = vmatprep.mubr.f32.mxu0 0.0
    %3159 = vmatmul.mubr.f32.gmra.mrb[0].mxu0 %v3037
    %v3160 = vpop.f32.mrb[0].mxu0
    %v3161 = vadd.f32 0.0, %v3160
    %v3162 = vpop.f32.mrb[0].mxu0
    %3163 = vmatprep.mubr.f32.mxu0 0.0
    %3164 = vmatmul.mubr.f32.gmra.mrb[0].mxu0 %v3040
    %v3165 = vpop.f32.mrb[0].mxu0
    %v3166 = vadd.f32 0.0, %v3165
    %v3167 = vpop.f32.mrb[0].mxu0
    %3168 = vmatprep.mubr.f32.mxu0 0.0
    %3169 = vmatmul.mubr.f32.gmra.mrb[0].mxu0 %v3043
    %v3170 = vpop.f32.mrb[0].mxu0
    %v3171 = vadd.f32 0.0, %v3170
    %v3172 = vpop.f32.mrb[0].mxu0
    %3173 = vmatprep.mubr.f32.mxu0 0.0
    %3174 = vmatmul.mubr.f32.gmra.mrb[0].mxu0 %v3046
    %v3175 = vpop.f32.mrb[0].mxu0
    %v3176 = vadd.f32 0.0, %v3175
    %v3177 = vpop.f32.mrb[0].mxu0
    %3178 = vmatprep.mubr.f32.mxu0 0.0
    %3179 = vmatmul.mubr.f32.gmra.mrb[0].mxu0 %v3049
    %v3180 = vpop.f32.mrb[0].mxu0
    %v3181 = vadd.f32 0.0, %v3180
    %v3182 = vpop.f32.mrb[0].mxu0
    %3183 = vmatprep.mubr.f32.mxu0 0.0
    %3184 = vmatmul.mubr.f32.gmra.mrb[0].mxu0 %v3052
    %v3185 = vpop.f32.mrb[0].mxu0
    %v3186 = vadd.f32 0.0, %v3185
    %v3187 = vpop.f32.mrb[0].mxu0
    %3188 = vmatprep.mubr.f32.mxu0 0.0
    %3189 = vmatmul.mubr.f32.gmra.mrb[0].mxu0 %v3055
    %v3190 = vpop.f32.mrb[0].mxu0
    %v3191 = vadd.f32 0.0, %v3190
    %v3192 = vpop.f32.mrb[0].mxu0
    %3193 = vmatprep.mubr.f32.mxu0 0.0
    %3194 = vmatmul.mubr.f32.gmra.mrb[0].mxu0 %v3058
    %v3195 = vpop.f32.mrb[0].mxu0
    %v3196 = vadd.f32 0.0, %v3195
    %v3197 = vpop.f32.mrb[0].mxu0
    %3198 = vmatprep.mubr.f32.mxu0 0.0
    %3199 = vmatmul.mubr.f32.gmra.mrb[0].mxu0 %v3061
    %v3200 = vpop.f32.mrb[0].mxu0
    %v3201 = vadd.f32 0.0, %v3200
    %v3202 = vpop.f32.mrb[0].mxu0
    %3203 = vmatprep.mubr.f32.mxu0 0.0
    %3204 = vmatmul.mubr.f32.gmra.mrb[0].mxu0 %v3064
    %v3205 = vpop.f32.mrb[0].mxu0
    %v3206 = vadd.f32 0.0, %v3205
    %v3207 = vpop.f32.mrb[0].mxu0
    %3208 = vmatprep.mubr.f32.mxu0 0.0
    %3209 = vmatmul.mubr.f32.gmra.mrb[0].mxu0 %v3067
    %v3210 = vpop.f32.mrb[0].mxu0
    %v3211 = vadd.f32 0.0, %v3210
    %v3212 = vpop.f32.mrb[0].mxu0
    %3213 = vdwg.mxu0
    %v3214 = vsel %vm635, %v3136, -inf
    %v3215 = vrot.slane %v3214, 4
    %v3216 = vmax.f32 %v3214, %v3215
    %v3217 = vrot.slane %v3216, 2
    %v3218 = vmax.f32 %v3216, %v3217
    %v3219 = vrot.slane %v3218, 1
    %v3220 = vmax.f32 %v3218, %v3219
    %v3221 = vsel %vm635, %v3141, -inf
    %v3222 = vrot.slane %v3221, 4
    %v3223 = vmax.f32 %v3221, %v3222
    %v3224 = vrot.slane %v3223, 2
    %v3225 = vmax.f32 %v3223, %v3224
    %v3226 = vrot.slane %v3225, 1
    %v3227 = vmax.f32 %v3225, %v3226
    %v3228 = vsel %vm635, %v3146, -inf
    %v3229 = vrot.slane %v3228, 4
    %v3230 = vmax.f32 %v3228, %v3229
    %v3231 = vrot.slane %v3230, 2
    %v3232 = vmax.f32 %v3230, %v3231
    %v3233 = vrot.slane %v3232, 1
    %v3234 = vmax.f32 %v3232, %v3233
    %v3235 = vsel %vm635, %v3151, -inf
    %v3236 = vrot.slane %v3235, 4
    %v3237 = vmax.f32 %v3235, %v3236
    %v3238 = vrot.slane %v3237, 2
    %v3239 = vmax.f32 %v3237, %v3238
    %v3240 = vrot.slane %v3239, 1
    %v3241 = vmax.f32 %v3239, %v3240
    %v3242 = vsel %vm635, %v3156, -inf
    %v3243 = vrot.slane %v3242, 4
    %v3244 = vmax.f32 %v3242, %v3243
    %v3245 = vrot.slane %v3244, 2
    %v3246 = vmax.f32 %v3244, %v3245
    %v3247 = vrot.slane %v3246, 1
    %v3248 = vmax.f32 %v3246, %v3247
    %v3249 = vsel %vm635, %v3161, -inf
    %v3250 = vrot.slane %v3249, 4
    %v3251 = vmax.f32 %v3249, %v3250
    %v3252 = vrot.slane %v3251, 2
    %v3253 = vmax.f32 %v3251, %v3252
    %v3254 = vrot.slane %v3253, 1
    %v3255 = vmax.f32 %v3253, %v3254
    %v3256 = vsel %vm635, %v3166, -inf
    %v3257 = vrot.slane %v3256, 4
    %v3258 = vmax.f32 %v3256, %v3257
    %v3259 = vrot.slane %v3258, 2
    %v3260 = vmax.f32 %v3258, %v3259
    %v3261 = vrot.slane %v3260, 1
    %v3262 = vmax.f32 %v3260, %v3261
    %v3263 = vsel %vm635, %v3171, -inf
    %v3264 = vrot.slane %v3263, 4
    %v3265 = vmax.f32 %v3263, %v3264
    %v3266 = vrot.slane %v3265, 2
    %v3267 = vmax.f32 %v3265, %v3266
    %v3268 = vrot.slane %v3267, 1
    %v3269 = vmax.f32 %v3267, %v3268
    %v3270 = vsel %vm635, %v3176, -inf
    %v3271 = vrot.slane %v3270, 4
    %v3272 = vmax.f32 %v3270, %v3271
    %v3273 = vrot.slane %v3272, 2
    %v3274 = vmax.f32 %v3272, %v3273
    %v3275 = vrot.slane %v3274, 1
    %v3276 = vmax.f32 %v3274, %v3275
    %v3277 = vsel %vm635, %v3181, -inf
    %v3278 = vrot.slane %v3277, 4
    %v3279 = vmax.f32 %v3277, %v3278
    %v3280 = vrot.slane %v3279, 2
    %v3281 = vmax.f32 %v3279, %v3280
    %v3282 = vrot.slane %v3281, 1
    %v3283 = vmax.f32 %v3281, %v3282
    %v3284 = vsel %vm635, %v3186, -inf
    %v3285 = vrot.slane %v3284, 4
    %v3286 = vmax.f32 %v3284, %v3285
    %v3287 = vrot.slane %v3286, 2
    %v3288 = vmax.f32 %v3286, %v3287
    %v3289 = vrot.slane %v3288, 1
    %v3290 = vmax.f32 %v3288, %v3289
    %v3291 = vsel %vm635, %v3191, -inf
    %v3292 = vrot.slane %v3291, 4
    %v3293 = vmax.f32 %v3291, %v3292
    %v3294 = vrot.slane %v3293, 2
    %v3295 = vmax.f32 %v3293, %v3294
    %v3296 = vrot.slane %v3295, 1
    %v3297 = vmax.f32 %v3295, %v3296
    %v3298 = vsel %vm635, %v3196, -inf
    %v3299 = vrot.slane %v3298, 4
    %v3300 = vmax.f32 %v3298, %v3299
    %v3301 = vrot.slane %v3300, 2
    %v3302 = vmax.f32 %v3300, %v3301
    %v3303 = vrot.slane %v3302, 1
    %v3304 = vmax.f32 %v3302, %v3303
    %v3305 = vsel %vm635, %v3201, -inf
    %v3306 = vrot.slane %v3305, 4
    %v3307 = vmax.f32 %v3305, %v3306
    %v3308 = vrot.slane %v3307, 2
    %v3309 = vmax.f32 %v3307, %v3308
    %v3310 = vrot.slane %v3309, 1
    %v3311 = vmax.f32 %v3309, %v3310
    %v3312 = vsel %vm635, %v3206, -inf
    %v3313 = vrot.slane %v3312, 4
    %v3314 = vmax.f32 %v3312, %v3313
    %v3315 = vrot.slane %v3314, 2
    %v3316 = vmax.f32 %v3314, %v3315
    %v3317 = vrot.slane %v3316, 1
    %v3318 = vmax.f32 %v3316, %v3317
    %v3319 = vsel %vm635, %v3211, -inf
    %v3320 = vrot.slane %v3319, 4
    %v3321 = vmax.f32 %v3319, %v3320
    %v3322 = vrot.slane %v3321, 2
    %v3323 = vmax.f32 %v3321, %v3322
    %v3324 = vrot.slane %v3323, 1
    %v3325 = vmax.f32 %v3323, %v3324
    %v3326 = vsub.f32 %v3136, %v3220
    %v3327 = vsub.f32 %v3141, %v3227
    %v3328 = vsub.f32 %v3146, %v3234
    %v3329 = vsub.f32 %v3151, %v3241
    %v3330 = vsub.f32 %v3156, %v3248
    %v3331 = vsub.f32 %v3161, %v3255
    %v3332 = vsub.f32 %v3166, %v3262
    %v3333 = vsub.f32 %v3171, %v3269
    %v3334 = vsub.f32 %v3176, %v3276
    %v3335 = vsub.f32 %v3181, %v3283
    %v3336 = vsub.f32 %v3186, %v3290
    %v3337 = vsub.f32 %v3191, %v3297
    %v3338 = vsub.f32 %v3196, %v3304
    %v3339 = vsub.f32 %v3201, %v3311
    %v3340 = vsub.f32 %v3206, %v3318
    %v3341 = vsub.f32 %v3211, %v3325
    %v3342 = vmul.f32 %v3326, 1.442695
    %v3343 = vpow.pop %v3342
    %v3344 = vmul.f32 %v3327, 1.442695
    %v3345 = vpow.pop %v3344
    %v3346 = vmul.f32 %v3328, 1.442695
    %v3347 = vpow.pop %v3346
    %v3348 = vmul.f32 %v3329, 1.442695
    %v3349 = vpow.pop %v3348
    %v3350 = vmul.f32 %v3330, 1.442695
    %v3351 = vpow.pop %v3350
    %v3352 = vmul.f32 %v3331, 1.442695
    %v3353 = vpow.pop %v3352
    %v3354 = vmul.f32 %v3332, 1.442695
    %v3355 = vpow.pop %v3354
    %v3356 = vmul.f32 %v3333, 1.442695
    %v3357 = vpow.pop %v3356
    %v3358 = vmul.f32 %v3334, 1.442695
    %v3359 = vpow.pop %v3358
    %v3360 = vmul.f32 %v3335, 1.442695
    %v3361 = vpow.pop %v3360
    %v3362 = vmul.f32 %v3336, 1.442695
    %v3363 = vpow.pop %v3362
    %v3364 = vmul.f32 %v3337, 1.442695
    %v3365 = vpow.pop %v3364
    %v3366 = vmul.f32 %v3338, 1.442695
    %v3367 = vpow.pop %v3366
    %v3368 = vmul.f32 %v3339, 1.442695
    %v3369 = vpow.pop %v3368
    %v3370 = vmul.f32 %v3340, 1.442695
    %v3371 = vpow.pop %v3370
    %v3372 = vmul.f32 %v3341, 1.442695
    %v3373 = vpow.pop %v3372
    %v3374 = vsel %vm635, %v3343, 0.0
    %v3375 = vrot.slane %v3374, 4
    %v3376 = vadd.f32 %v3374, %v3375
    %v3377 = vrot.slane %v3376, 2
    %v3378 = vadd.f32 %v3376, %v3377
    %v3379 = vrot.slane %v3378, 1
    %v3380 = vadd.f32 %v3378, %v3379
    %v3381 = vsel %vm635, %v3345, 0.0
    %v3382 = vrot.slane %v3381, 4
    %v3383 = vadd.f32 %v3381, %v3382
    %v3384 = vrot.slane %v3383, 2
    %v3385 = vadd.f32 %v3383, %v3384
    %v3386 = vrot.slane %v3385, 1
    %v3387 = vadd.f32 %v3385, %v3386
    %v3388 = vsel %vm635, %v3347, 0.0
    %v3389 = vrot.slane %v3388, 4
    %v3390 = vadd.f32 %v3388, %v3389
    %v3391 = vrot.slane %v3390, 2
    %v3392 = vadd.f32 %v3390, %v3391
    %v3393 = vrot.slane %v3392, 1
    %v3394 = vadd.f32 %v3392, %v3393
    %v3395 = vsel %vm635, %v3349, 0.0
    %v3396 = vrot.slane %v3395, 4
    %v3397 = vadd.f32 %v3395, %v3396
    %v3398 = vrot.slane %v3397, 2
    %v3399 = vadd.f32 %v3397, %v3398
    %v3400 = vrot.slane %v3399, 1
    %v3401 = vadd.f32 %v3399, %v3400
    %v3402 = vsel %vm635, %v3351, 0.0
    %v3403 = vrot.slane %v3402, 4
    %v3404 = vadd.f32 %v3402, %v3403
    %v3405 = vrot.slane %v3404, 2
    %v3406 = vadd.f32 %v3404, %v3405
    %v3407 = vrot.slane %v3406, 1
    %v3408 = vadd.f32 %v3406, %v3407
    %v3409 = vsel %vm635, %v3353, 0.0
    %v3410 = vrot.slane %v3409, 4
    %v3411 = vadd.f32 %v3409, %v3410
    %v3412 = vrot.slane %v3411, 2
    %v3413 = vadd.f32 %v3411, %v3412
    %v3414 = vrot.slane %v3413, 1
    %v3415 = vadd.f32 %v3413, %v3414
    %v3416 = vsel %vm635, %v3355, 0.0
    %v3417 = vrot.slane %v3416, 4
    %v3418 = vadd.f32 %v3416, %v3417
    %v3419 = vrot.slane %v3418, 2
    %v3420 = vadd.f32 %v3418, %v3419
    %v3421 = vrot.slane %v3420, 1
    %v3422 = vadd.f32 %v3420, %v3421
    %v3423 = vsel %vm635, %v3357, 0.0
    %v3424 = vrot.slane %v3423, 4
    %v3425 = vadd.f32 %v3423, %v3424
    %v3426 = vrot.slane %v3425, 2
    %v3427 = vadd.f32 %v3425, %v3426
    %v3428 = vrot.slane %v3427, 1
    %v3429 = vadd.f32 %v3427, %v3428
    %v3430 = vsel %vm635, %v3359, 0.0
    %v3431 = vrot.slane %v3430, 4
    %v3432 = vadd.f32 %v3430, %v3431
    %v3433 = vrot.slane %v3432, 2
    %v3434 = vadd.f32 %v3432, %v3433
    %v3435 = vrot.slane %v3434, 1
    %v3436 = vadd.f32 %v3434, %v3435
    %v3437 = vsel %vm635, %v3361, 0.0
    %v3438 = vrot.slane %v3437, 4
    %v3439 = vadd.f32 %v3437, %v3438
    %v3440 = vrot.slane %v3439, 2
    %v3441 = vadd.f32 %v3439, %v3440
    %v3442 = vrot.slane %v3441, 1
    %v3443 = vadd.f32 %v3441, %v3442
    %v3444 = vsel %vm635, %v3363, 0.0
    %v3445 = vrot.slane %v3444, 4
    %v3446 = vadd.f32 %v3444, %v3445
    %v3447 = vrot.slane %v3446, 2
    %v3448 = vadd.f32 %v3446, %v3447
    %v3449 = vrot.slane %v3448, 1
    %v3450 = vadd.f32 %v3448, %v3449
    %v3451 = vsel %vm635, %v3365, 0.0
    %v3452 = vrot.slane %v3451, 4
    %v3453 = vadd.f32 %v3451, %v3452
    %v3454 = vrot.slane %v3453, 2
    %v3455 = vadd.f32 %v3453, %v3454
    %v3456 = vrot.slane %v3455, 1
    %v3457 = vadd.f32 %v3455, %v3456
    %v3458 = vsel %vm635, %v3367, 0.0
    %v3459 = vrot.slane %v3458, 4
    %v3460 = vadd.f32 %v3458, %v3459
    %v3461 = vrot.slane %v3460, 2
    %v3462 = vadd.f32 %v3460, %v3461
    %v3463 = vrot.slane %v3462, 1
    %v3464 = vadd.f32 %v3462, %v3463
    %v3465 = vsel %vm635, %v3369, 0.0
    %v3466 = vrot.slane %v3465, 4
    %v3467 = vadd.f32 %v3465, %v3466
    %v3468 = vrot.slane %v3467, 2
    %v3469 = vadd.f32 %v3467, %v3468
    %v3470 = vrot.slane %v3469, 1
    %v3471 = vadd.f32 %v3469, %v3470
    %v3472 = vsel %vm635, %v3371, 0.0
    %v3473 = vrot.slane %v3472, 4
    %v3474 = vadd.f32 %v3472, %v3473
    %v3475 = vrot.slane %v3474, 2
    %v3476 = vadd.f32 %v3474, %v3475
    %v3477 = vrot.slane %v3476, 1
    %v3478 = vadd.f32 %v3476, %v3477
    %v3479 = vsel %vm635, %v3373, 0.0
    %v3480 = vrot.slane %v3479, 4
    %v3481 = vadd.f32 %v3479, %v3480
    %v3482 = vrot.slane %v3481, 2
    %v3483 = vadd.f32 %v3481, %v3482
    %v3484 = vrot.slane %v3483, 1
    %v3485 = vadd.f32 %v3483, %v3484
    %v3486 = vrcp.pop %v3380
    %v3487 = vrcp.pop %v3387
    %v3488 = vrcp.pop %v3394
    %v3489 = vrcp.pop %v3401
    %v3490 = vrcp.pop %v3408
    %v3491 = vrcp.pop %v3415
    %v3492 = vrcp.pop %v3422
    %v3493 = vrcp.pop %v3429
    %v3494 = vrcp.pop %v3436
    %v3495 = vrcp.pop %v3443
    %v3496 = vrcp.pop %v3450
    %v3497 = vrcp.pop %v3457
    %v3498 = vrcp.pop %v3464
    %v3499 = vrcp.pop %v3471
    %v3500 = vrcp.pop %v3478
    %v3501 = vrcp.pop %v3485
    %v3502 = vmul.f32 %v3343, %v3486
    %v3503 = vmul.f32 %v3345, %v3487
    %v3504 = vmul.f32 %v3347, %v3488
    %v3505 = vmul.f32 %v3349, %v3489
    %v3506 = vmul.f32 %v3351, %v3490
    %v3507 = vmul.f32 %v3353, %v3491
    %v3508 = vmul.f32 %v3355, %v3492
    %v3509 = vmul.f32 %v3357, %v3493
    %v3510 = vmul.f32 %v3359, %v3494
    %v3511 = vmul.f32 %v3361, %v3495
    %v3512 = vmul.f32 %v3363, %v3496
    %v3513 = vmul.f32 %v3365, %v3497
    %v3514 = vmul.f32 %v3367, %v3498
    %v3515 = vmul.f32 %v3369, %v3499
    %v3516 = vmul.f32 %v3371, %v3500
    %v3517 = vmul.f32 %v3373, %v3501
    %v3519 = vsel %vm635, %v3502, 0
    %v3522 = vsel %vm635, %v3503, 0
    %v3525 = vsel %vm635, %v3504, 0
    %v3528 = vsel %vm635, %v3505, 0
    %v3531 = vsel %vm635, %v3506, 0
    %v3534 = vsel %vm635, %v3507, 0
    %v3537 = vsel %vm635, %v3508, 0
    %v3540 = vsel %vm635, %v3509, 0
    %v3543 = vsel %vm635, %v3510, 0
    %v3546 = vsel %vm635, %v3511, 0
    %v3549 = vsel %vm635, %v3512, 0
    %v3552 = vsel %vm635, %v3513, 0
    %v3555 = vsel %vm635, %v3514, 0
    %v3558 = vsel %vm635, %v3515, 0
    %v3561 = vsel %vm635, %v3516, 0
    %v3564 = vsel %vm635, %v3517, 0
    %3566 = vmatprep.subr.mxu0 0.0
    %3567 = vmatpush1.msra.mxu0 %v142
    %3568 = vmatprep.subr.mxu0 0.0
    %3569 = vmatpush1.msra.mxu0 0.0
    %3570 = vmatprep.subr.mxu0 0.0
    %3571 = vmatpush1.msra.mxu0 0.0
    %3572 = vmatprep.subr.mxu0 0.0
    %3573 = vmatpush1.msra.mxu0 0.0
    %3574 = vmatprep.subr.mxu0 0.0
    %3575 = vmatpush1.msra.mxu0 0.0
    %3576 = vmatprep.subr.mxu0 0.0
    %3577 = vmatpush1.msra.mxu0 0.0
    %3578 = vmatprep.subr.mxu0 0.0
    %3579 = vmatpush1.msra.mxu0 0.0
    %3580 = vmatprep.subr.mxu0 0.0
    %3581 = vmatpush1.msra.mxu0 0.0
    %3582 = vmatprep.subr.mxu0 0.0
    %3583 = vmatpush1.msra.mxu0 0.0
    %3584 = vmatprep.subr.mxu0 0.0
    %3585 = vmatpush1.msra.mxu0 0.0
    %3586 = vmatprep.subr.mxu0 0.0
    %3587 = vmatpush1.msra.mxu0 0.0
    %3588 = vmatprep.subr.mxu0 0.0
    %3589 = vmatpush1.msra.mxu0 0.0
    %3590 = vmatprep.subr.mxu0 0.0
    %3591 = vmatpush1.msra.mxu0 0.0
    %3592 = vmatprep.subr.mxu0 0.0
    %3593 = vmatpush1.msra.mxu0 0.0
    %3594 = vmatprep.subr.mxu0 0.0
    %3595 = vmatpush1.msra.mxu0 0.0
    %3596 = vmatprep.subr.mxu0 0.0
    %3597 = vmatpush1.msra.mxu0 0.0
    %3598 = vmatprep.subr.mxu0 0.0
    %3599 = vmatpush1.msra.mxu0 0.0
    %3600 = vmatprep.subr.mxu0 0.0
    %3601 = vmatpush1.msra.mxu0 0.0
    %3602 = vmatprep.subr.mxu0 0.0
    %3603 = vmatpush1.msra.mxu0 0.0
    %3604 = vmatprep.subr.mxu0 0.0
    %3605 = vmatpush1.msra.mxu0 0.0
    %3606 = vmatprep.subr.mxu0 0.0
    %3607 = vmatpush1.msra.mxu0 0.0
    %3608 = vmatprep.subr.mxu0 0.0
    %3609 = vmatpush1.msra.mxu0 0.0
    %3610 = vmatprep.subr.mxu0 0.0
    %3611 = vmatpush1.msra.mxu0 0.0
    %3612 = vmatprep.subr.mxu0 0.0
    %3613 = vmatpush1.msra.mxu0 0.0
    %3614 = vmatprep.subr.mxu0 0.0
    %3615 = vmatpush1.msra.mxu0 0.0
    %3616 = vmatprep.subr.mxu0 0.0
    %3617 = vmatpush1.msra.mxu0 0.0
    %3618 = vmatprep.subr.mxu0 0.0
    %3619 = vmatpush1.msra.mxu0 0.0
    %3620 = vmatprep.subr.mxu0 0.0
    %3621 = vmatpush1.msra.mxu0 0.0
    %3622 = vmatprep.subr.mxu0 0.0
    %3623 = vmatpush1.msra.mxu0 0.0
    %3624 = vmatprep.subr.mxu0 0.0
    %3625 = vmatpush1.msra.mxu0 0.0
    %3626 = vmatprep.subr.mxu0 0.0
    %3627 = vmatpush1.msra.mxu0 0.0
    %3628 = vmatprep.subr.mxu0 0.0
    %3629 = vmatpush1.msra.mxu0 0.0
    %3630 = vmatprep.mubr.f32.mxu0 0.0
    %3631 = vmatmul.mubr.f32.gmra.mrb[0].mxu0 %v3519
    %v3632 = vpop.f32.mrb[0].mxu0
    %v3633 = vadd.f32 0.0, %v3632
    %v3634 = vpop.f32.mrb[0].mxu0
    %3635 = vmatprep.mubr.f32.mxu0 0.0
    %3636 = vmatmul.mubr.f32.gmra.mrb[0].mxu0 %v3522
    %v3637 = vpop.f32.mrb[0].mxu0
    %v3638 = vadd.f32 0.0, %v3637
    %v3639 = vpop.f32.mrb[0].mxu0
    %3640 = vmatprep.mubr.f32.mxu0 0.0
    %3641 = vmatmul.mubr.f32.gmra.mrb[0].mxu0 %v3525
    %v3642 = vpop.f32.mrb[0].mxu0
    %v3643 = vadd.f32 0.0, %v3642
    %v3644 = vpop.f32.mrb[0].mxu0
    %3645 = vmatprep.mubr.f32.mxu0 0.0
    %3646 = vmatmul.mubr.f32.gmra.mrb[0].mxu0 %v3528
    %v3647 = vpop.f32.mrb[0].mxu0
    %v3648 = vadd.f32 0.0, %v3647
    %v3649 = vpop.f32.mrb[0].mxu0
    %3650 = vmatprep.mubr.f32.mxu0 0.0
    %3651 = vmatmul.mubr.f32.gmra.mrb[0].mxu0 %v3531
    %v3652 = vpop.f32.mrb[0].mxu0
    %v3653 = vadd.f32 0.0, %v3652
    %v3654 = vpop.f32.mrb[0].mxu0
    %3655 = vmatprep.mubr.f32.mxu0 0.0
    %3656 = vmatmul.mubr.f32.gmra.mrb[0].mxu0 %v3534
    %v3657 = vpop.f32.mrb[0].mxu0
    %v3658 = vadd.f32 0.0, %v3657
    %v3659 = vpop.f32.mrb[0].mxu0
    %3660 = vmatprep.mubr.f32.mxu0 0.0
    %3661 = vmatmul.mubr.f32.gmra.mrb[0].mxu0 %v3537
    %v3662 = vpop.f32.mrb[0].mxu0
    %v3663 = vadd.f32 0.0, %v3662
    %v3664 = vpop.f32.mrb[0].mxu0
    %3665 = vmatprep.mubr.f32.mxu0 0.0
    %3666 = vmatmul.mubr.f32.gmra.mrb[0].mxu0 %v3540
    %v3667 = vpop.f32.mrb[0].mxu0
    %v3668 = vadd.f32 0.0, %v3667
    %v3669 = vpop.f32.mrb[0].mxu0
    %3670 = vmatprep.mubr.f32.mxu0 0.0
    %3671 = vmatmul.mubr.f32.gmra.mrb[0].mxu0 %v3543
    %v3672 = vpop.f32.mrb[0].mxu0
    %v3673 = vadd.f32 0.0, %v3672
    %v3674 = vpop.f32.mrb[0].mxu0
    %3675 = vmatprep.mubr.f32.mxu0 0.0
    %3676 = vmatmul.mubr.f32.gmra.mrb[0].mxu0 %v3546
    %v3677 = vpop.f32.mrb[0].mxu0
    %v3678 = vadd.f32 0.0, %v3677
    %v3679 = vpop.f32.mrb[0].mxu0
    %3680 = vmatprep.mubr.f32.mxu0 0.0
    %3681 = vmatmul.mubr.f32.gmra.mrb[0].mxu0 %v3549
    %v3682 = vpop.f32.mrb[0].mxu0
    %v3683 = vadd.f32 0.0, %v3682
    %v3684 = vpop.f32.mrb[0].mxu0
    %3685 = vmatprep.mubr.f32.mxu0 0.0
    %3686 = vmatmul.mubr.f32.gmra.mrb[0].mxu0 %v3552
    %v3687 = vpop.f32.mrb[0].mxu0
    %v3688 = vadd.f32 0.0, %v3687
    %v3689 = vpop.f32.mrb[0].mxu0
    %3690 = vmatprep.mubr.f32.mxu0 0.0
    %3691 = vmatmul.mubr.f32.gmra.mrb[0].mxu0 %v3555
    %v3692 = vpop.f32.mrb[0].mxu0
    %v3693 = vadd.f32 0.0, %v3692
    %v3694 = vpop.f32.mrb[0].mxu0
    %3695 = vmatprep.mubr.f32.mxu0 0.0
    %3696 = vmatmul.mubr.f32.gmra.mrb[0].mxu0 %v3558
    %v3697 = vpop.f32.mrb[0].mxu0
    %v3698 = vadd.f32 0.0, %v3697
    %v3699 = vpop.f32.mrb[0].mxu0
    %3700 = vmatprep.mubr.f32.mxu0 0.0
    %3701 = vmatmul.mubr.f32.gmra.mrb[0].mxu0 %v3561
    %v3702 = vpop.f32.mrb[0].mxu0
    %v3703 = vadd.f32 0.0, %v3702
    %v3704 = vpop.f32.mrb[0].mxu0
    %3705 = vmatprep.mubr.f32.mxu0 0.0
    %3706 = vmatmul.mubr.f32.gmra.mrb[0].mxu0 %v3564
    %v3707 = vpop.f32.mrb[0].mxu0
    %v3708 = vadd.f32 0.0, %v3707
    %v3709 = vpop.f32.mrb[0].mxu0
    %3710 = vdwg.mxu0
    %3711 = vrot.lane.b32.xlu0 %v2807, 64
    %v3712 = vpop.permute.xlu0 %3711
    %3713 = vrot.lane.b32.xlu0 %v2812, 64
    %v3714 = vpop.permute.xlu0 %3713
    %v3717 = vmul.f32 %v3633, %v3712
    %v3718 = vmul.f32 %v3638, %v3712
    %v3719 = vmul.f32 %v3643, %v3712
    %v3720 = vmul.f32 %v3648, %v3712
    %v3721 = vmul.f32 %v3653, %v3712
    %v3722 = vmul.f32 %v3658, %v3712
    %v3723 = vmul.f32 %v3663, %v3712
    %v3724 = vmul.f32 %v3668, %v3712
    %v3725 = vmul.f32 %v3673, %v3714
    %v3726 = vmul.f32 %v3678, %v3714
    %v3727 = vmul.f32 %v3683, %v3714
    %v3728 = vmul.f32 %v3688, %v3714
    %v3729 = vmul.f32 %v3693, %v3714
    %v3730 = vmul.f32 %v3698, %v3714
    %v3731 = vmul.f32 %v3703, %v3714
    %v3732 = vmul.f32 %v3708, %v3714
    %v3733 = vsel %vm154, %v3717, 0.0
    %v3734 = vrot.slane %v3733, 4
    %v3735 = vadd.f32 %v3733, %v3734
    %v3736 = vrot.slane %v3735, 2
    %v3737 = vadd.f32 %v3735, %v3736
    %v3738 = vrot.slane %v3737, 1
    %v3739 = vadd.f32 %v3737, %v3738
    %v3740 = vsel %vm154, %v3718, 0.0
    %v3741 = vrot.slane %v3740, 4
    %v3742 = vadd.f32 %v3740, %v3741
    %v3743 = vrot.slane %v3742, 2
    %v3744 = vadd.f32 %v3742, %v3743
    %v3745 = vrot.slane %v3744, 1
    %v3746 = vadd.f32 %v3744, %v3745
    %v3747 = vsel %vm154, %v3719, 0.0
    %v3748 = vrot.slane %v3747, 4
    %v3749 = vadd.f32 %v3747, %v3748
    %v3750 = vrot.slane %v3749, 2
    %v3751 = vadd.f32 %v3749, %v3750
    %v3752 = vrot.slane %v3751, 1
    %v3753 = vadd.f32 %v3751, %v3752
    %v3754 = vsel %vm154, %v3720, 0.0
    %v3755 = vrot.slane %v3754, 4
    %v3756 = vadd.f32 %v3754, %v3755
    %v3757 = vrot.slane %v3756, 2
    %v3758 = vadd.f32 %v3756, %v3757
    %v3759 = vrot.slane %v3758, 1
    %v3760 = vadd.f32 %v3758, %v3759
    %v3761 = vsel %vm154, %v3721, 0.0
    %v3762 = vrot.slane %v3761, 4
    %v3763 = vadd.f32 %v3761, %v3762
    %v3764 = vrot.slane %v3763, 2
    %v3765 = vadd.f32 %v3763, %v3764
    %v3766 = vrot.slane %v3765, 1
    %v3767 = vadd.f32 %v3765, %v3766
    %v3768 = vsel %vm154, %v3722, 0.0
    %v3769 = vrot.slane %v3768, 4
    %v3770 = vadd.f32 %v3768, %v3769
    %v3771 = vrot.slane %v3770, 2
    %v3772 = vadd.f32 %v3770, %v3771
    %v3773 = vrot.slane %v3772, 1
    %v3774 = vadd.f32 %v3772, %v3773
    %v3775 = vsel %vm154, %v3723, 0.0
    %v3776 = vrot.slane %v3775, 4
    %v3777 = vadd.f32 %v3775, %v3776
    %v3778 = vrot.slane %v3777, 2
    %v3779 = vadd.f32 %v3777, %v3778
    %v3780 = vrot.slane %v3779, 1
    %v3781 = vadd.f32 %v3779, %v3780
    %v3782 = vsel %vm154, %v3724, 0.0
    %v3783 = vrot.slane %v3782, 4
    %v3784 = vadd.f32 %v3782, %v3783
    %v3785 = vrot.slane %v3784, 2
    %v3786 = vadd.f32 %v3784, %v3785
    %v3787 = vrot.slane %v3786, 1
    %v3788 = vadd.f32 %v3786, %v3787
    %v3789 = vsel %vm154, %v3725, 0.0
    %v3790 = vrot.slane %v3789, 4
    %v3791 = vadd.f32 %v3789, %v3790
    %v3792 = vrot.slane %v3791, 2
    %v3793 = vadd.f32 %v3791, %v3792
    %v3794 = vrot.slane %v3793, 1
    %v3795 = vadd.f32 %v3793, %v3794
    %v3796 = vsel %vm154, %v3726, 0.0
    %v3797 = vrot.slane %v3796, 4
    %v3798 = vadd.f32 %v3796, %v3797
    %v3799 = vrot.slane %v3798, 2
    %v3800 = vadd.f32 %v3798, %v3799
    %v3801 = vrot.slane %v3800, 1
    %v3802 = vadd.f32 %v3800, %v3801
    %v3803 = vsel %vm154, %v3727, 0.0
    %v3804 = vrot.slane %v3803, 4
    %v3805 = vadd.f32 %v3803, %v3804
    %v3806 = vrot.slane %v3805, 2
    %v3807 = vadd.f32 %v3805, %v3806
    %v3808 = vrot.slane %v3807, 1
    %v3809 = vadd.f32 %v3807, %v3808
    %v3810 = vsel %vm154, %v3728, 0.0
    %v3811 = vrot.slane %v3810, 4
    %v3812 = vadd.f32 %v3810, %v3811
    %v3813 = vrot.slane %v3812, 2
    %v3814 = vadd.f32 %v3812, %v3813
    %v3815 = vrot.slane %v3814, 1
    %v3816 = vadd.f32 %v3814, %v3815
    %v3817 = vsel %vm154, %v3729, 0.0
    %v3818 = vrot.slane %v3817, 4
    %v3819 = vadd.f32 %v3817, %v3818
    %v3820 = vrot.slane %v3819, 2
    %v3821 = vadd.f32 %v3819, %v3820
    %v3822 = vrot.slane %v3821, 1
    %v3823 = vadd.f32 %v3821, %v3822
    %v3824 = vsel %vm154, %v3730, 0.0
    %v3825 = vrot.slane %v3824, 4
    %v3826 = vadd.f32 %v3824, %v3825
    %v3827 = vrot.slane %v3826, 2
    %v3828 = vadd.f32 %v3826, %v3827
    %v3829 = vrot.slane %v3828, 1
    %v3830 = vadd.f32 %v3828, %v3829
    %v3831 = vsel %vm154, %v3731, 0.0
    %v3832 = vrot.slane %v3831, 4
    %v3833 = vadd.f32 %v3831, %v3832
    %v3834 = vrot.slane %v3833, 2
    %v3835 = vadd.f32 %v3833, %v3834
    %v3836 = vrot.slane %v3835, 1
    %v3837 = vadd.f32 %v3835, %v3836
    %v3838 = vsel %vm154, %v3732, 0.0
    %v3839 = vrot.slane %v3838, 4
    %v3840 = vadd.f32 %v3838, %v3839
    %v3841 = vrot.slane %v3840, 2
    %v3842 = vadd.f32 %v3840, %v3841
    %v3843 = vrot.slane %v3842, 1
    %v3844 = vadd.f32 %v3842, %v3843
    %s3845 = scalar_lea.vmem [#allocation7], 64
    %v3846 = vld [vmem:[%s3845] sm:$0xff]
    %v3847 = vld [vmem:[%s3845 + $0x8] sm:$0xff]
    %v3848 = vld [vmem:[%s3845 + $0x10] sm:$0xff]
    %v3849 = vld [vmem:[%s3845 + $0x18] sm:$0xff]
    %s3850 = scalar_lea.vmem %s4, 2
    %v3851 = vld [vmem:[%s3850] sm:$0x1]
    %v3853 = vlaneseq
    %v3854 = vshrl.u32 %v3853, 7
    %v3855 = vsub.s32 0, %v3854
    %v3856 = vrot.slane %v3851, %v3855
    %v3874 = vsel %vm1294, %v3746, %v3739
    %v3875 = vsel %vm1296, %v3753, %v3874
    %v3876 = vsel %vm1298, %v3760, %v3875
    %v3877 = vsel %vm1300, %v3767, %v3876
    %v3878 = vsel %vm1302, %v3774, %v3877
    %v3879 = vsel %vm1304, %v3781, %v3878
    %v3880 = vsel %vm1306, %v3788, %v3879
    %v3881 = vsel %vm1294, %v3802, %v3795
    %v3882 = vsel %vm1296, %v3809, %v3881
    %v3883 = vsel %vm1298, %v3816, %v3882
    %v3884 = vsel %vm1300, %v3823, %v3883
    %v3885 = vsel %vm1302, %v3830, %v3884
    %v3886 = vsel %vm1304, %v3837, %v3885
    %v3887 = vsel %vm1306, %v3844, %v3886
    %v3888 = vsel %vm154, %v3880, 0
    %v3890 = vsel %vm154, %v3887, 0
    %3892 = vmatprep.subr.mxu0 0.0
    %3893 = vmatpush1.msra.mxu0 %v3846
    %3894 = vmatprep.subr.mxu0 0.0
    %3895 = vmatpush1.msra.mxu0 %v3847
    %3896 = vmatprep.subr.mxu0 0.0
    %3897 = vmatpush1.msra.mxu0 %v3848
    %3898 = vmatprep.subr.mxu0 0.0
    %3899 = vmatpush1.msra.mxu0 %v3849
    %3900 = vmatprep.subr.mxu0 0.0
    %3901 = vmatpush1.msra.mxu0 0.0
    %3902 = vmatprep.subr.mxu0 0.0
    %3903 = vmatpush1.msra.mxu0 0.0
    %3904 = vmatprep.subr.mxu0 0.0
    %3905 = vmatpush1.msra.mxu0 0.0
    %3906 = vmatprep.subr.mxu0 0.0
    %3907 = vmatpush1.msra.mxu0 0.0
    %3908 = vmatprep.subr.mxu0 0.0
    %3909 = vmatpush1.msra.mxu0 0.0
    %3910 = vmatprep.subr.mxu0 0.0
    %3911 = vmatpush1.msra.mxu0 0.0
    %3912 = vmatprep.subr.mxu0 0.0
    %3913 = vmatpush1.msra.mxu0 0.0
    %3914 = vmatprep.subr.mxu0 0.0
    %3915 = vmatpush1.msra.mxu0 0.0
    %3916 = vmatprep.subr.mxu0 0.0
    %3917 = vmatpush1.msra.mxu0 0.0
    %3918 = vmatprep.subr.mxu0 0.0
    %3919 = vmatpush1.msra.mxu0 0.0
    %3920 = vmatprep.subr.mxu0 0.0
    %3921 = vmatpush1.msra.mxu0 0.0
    %3922 = vmatprep.subr.mxu0 0.0
    %3923 = vmatpush1.msra.mxu0 0.0
    %3924 = vmatprep.subr.mxu0 0.0
    %3925 = vmatpush1.msra.mxu0 0.0
    %3926 = vmatprep.subr.mxu0 0.0
    %3927 = vmatpush1.msra.mxu0 0.0
    %3928 = vmatprep.subr.mxu0 0.0
    %3929 = vmatpush1.msra.mxu0 0.0
    %3930 = vmatprep.subr.mxu0 0.0
    %3931 = vmatpush1.msra.mxu0 0.0
    %3932 = vmatprep.subr.mxu0 0.0
    %3933 = vmatpush1.msra.mxu0 0.0
    %3934 = vmatprep.subr.mxu0 0.0
    %3935 = vmatpush1.msra.mxu0 0.0
    %3936 = vmatprep.subr.mxu0 0.0
    %3937 = vmatpush1.msra.mxu0 0.0
    %3938 = vmatprep.subr.mxu0 0.0
    %3939 = vmatpush1.msra.mxu0 0.0
    %3940 = vmatprep.subr.mxu0 0.0
    %3941 = vmatpush1.msra.mxu0 0.0
    %3942 = vmatprep.subr.mxu0 0.0
    %3943 = vmatpush1.msra.mxu0 0.0
    %3944 = vmatprep.subr.mxu0 0.0
    %3945 = vmatpush1.msra.mxu0 0.0
    %3946 = vmatprep.subr.mxu0 0.0
    %3947 = vmatpush1.msra.mxu0 0.0
    %3948 = vmatprep.subr.mxu0 0.0
    %3949 = vmatpush1.msra.mxu0 0.0
    %3950 = vmatprep.subr.mxu0 0.0
    %3951 = vmatpush1.msra.mxu0 0.0
    %3952 = vmatprep.subr.mxu0 0.0
    %3953 = vmatpush1.msra.mxu0 0.0
    %3954 = vmatprep.subr.mxu0 0.0
    %3955 = vmatpush1.msra.mxu0 0.0
    %3956 = vmatprep.mubr.f32.mxu0 0.0
    %3957 = vmatmul.mubr.f32.gmra.mrb[0].mxu0 %v3888
    %v3958 = vpop.f32.mrb[0].mxu0
    %v3959 = vadd.f32 %v3856, %v3958
    %v3960 = vpop.f32.mrb[0].mxu0
    %3961 = vmatprep.mubr.f32.mxu0 0.0
    %3962 = vmatmul.mubr.f32.gmra.mrb[0].mxu0 %v3890
    %v3963 = vpop.f32.mrb[0].mxu0
    %v3964 = vadd.f32 %v3856, %v3963
    %v3965 = vpop.f32.mrb[0].mxu0
    %3966 = vdwg.mxu0
    %v3967 = vadd.f32 %v3959, %v2719
    %v3968 = vadd.f32 %v3964, %v2720
    %v3969 = vsel %vm154, %v3967, 0.0
    %3970 = vadd.xlane.f32.xlu0 %v3969
    %v3971 = vpop.xlane.xlu0 %3970
    %v3972 = vsel %vm154, %v3968, 0.0
    %3973 = vadd.xlane.f32.xlu0 %v3972
    %v3974 = vpop.xlane.xlu0 %3973
    %v3975 = vmul.f32 %v3971, %v1402
    %v3976 = vmul.f32 %v3974, %v1402
    %v3977 = vmul.f32 %v3967, %v3967
    %v3978 = vmul.f32 %v3968, %v3968
    %v3979 = vsel %vm154, %v3977, 0.0
    %3980 = vadd.xlane.f32.xlu0 %v3979
    %v3981 = vpop.xlane.xlu0 %3980
    %v3982 = vsel %vm154, %v3978, 0.0
    %3983 = vadd.xlane.f32.xlu0 %v3982
    %v3984 = vpop.xlane.xlu0 %3983
    %v3985 = vmul.f32 %v3981, %v1402
    %v3986 = vmul.f32 %v3984, %v1402
    %v3987 = vmul.f32 %v3975, %v3975
    %v3988 = vmul.f32 %v3976, %v3976
    %v3989 = vsub.f32 %v3985, %v3987
    %v3990 = vsub.f32 %v3986, %v3988
    %v3991 = vsub.f32 %v3967, %v3975
    %v3992 = vsub.f32 %v3968, %v3976
    %v3993 = vadd.f32 %v3989, 1e-05
    %v3994 = vadd.f32 %v3990, 1e-05
    %v3995 = vrsqrt.pop %v3993
    %v3996 = vrsqrt.pop %v3994
    %v3997 = vmul.f32 %v3991, %v3995
    %v3998 = vmul.f32 %v3992, %v3996
    %v3999 = vmul.f32 %v3997, %v1430
    %v4000 = vmul.f32 %v3998, %v1430
    %v4001 = vadd.f32 %v3999, %v1436
    %v4002 = vadd.f32 %v4000, %v1436
    %v4003 = vsel %vm154, %v4001, 0.0
    %v4004 = vrot.slane %v4003, 4
    %v4005 = vadd.f32 %v4003, %v4004
    %v4006 = vrot.slane %v4005, 2
    %v4007 = vadd.f32 %v4005, %v4006
    %v4008 = vrot.slane %v4007, 1
    %v4009 = vadd.f32 %v4007, %v4008
    %v4010 = vsel %vm154, %v4002, 0.0
    %v4011 = vrot.slane %v4010, 4
    %v4012 = vadd.f32 %v4010, %v4011
    %v4013 = vrot.slane %v4012, 2
    %v4014 = vadd.f32 %v4012, %v4013
    %v4015 = vrot.slane %v4014, 1
    %v4016 = vadd.f32 %v4014, %v4015
    %v4017 = vrcp.pop 8.0
    %v4018 = vmul.f32 %v4009, %v4017
    %v4019 = vmul.f32 %v4016, %v4017
    %v4020 = vld [vmem:[#allocation8] sm:$0xff]
    %v4021 = vld [vmem:[#allocation8 + $0x8] sm:$0xff]
    %v4022 = vld [vmem:[#allocation8 + $0x10] sm:$0xff]
    %v4023 = vld [vmem:[#allocation8 + $0x18] sm:$0xff]
    %v4024 = vld [vmem:[%s7] sm:$0x1]
    %v4026 = vlaneseq
    %v4027 = vshrl.u32 %v4026, 7
    %v4028 = vsub.s32 0, %v4027
    %v4029 = vrot.slane %v4024, %v4028
    %v4033 = vsel %vm1294, %v4019, %v4018
    %v4034 = vsel %vm154, %v4033, 0
    %4036 = vmatprep.subr.mxu0 0.0
    %4037 = vmatpush1.msra.mxu0 %v4020
    %4038 = vmatprep.subr.mxu0 0.0
    %4039 = vmatpush1.msra.mxu0 %v4021
    %4040 = vmatprep.subr.mxu0 0.0
    %4041 = vmatpush1.msra.mxu0 %v4022
    %4042 = vmatprep.subr.mxu0 0.0
    %4043 = vmatpush1.msra.mxu0 %v4023
    %4044 = vmatprep.subr.mxu0 0.0
    %4045 = vmatpush1.msra.mxu0 0.0
    %4046 = vmatprep.subr.mxu0 0.0
    %4047 = vmatpush1.msra.mxu0 0.0
    %4048 = vmatprep.subr.mxu0 0.0
    %4049 = vmatpush1.msra.mxu0 0.0
    %4050 = vmatprep.subr.mxu0 0.0
    %4051 = vmatpush1.msra.mxu0 0.0
    %4052 = vmatprep.subr.mxu0 0.0
    %4053 = vmatpush1.msra.mxu0 0.0
    %4054 = vmatprep.subr.mxu0 0.0
    %4055 = vmatpush1.msra.mxu0 0.0
    %4056 = vmatprep.subr.mxu0 0.0
    %4057 = vmatpush1.msra.mxu0 0.0
    %4058 = vmatprep.subr.mxu0 0.0
    %4059 = vmatpush1.msra.mxu0 0.0
    %4060 = vmatprep.subr.mxu0 0.0
    %4061 = vmatpush1.msra.mxu0 0.0
    %4062 = vmatprep.subr.mxu0 0.0
    %4063 = vmatpush1.msra.mxu0 0.0
    %4064 = vmatprep.subr.mxu0 0.0
    %4065 = vmatpush1.msra.mxu0 0.0
    %4066 = vmatprep.subr.mxu0 0.0
    %4067 = vmatpush1.msra.mxu0 0.0
    %4068 = vmatprep.subr.mxu0 0.0
    %4069 = vmatpush1.msra.mxu0 0.0
    %4070 = vmatprep.subr.mxu0 0.0
    %4071 = vmatpush1.msra.mxu0 0.0
    %4072 = vmatprep.subr.mxu0 0.0
    %4073 = vmatpush1.msra.mxu0 0.0
    %4074 = vmatprep.subr.mxu0 0.0
    %4075 = vmatpush1.msra.mxu0 0.0
    %4076 = vmatprep.subr.mxu0 0.0
    %4077 = vmatpush1.msra.mxu0 0.0
    %4078 = vmatprep.subr.mxu0 0.0
    %4079 = vmatpush1.msra.mxu0 0.0
    %4080 = vmatprep.subr.mxu0 0.0
    %4081 = vmatpush1.msra.mxu0 0.0
    %4082 = vmatprep.subr.mxu0 0.0
    %4083 = vmatpush1.msra.mxu0 0.0
    %4084 = vmatprep.subr.mxu0 0.0
    %4085 = vmatpush1.msra.mxu0 0.0
    %4086 = vmatprep.subr.mxu0 0.0
    %4087 = vmatpush1.msra.mxu0 0.0
    %4088 = vmatprep.subr.mxu0 0.0
    %4089 = vmatpush1.msra.mxu0 0.0
    %4090 = vmatprep.subr.mxu0 0.0
    %4091 = vmatpush1.msra.mxu0 0.0
    %4092 = vmatprep.subr.mxu0 0.0
    %4093 = vmatpush1.msra.mxu0 0.0
    %4094 = vmatprep.subr.mxu0 0.0
    %4095 = vmatpush1.msra.mxu0 0.0
    %4096 = vmatprep.subr.mxu0 0.0
    %4097 = vmatpush1.msra.mxu0 0.0
    %4098 = vmatprep.subr.mxu0 0.0
    %4099 = vmatpush1.msra.mxu0 0.0
    %4100 = vmatprep.mubr.f32.mxu0 0.0
    %4101 = vmatmul.mubr.f32.gmra.mrb[0].mxu0 %v4034
    %v4102 = vpop.f32.mrb[0].mxu0
    %v4103 = vadd.f32 %v4029, %v4102
    %v4104 = vpop.f32.mrb[0].mxu0
    %4105 = vdwg.mxu0
    %v4106 = vmax.f32 %v4103, 0.0
    %v4107 = vld [vmem:[#allocation10] sm:$0xff]
    %v4108 = vld [vmem:[#allocation10 + $0x8] sm:$0xff]
    %v4109 = vld [vmem:[#allocation10 + $0x10] sm:$0xff]
    %v4110 = vld [vmem:[#allocation10 + $0x18] sm:$0xff]
    %v4111 = vld [vmem:[#allocation10 + $0x20] sm:$0xff]
    %v4112 = vld [vmem:[#allocation10 + $0x28] sm:$0xff]
    %v4113 = vld [vmem:[#allocation10 + $0x30] sm:$0xff]
    %v4114 = vld [vmem:[#allocation10 + $0x38] sm:$0xff]
    %v4115 = vld [vmem:[%s9] sm:$0x1]
    %v4117 = vlaneseq
    %v4118 = vshrl.u32 %v4117, 7
    %v4119 = vsub.s32 0, %v4118
    %v4120 = vrot.slane %v4115, %v4119
    %vm4122 = vcmask 523264
    %v4124 = vsel %vm4122, %v4106, 0
    %4126 = vmatprep.subr.mxu0 0.0
    %4127 = vmatpush1.msra.mxu0 %v4107
    %4128 = vmatprep.subr.mxu0 0.0
    %4129 = vmatpush1.msra.mxu0 %v4108
    %4130 = vmatprep.subr.mxu0 0.0
    %4131 = vmatpush1.msra.mxu0 %v4109
    %4132 = vmatprep.subr.mxu0 0.0
    %4133 = vmatpush1.msra.mxu0 %v4110
    %4134 = vmatprep.subr.mxu0 0.0
    %4135 = vmatpush1.msra.mxu0 %v4111
    %4136 = vmatprep.subr.mxu0 0.0
    %4137 = vmatpush1.msra.mxu0 %v4112
    %4138 = vmatprep.subr.mxu0 0.0
    %4139 = vmatpush1.msra.mxu0 %v4113
    %4140 = vmatprep.subr.mxu0 0.0
    %4141 = vmatpush1.msra.mxu0 %v4114
    %4142 = vmatprep.subr.mxu0 0.0
    %4143 = vmatpush1.msra.mxu0 0.0
    %4144 = vmatprep.subr.mxu0 0.0
    %4145 = vmatpush1.msra.mxu0 0.0
    %4146 = vmatprep.subr.mxu0 0.0
    %4147 = vmatpush1.msra.mxu0 0.0
    %4148 = vmatprep.subr.mxu0 0.0
    %4149 = vmatpush1.msra.mxu0 0.0
    %4150 = vmatprep.subr.mxu0 0.0
    %4151 = vmatpush1.msra.mxu0 0.0
    %4152 = vmatprep.subr.mxu0 0.0
    %4153 = vmatpush1.msra.mxu0 0.0
    %4154 = vmatprep.subr.mxu0 0.0
    %4155 = vmatpush1.msra.mxu0 0.0
    %4156 = vmatprep.subr.mxu0 0.0
    %4157 = vmatpush1.msra.mxu0 0.0
    %4158 = vmatprep.subr.mxu0 0.0
    %4159 = vmatpush1.msra.mxu0 0.0
    %4160 = vmatprep.subr.mxu0 0.0
    %4161 = vmatpush1.msra.mxu0 0.0
    %4162 = vmatprep.subr.mxu0 0.0
    %4163 = vmatpush1.msra.mxu0 0.0
    %4164 = vmatprep.subr.mxu0 0.0
    %4165 = vmatpush1.msra.mxu0 0.0
    %4166 = vmatprep.subr.mxu0 0.0
    %4167 = vmatpush1.msra.mxu0 0.0
    %4168 = vmatprep.subr.mxu0 0.0
    %4169 = vmatpush1.msra.mxu0 0.0
    %4170 = vmatprep.subr.mxu0 0.0
    %4171 = vmatpush1.msra.mxu0 0.0
    %4172 = vmatprep.subr.mxu0 0.0
    %4173 = vmatpush1.msra.mxu0 0.0
    %4174 = vmatprep.subr.mxu0 0.0
    %4175 = vmatpush1.msra.mxu0 0.0
    %4176 = vmatprep.subr.mxu0 0.0
    %4177 = vmatpush1.msra.mxu0 0.0
    %4178 = vmatprep.subr.mxu0 0.0
    %4179 = vmatpush1.msra.mxu0 0.0
    %4180 = vmatprep.subr.mxu0 0.0
    %4181 = vmatpush1.msra.mxu0 0.0
    %4182 = vmatprep.subr.mxu0 0.0
    %4183 = vmatpush1.msra.mxu0 0.0
    %4184 = vmatprep.subr.mxu0 0.0
    %4185 = vmatpush1.msra.mxu0 0.0
    %4186 = vmatprep.subr.mxu0 0.0
    %4187 = vmatpush1.msra.mxu0 0.0
    %4188 = vmatprep.subr.mxu0 0.0
    %4189 = vmatpush1.msra.mxu0 0.0
    %4190 = vmatprep.mubr.f32.mxu0 0.0
    %4191 = vmatmul.mubr.f32.gmra.mrb[0].mxu0 %v4124
    %v4192 = vpop.f32.mrb[0].mxu0
    %v4193 = vadd.f32 %v4120, %v4192
    %v4194 = vpop.f32.mrb[0].mxu0
    %4195 = vdwg.mxu0
    %4196 = vst [vmem:[#allocation11] sm:$0x3] %v4193
    // Predicated region
    $region62: #{tpu_custom_call.1} parent=1 // pred_check
      _
    $region63: #{tpu_custom_call.1} parent=1 // pred_check_branch
      %4198 = sbr.rel (0) target = $region65
    $region64: #{tpu_custom_call.1} parent=1 // pred_region
      %s4200 = ssub.s32 32, 32
      %4201 = vsyncadd [#allocation4], %s4200
      %s4203 = sshll.u32 [#allocation11], 4
      %s4204 = int_to_ptr.vmem [resolvable:$true] %s4203
      %4206 = dma.vmem_to_hbm [thread:$0]  %s4204, 32, %s10, [#allocation4]
    $region65: #{tpu_custom_call.1} parent=1 // pred_fallthru
      _
    // Predicated region
    $region66: #{tpu_custom_call.1} parent=1 // pred_check
      _
    $region67: #{tpu_custom_call.1} parent=1 // pred_check_branch
      %4208 = sbr.rel (0) target = $region69
    $region68: #{tpu_custom_call.1} parent=1 // pred_region
      %4209 = dma.done [#allocation4], 32
    $region69: #{tpu_custom_call.1} parent=1 // pred_fallthru
      _
    %4210 = vsyncpa [#allocation3], 1
    %4211 = vsyncpa [#allocation6], 1
    %4212 = vsyncpa [#allocation9], 1
    %4213 = vsyncpa [#allocation4], 1

</llo_original>
